<compile_context>
chip_gen: v7x
topology: tpu7x:2x2x1
jax: 0.10.0
libtpu: 0.0.40
codegen_flags: <defaults>
</compile_context>

<pallas_src>
import functools
import math

import jax
import jax.numpy as jnp
import numpy as np
from jax.experimental import pallas as pl
from jax.experimental.pallas import tpu as pltpu


# ----------------------------------------------------------------------------
# Kernel 1: fused QKV projection + rotary embedding (per batch, seq tile, head)
# ----------------------------------------------------------------------------
def qkv_rope_kernel(x_ref, w_ref, cos_ref, sin_ref, q_ref, k_ref, v_ref, *,
                    head_dim, scale):
    hd = head_dim
    h2 = hd // 2

    x = x_ref[0]                                           # (tq, D) bf16
    qkv = jnp.dot(x, w_ref[0], preferred_element_type=jnp.float32)  # (tq, 3*hd)

    q = qkv[:, 0 * hd:1 * hd]
    k = qkv[:, 1 * hd:2 * hd]
    v = qkv[:, 2 * hd:3 * hd]

    cos = cos_ref[...]                                     # (tq, hd/2) f32
    sin = sin_ref[...]
    qe, qo = q[:, :h2], q[:, h2:]
    ke, ko = k[:, :h2], k[:, h2:]

    # Rotate-half RoPE (de-interleaved layout).  1/sqrt(hd) folded into q.
    # Halves are written with direct slice stores (no concatenate copy).
    q_ref[0, 0, :, :h2] = ((qe * cos - qo * sin) * scale).astype(q_ref.dtype)
    q_ref[0, 0, :, h2:] = ((qe * sin + qo * cos) * scale).astype(q_ref.dtype)
    k_ref[0, 0, :, :h2] = (ke * cos - ko * sin).astype(k_ref.dtype)
    k_ref[0, 0, :, h2:] = (ke * sin + ko * cos).astype(k_ref.dtype)
    v_ref[0, 0] = v.astype(v_ref.dtype)


# ----------------------------------------------------------------------------
# Kernel 2: flash attention (online softmax) fused with the output projection.
# The grid's second axis walks a host-built schedule of only the causal
# (q-tile, head, kv-tile) triples (scalar-prefetched into SMEM).
# ----------------------------------------------------------------------------
def flash_attn_proj_kernel(qi_ref, hi_ref, ki_ref,          # scalar prefetch (SMEM)
                           q_ref, k_ref, v_ref, wo_ref,      # inputs (VMEM)
                           o_ref,                            # output (VMEM)
                           m_s, l_s, acc_s, out_s,           # scratch (VMEM)
                           *, tq, tk, n_heads):
    t = pl.program_id(1)
    qi = qi_ref[t]
    h = hi_ref[t]
    ki = ki_ref[t]

    row_min = qi * tq
    row_max = row_min + (tq - 1)
    col_min = ki * tk
    col_max = col_min + (tk - 1)
    causal_last = row_max // tk            # last kv tile that contributes

    @pl.when(jnp.logical_and(h == 0, ki == 0))
    def _():
        out_s[...] = jnp.zeros_like(out_s)                 # x@Wo accumulator

    @pl.when(ki == 0)
    def _():
        m_s[...] = jnp.full_like(m_s, -jnp.inf)
        l_s[...] = jnp.zeros_like(l_s)
        acc_s[...] = jnp.zeros_like(acc_s)

    def attend(masked):
        q = q_ref[0, 0]                                    # (tq, hd) bf16 (pre-scaled)
        k = k_ref[0, 0]                                    # (tk, hd) bf16
        s = jax.lax.dot_general(q, k, (((1,), (1,)), ((), ())),
                                preferred_element_type=jnp.float32)  # (tq, tk) f32
        if masked:
            row = row_min + jax.lax.broadcasted_iota(jnp.int32, (tq, tk), 0)
            col = col_min + jax.lax.broadcasted_iota(jnp.int32, (tq, tk), 1)
            s = jnp.where(row >= col, s, -1e30)

        m_prev = m_s[...]                                  # (tq, 128) lane-replicated
        m_new = jnp.maximum(m_prev, jnp.max(s, axis=-1, keepdims=True))
        alpha = jnp.exp(m_prev - m_new)                    # (tq, 128)
        p = jnp.exp(s - m_new[:, :1])                      # (tq, tk) f32
        l_s[...] = alpha * l_s[...] + jnp.sum(p, axis=-1, keepdims=True)
        acc_s[...] = alpha[:, :1] * acc_s[...] + jnp.dot(
            p.astype(jnp.bfloat16), v_ref[0, 0],
            preferred_element_type=jnp.float32)
        m_s[...] = m_new

    # Strictly-below-diagonal tile: no mask math at all.
    @pl.when(col_max <= row_min)
    def _():
        attend(masked=False)

    # Diagonal band tile: apply the in-kernel causal mask.
    # (Fully-masked tiles are never scheduled, so these two cover everything.)
    @pl.when(col_max > row_min)
    def _():
        attend(masked=True)

    # Last contributing kv tile: normalize and fold this head into x@Wo.
    @pl.when(ki == causal_last)
    def _():
        o_h = acc_s[...] * pl.reciprocal(l_s[:, :1], approx=True)   # (tq, hd) f32
        out_s[...] += jnp.dot(o_h.astype(jnp.bfloat16), wo_ref[h],
                              preferred_element_type=jnp.float32)

    @pl.when(jnp.logical_and(ki == causal_last, h == n_heads - 1))
    def _():
        o_ref[0] = out_s[...].astype(o_ref.dtype)


# ----------------------------------------------------------------------------
# Wrapper
# ----------------------------------------------------------------------------
def attention_forward(x, wqkv_heads, wo_heads, cos, sin, *, n_heads, head_dim,
                      tq=256, tk=256):
    B, S, D = x.shape
    H, hd = n_heads, head_dim
    assert D == H * hd
    tq = min(tq, S)
    tk = min(tk, S)
    assert S % tq == 0 and S % tk == 0
    n_q, n_k = S // tq, S // tk
    out_dtype = x.dtype

    # Cast x to bf16 once (halves x HBM traffic; no in-kernel per-head cast).
    x_bf = x.astype(jnp.bfloat16)
    scale = 1.0 / math.sqrt(hd)

    # ---- Kernel 1: QKV projection + RoPE ----
    qkv_cost = pl.CostEstimate(
        flops=2 * 3 * B * S * D * D,
        transcendentals=0,
        bytes_accessed=(B * S * D * 2 + B * n_q * 3 * D * D * 2
                        + 3 * B * S * D * 2 + 2 * S * (hd // 2) * 4))
    q, k, v = pl.pallas_call(
        functools.partial(qkv_rope_kernel, head_dim=hd, scale=scale),
        out_shape=(jax.ShapeDtypeStruct((B, H, S, hd), jnp.bfloat16),
                   jax.ShapeDtypeStruct((B, H, S, hd), jnp.bfloat16),
                   jax.ShapeDtypeStruct((B, H, S, hd), jnp.bfloat16)),
        grid=(B, n_q, H),
        in_specs=[
            pl.BlockSpec((1, tq, D), lambda b, i, h: (b, i, 0)),          # x
            pl.BlockSpec((1, D, 3 * hd), lambda b, i, h: (h, 0, 0)),      # wqkv
            pl.BlockSpec((tq, hd // 2), lambda b, i, h: (i, 0)),          # cos
            pl.BlockSpec((tq, hd // 2), lambda b, i, h: (i, 0)),          # sin
        ],
        out_specs=(
            pl.BlockSpec((1, 1, tq, hd), lambda b, i, h: (b, h, i, 0)),
            pl.BlockSpec((1, 1, tq, hd), lambda b, i, h: (b, h, i, 0)),
            pl.BlockSpec((1, 1, tq, hd), lambda b, i, h: (b, h, i, 0)),
        ),
        compiler_params=pltpu.CompilerParams(
            dimension_semantics=("parallel", "parallel", "parallel"),
            vmem_limit_bytes=64 * 1024 * 1024),
        cost_estimate=qkv_cost,
    )(x_bf, wqkv_heads, cos, sin)

    # ---- Host-built causal schedule: only (q-tile, head, kv-tile) triples
    # with ki*tk <= qi*tq + tq - 1 are ever visited / DMA'd. ----
    qi_l, hi_l, ki_l = [], [], []
    for i in range(n_q):
        lim = (i * tq + tq - 1) // tk
        for h_ in range(H):
            for j in range(lim + 1):
                qi_l.append(i)
                hi_l.append(h_)
                ki_l.append(j)
    T = len(qi_l)
    qi_arr = jnp.asarray(np.asarray(qi_l, dtype=np.int32))
    hi_arr = jnp.asarray(np.asarray(hi_l, dtype=np.int32))
    ki_arr = jnp.asarray(np.asarray(ki_l, dtype=np.int32))

    # ---- Kernel 2: flash attention + output projection ----
    attn_cost = pl.CostEstimate(
        flops=2 * B * H * S * S * hd + 2 * B * S * D * D,     # causal ~half for qk/pv
        transcendentals=B * H * S * S // 2,
        bytes_accessed=(3 * B * H * S * hd * 2 + D * D * 2
                        + B * S * D * jnp.dtype(out_dtype).itemsize))
    out = pl.pallas_call(
        functools.partial(flash_attn_proj_kernel, tq=tq, tk=tk, n_heads=H),
        out_shape=jax.ShapeDtypeStruct((B, S, D), out_dtype),
        grid_spec=pltpu.PrefetchScalarGridSpec(
            num_scalar_prefetch=3,
            grid=(B, T),
            in_specs=[
                pl.BlockSpec((1, 1, tq, hd),
                             lambda b, t, qi, hi, ki: (b, hi[t], qi[t], 0)),  # q
                pl.BlockSpec((1, 1, tk, hd),
                             lambda b, t, qi, hi, ki: (b, hi[t], ki[t], 0)),  # k
                pl.BlockSpec((1, 1, tk, hd),
                             lambda b, t, qi, hi, ki: (b, hi[t], ki[t], 0)),  # v
                pl.BlockSpec((H, hd, D),
                             lambda b, t, qi, hi, ki: (0, 0, 0)),             # wo (resident)
            ],
            out_specs=pl.BlockSpec((1, tq, D),
                                   lambda b, t, qi, hi, ki: (b, qi[t], 0)),
            scratch_shapes=[
                pltpu.VMEM((tq, 128), jnp.float32),   # m (running max, lane-replicated)
                pltpu.VMEM((tq, 128), jnp.float32),   # l (running denom, lane-replicated)
                pltpu.VMEM((tq, hd), jnp.float32),    # per-head attention acc
                pltpu.VMEM((tq, D), jnp.float32),     # output-projection acc
            ]),
        compiler_params=pltpu.CompilerParams(
            dimension_semantics=("parallel", "arbitrary"),
            vmem_limit_bytes=64 * 1024 * 1024),
        cost_estimate=attn_cost,
    )(qi_arr, hi_arr, ki_arr, q, k, v, wo_heads)
    return out


# ----------------------------------------------------------------------------
# Host-side parameter preparation
# ----------------------------------------------------------------------------
def prepare_attention_params(wq, wk, wv, wo, *, n_heads, head_dim):
    """[D,D] (y = x@W convention) -> fused head-major bf16 layouts.

    wq/wk columns are de-interleaved per head (even features first, then odd)
    so RoPE becomes a pure rotate-half elementwise op. The identical
    permutation is applied to q and k (v/wo untouched), so attention is
    mathematically unchanged.  Returns:
      wqkv_heads : [H, D, 3*hd] bf16  (per head: [Wq_perm | Wk_perm | Wv])
      wo_heads   : [H, hd, D]   bf16
    """
    D = wq.shape[0]
    hd = head_dim
    perm_head = np.concatenate([np.arange(0, hd, 2), np.arange(1, hd, 2)])
    perm = np.concatenate([h * hd + perm_head for h in range(n_heads)])

    def heads(w):                                          # [D, D] -> [H, D, hd]
        return np.asarray(w, np.float32).reshape(D, n_heads, hd).transpose(1, 0, 2)

    wq_p = np.asarray(wq, np.float32)[:, perm]
    wk_p = np.asarray(wk, np.float32)[:, perm]
    wqkv = np.concatenate([heads(wq_p), heads(wk_p), heads(np.asarray(wv, np.float32))],
                          axis=-1)                         # [H, D, 3*hd]
    wqkv_heads = jnp.asarray(wqkv, dtype=jnp.bfloat16)
    wo_heads = jnp.asarray(np.asarray(wo, np.float32).reshape(n_heads, hd, D),
                           dtype=jnp.bfloat16)             # [H, hd, D]
    return wqkv_heads, wo_heads


def precompute_rope_tables(seq_len, head_dim, theta=10000.0):
    freqs = 1.0 / (theta ** (np.arange(0, head_dim, 2, dtype=np.float32) / head_dim))
    t = np.arange(seq_len, dtype=np.float32)
    angles = np.outer(t, freqs)                            # [S, hd/2]
    return (jnp.asarray(np.cos(angles), dtype=jnp.float32),
            jnp.asarray(np.sin(angles), dtype=jnp.float32))


# ----------------------------------------------------------------------------
# Pure-JAX f32 reference (mirrors the PyTorch forward, complex RoPE)
# ----------------------------------------------------------------------------
def ref_attention(x, wq, wk, wv, wo, freqs_cis, *, n_heads, head_dim):
    B, S, D = x.shape
    q = (x @ wq).reshape(B, S, n_heads, head_dim)
    k = (x @ wk).reshape(B, S, n_heads, head_dim)
    v = (x @ wv).reshape(B, S, n_heads, head_dim)

    qc = q.reshape(B, S, n_heads, head_dim // 2, 2)
    kc = k.reshape(B, S, n_heads, head_dim // 2, 2)
    qc = qc[..., 0] + 1j * qc[..., 1]
    kc = kc[..., 0] + 1j * kc[..., 1]
    fc = freqs_cis.reshape(1, S, 1, head_dim // 2)
    qr = qc * fc
    kr = kc * fc
    q = jnp.stack([qr.real, qr.imag], axis=-1).reshape(B, S, n_heads, head_dim)
    k = jnp.stack([kr.real, kr.imag], axis=-1).reshape(B, S, n_heads, head_dim)

    q = q.transpose(0, 2, 1, 3)
    k = k.transpose(0, 2, 1, 3)
    v = v.transpose(0, 2, 1, 3)
    mask = jnp.triu(jnp.full((S, S), -1e30, dtype=jnp.float32), k=1)
    scores = jnp.einsum("bhqd,bhkd->bhqk", q, k) / math.sqrt(head_dim)
    scores = scores + mask[None, None]
    p = jax.nn.softmax(scores, axis=-1)
    out = jnp.einsum("bhqk,bhkd->bhqd", p, v)
    out = out.transpose(0, 2, 1, 3).reshape(B, S, D)
    return out @ wo


if __name__ == "__main__":
    # Small config consistent with the module (dim = n_heads * head_dim),
    # sized so both the q-tile and kv-tile axes have >1 tile at the default
    # tq=tk=256 (exercises the causal-schedule skipping path).
    B, S = 2, 512
    n_heads, head_dim = 4, 32
    D = n_heads * head_dim                    # 128
    theta = 10000.0

    key = jax.random.PRNGKey(0)
    kx, kq, kk, kv, ko = jax.random.split(key, 5)
    x = jax.random.normal(kx, (B, S, D), dtype=jnp.float32)
    wq = 0.02 * jax.random.normal(kq, (D, D), dtype=jnp.float32)
    wk = 0.02 * jax.random.normal(kk, (D, D), dtype=jnp.float32)
    wv = 0.02 * jax.random.normal(kv, (D, D), dtype=jnp.float32)
    wo = 0.02 * jax.random.normal(ko, (D, D), dtype=jnp.float32)

    wqkv_h, wo_h = prepare_attention_params(
        wq, wk, wv, wo, n_heads=n_heads, head_dim=head_dim)
    cos, sin = precompute_rope_tables(S, head_dim, theta)

    out = attention_forward(x, wqkv_h, wo_h, cos, sin,
                            n_heads=n_heads, head_dim=head_dim)
    out = jax.block_until_ready(out)

    # Reference uses llama's complex freqs_cis exactly (start_pos = 0).
    freqs = 1.0 / (theta ** (np.arange(0, head_dim, 2, dtype=np.float32) / head_dim))
    t = np.arange(S, dtype=np.float32)
    angles = np.outer(t, freqs)
    freqs_cis = jnp.asarray(np.exp(1j * angles).astype(np.complex64))

    ref = ref_attention(x, wq, wk, wv, wo, freqs_cis,
                        n_heads=n_heads, head_dim=head_dim)
    ref = jax.block_until_ready(ref)

    assert out.shape == (B, S, D)
    # bf16 MXU operands + approx reciprocal vs the all-f32 reference.
    np.testing.assert_allclose(np.asarray(out), np.asarray(ref),
                               rtol=2e-2, atol=5e-3)
    print("KERNEL_OK")
</pallas_src>

<mosaic_0001>
module attributes {stable_mosaic.version = 11 : i64} {
  func.func @qkv_rope_kernel(%arg0: i32, %arg1: i32, %arg2: i32, %arg3: memref<1x256x128xbf16, #tpu.memory_space<vmem>>, %arg4: memref<1x128x96xbf16, #tpu.memory_space<vmem>>, %arg5: memref<256x16xf32, #tpu.memory_space<vmem>>, %arg6: memref<256x16xf32, #tpu.memory_space<vmem>>, %arg7: memref<1x1x256x32xbf16, #tpu.memory_space<vmem>>, %arg8: memref<1x1x256x32xbf16, #tpu.memory_space<vmem>>, %arg9: memref<1x1x256x32xbf16, #tpu.memory_space<vmem>>) attributes {dimension_semantics = [#tpu.dimension_semantics<parallel>, #tpu.dimension_semantics<parallel>, #tpu.dimension_semantics<parallel>], iteration_bounds = array<i64: 2, 2, 4>, scalar_prefetch = 0 : i64, scratch_operands = 0 : i64, tpu.core_type = #tpu.core_type<tc>, window_params = [{transform_indices = @transform_0, window_bounds = array<i64: 1, 256, 128>}, {transform_indices = @transform_1, window_bounds = array<i64: 1, 128, 96>}, {transform_indices = @transform_2, window_bounds = array<i64: 256, 16>}, {transform_indices = @transform_3, window_bounds = array<i64: 256, 16>}, {transform_indices = @transform_4, window_bounds = array<i64: 1, 1, 256, 32>}, {transform_indices = @transform_5, window_bounds = array<i64: 1, 1, 256, 32>}, {transform_indices = @transform_6, window_bounds = array<i64: 1, 1, 256, 32>}]} {
    %c0 = arith.constant 0 : index
    %c0_0 = arith.constant 0 : index
    %c0_1 = arith.constant 0 : index
    %0 = vector.load %arg3[%c0, %c0_0, %c0_1] : memref<1x256x128xbf16, #tpu.memory_space<vmem>>, vector<1x256x128xbf16>
    %1 = vector.shape_cast %0 : vector<1x256x128xbf16> to vector<256x128xbf16>
    %c0_2 = arith.constant 0 : index
    %c0_3 = arith.constant 0 : index
    %c0_4 = arith.constant 0 : index
    %2 = vector.load %arg4[%c0_2, %c0_3, %c0_4] : memref<1x128x96xbf16, #tpu.memory_space<vmem>>, vector<1x128x96xbf16>
    %3 = vector.shape_cast %2 : vector<1x128x96xbf16> to vector<128x96xbf16>
    %cst = arith.constant dense<0.000000e+00> : vector<256x96xf32>
    %4 = tpu.matmul %1, %3, %cst {dimension_numbers = #tpu.dot_dimension_numbers<[1], [0], [0], [1], [0, 0, 1, 1], [], []>} : vector<256x128xbf16>, vector<128x96xbf16>, vector<256x96xf32> -> vector<256x96xf32>
    %5 = vector.extract_strided_slice %4 {offsets = [0, 0], sizes = [256, 32], strides = [1, 1]} : vector<256x96xf32> to vector<256x32xf32>
    %6 = vector.extract_strided_slice %4 {offsets = [0, 32], sizes = [256, 32], strides = [1, 1]} : vector<256x96xf32> to vector<256x32xf32>
    %7 = vector.extract_strided_slice %4 {offsets = [0, 64], sizes = [256, 32], strides = [1, 1]} : vector<256x96xf32> to vector<256x32xf32>
    %c0_5 = arith.constant 0 : index
    %c0_6 = arith.constant 0 : index
    %8 = vector.load %arg5[%c0_5, %c0_6] : memref<256x16xf32, #tpu.memory_space<vmem>>, vector<256x16xf32>
    %c0_7 = arith.constant 0 : index
    %c0_8 = arith.constant 0 : index
    %9 = vector.load %arg6[%c0_7, %c0_8] : memref<256x16xf32, #tpu.memory_space<vmem>>, vector<256x16xf32>
    %10 = vector.extract_strided_slice %5 {offsets = [0, 0], sizes = [256, 16], strides = [1, 1]} : vector<256x32xf32> to vector<256x16xf32>
    %11 = vector.extract_strided_slice %5 {offsets = [0, 16], sizes = [256, 16], strides = [1, 1]} : vector<256x32xf32> to vector<256x16xf32>
    %12 = vector.extract_strided_slice %6 {offsets = [0, 0], sizes = [256, 16], strides = [1, 1]} : vector<256x32xf32> to vector<256x16xf32>
    %13 = vector.extract_strided_slice %6 {offsets = [0, 16], sizes = [256, 16], strides = [1, 1]} : vector<256x32xf32> to vector<256x16xf32>
    %14 = arith.mulf %10, %8 : vector<256x16xf32>
    %15 = arith.mulf %11, %9 : vector<256x16xf32>
    %16 = arith.subf %14, %15 : vector<256x16xf32>
    %cst_9 = arith.constant 0.176776692 : f32
    %17 = vector.broadcast %cst_9 : f32 to vector<256x16xf32>
    %18 = arith.mulf %16, %17 : vector<256x16xf32>
    %19 = arith.truncf %18 : vector<256x16xf32> to vector<256x16xbf16>
    %c0_10 = arith.constant 0 : index
    %c0_11 = arith.constant 0 : index
    %c0_12 = arith.constant 0 : index
    %c0_13 = arith.constant 0 : index
    %20 = vector.load %arg7[%c0_10, %c0_11, %c0_12, %c0_13] : memref<1x1x256x32xbf16, #tpu.memory_space<vmem>>, vector<1x1x256x16xbf16>
    %21 = vector.shape_cast %20 : vector<1x1x256x16xbf16> to vector<256x16xbf16>
    %22 = vector.shape_cast %19 : vector<256x16xbf16> to vector<1x1x256x16xbf16>
    tpu.vector_store %arg7[%c0_10, %c0_11, %c0_12, %c0_13], %22 {strides = array<i32>} : memref<1x1x256x32xbf16, #tpu.memory_space<vmem>>, vector<1x1x256x16xbf16>,
    %23 = arith.mulf %10, %9 : vector<256x16xf32>
    %24 = arith.mulf %11, %8 : vector<256x16xf32>
    %25 = arith.addf %23, %24 : vector<256x16xf32>
    %cst_14 = arith.constant 0.176776692 : f32
    %26 = vector.broadcast %cst_14 : f32 to vector<256x16xf32>
    %27 = arith.mulf %25, %26 : vector<256x16xf32>
    %28 = arith.truncf %27 : vector<256x16xf32> to vector<256x16xbf16>
    %c0_15 = arith.constant 0 : index
    %c0_16 = arith.constant 0 : index
    %c0_17 = arith.constant 0 : index
    %c16 = arith.constant 16 : index
    %29 = vector.load %arg7[%c0_15, %c0_16, %c0_17, %c16] : memref<1x1x256x32xbf16, #tpu.memory_space<vmem>>, vector<1x1x256x16xbf16>
    %30 = vector.shape_cast %29 : vector<1x1x256x16xbf16> to vector<256x16xbf16>
    %31 = vector.shape_cast %28 : vector<256x16xbf16> to vector<1x1x256x16xbf16>
    tpu.vector_store %arg7[%c0_15, %c0_16, %c0_17, %c16], %31 {strides = array<i32>} : memref<1x1x256x32xbf16, #tpu.memory_space<vmem>>, vector<1x1x256x16xbf16>,
    %32 = arith.mulf %12, %8 : vector<256x16xf32>
    %33 = arith.mulf %13, %9 : vector<256x16xf32>
    %34 = arith.subf %32, %33 : vector<256x16xf32>
    %35 = arith.truncf %34 : vector<256x16xf32> to vector<256x16xbf16>
    %c0_18 = arith.constant 0 : index
    %c0_19 = arith.constant 0 : index
    %c0_20 = arith.constant 0 : index
    %c0_21 = arith.constant 0 : index
    %36 = vector.load %arg8[%c0_18, %c0_19, %c0_20, %c0_21] : memref<1x1x256x32xbf16, #tpu.memory_space<vmem>>, vector<1x1x256x16xbf16>
    %37 = vector.shape_cast %36 : vector<1x1x256x16xbf16> to vector<256x16xbf16>
    %38 = vector.shape_cast %35 : vector<256x16xbf16> to vector<1x1x256x16xbf16>
    tpu.vector_store %arg8[%c0_18, %c0_19, %c0_20, %c0_21], %38 {strides = array<i32>} : memref<1x1x256x32xbf16, #tpu.memory_space<vmem>>, vector<1x1x256x16xbf16>,
    %39 = arith.mulf %12, %9 : vector<256x16xf32>
    %40 = arith.mulf %13, %8 : vector<256x16xf32>
    %41 = arith.addf %39, %40 : vector<256x16xf32>
    %42 = arith.truncf %41 : vector<256x16xf32> to vector<256x16xbf16>
    %c0_22 = arith.constant 0 : index
    %c0_23 = arith.constant 0 : index
    %c0_24 = arith.constant 0 : index
    %c16_25 = arith.constant 16 : index
    %43 = vector.load %arg8[%c0_22, %c0_23, %c0_24, %c16_25] : memref<1x1x256x32xbf16, #tpu.memory_space<vmem>>, vector<1x1x256x16xbf16>
    %44 = vector.shape_cast %43 : vector<1x1x256x16xbf16> to vector<256x16xbf16>
    %45 = vector.shape_cast %42 : vector<256x16xbf16> to vector<1x1x256x16xbf16>
    tpu.vector_store %arg8[%c0_22, %c0_23, %c0_24, %c16_25], %45 {strides = array<i32>} : memref<1x1x256x32xbf16, #tpu.memory_space<vmem>>, vector<1x1x256x16xbf16>,
    %46 = arith.truncf %7 : vector<256x32xf32> to vector<256x32xbf16>
    %c0_26 = arith.constant 0 : index
    %c0_27 = arith.constant 0 : index
    %c0_28 = arith.constant 0 : index
    %c0_29 = arith.constant 0 : index
    %47 = vector.load %arg9[%c0_26, %c0_27, %c0_28, %c0_29] : memref<1x1x256x32xbf16, #tpu.memory_space<vmem>>, vector<1x1x256x32xbf16>
    %48 = vector.shape_cast %47 : vector<1x1x256x32xbf16> to vector<256x32xbf16>
    %49 = vector.shape_cast %46 : vector<256x32xbf16> to vector<1x1x256x32xbf16>
    tpu.vector_store %arg9[%c0_26, %c0_27, %c0_28, %c0_29], %49 {strides = array<i32>} : memref<1x1x256x32xbf16, #tpu.memory_space<vmem>>, vector<1x1x256x32xbf16>,
    return
  }
  func.func @transform_0(%arg0: i32, %arg1: i32, %arg2: i32) -> (i32, i32, i32) {
    %c0_i32 = arith.constant 0 : i32
    %c0_i32_0 = arith.constant 0 : i32
    return %arg0, %arg1, %c0_i32 : i32, i32, i32
  }
  func.func @transform_1(%arg0: i32, %arg1: i32, %arg2: i32) -> (i32, i32, i32) {
    %c0_i32 = arith.constant 0 : i32
    %c0_i32_0 = arith.constant 0 : i32
    %c0_i32_1 = arith.constant 0 : i32
    return %arg2, %c0_i32, %c0_i32_0 : i32, i32, i32
  }
  func.func @transform_2(%arg0: i32, %arg1: i32, %arg2: i32) -> (i32, i32) {
    %c0_i32 = arith.constant 0 : i32
    %c0_i32_0 = arith.constant 0 : i32
    return %arg1, %c0_i32 : i32, i32
  }
  func.func @transform_3(%arg0: i32, %arg1: i32, %arg2: i32) -> (i32, i32) {
    %c0_i32 = arith.constant 0 : i32
    %c0_i32_0 = arith.constant 0 : i32
    return %arg1, %c0_i32 : i32, i32
  }
  func.func @transform_4(%arg0: i32, %arg1: i32, %arg2: i32) -> (i32, i32, i32, i32) {
    %c0_i32 = arith.constant 0 : i32
    %c0_i32_0 = arith.constant 0 : i32
    return %arg0, %arg2, %arg1, %c0_i32 : i32, i32, i32, i32
  }
  func.func @transform_5(%arg0: i32, %arg1: i32, %arg2: i32) -> (i32, i32, i32, i32) {
    %c0_i32 = arith.constant 0 : i32
    %c0_i32_0 = arith.constant 0 : i32
    return %arg0, %arg2, %arg1, %c0_i32 : i32, i32, i32, i32
  }
  func.func @transform_6(%arg0: i32, %arg1: i32, %arg2: i32) -> (i32, i32, i32, i32) {
    %c0_i32 = arith.constant 0 : i32
    %c0_i32_0 = arith.constant 0 : i32
    return %arg0, %arg2, %arg1, %c0_i32 : i32, i32, i32, i32
  }
}

</mosaic_0001>

<llo_original>
// kernel: tpu_custom_call.1
$region0: #{tpu_custom_call.1}
  #allocation0 [shape = 'u32[]', space=smem, size = 0x4, offset = 0x4, fixed_abs, tag = 'smem constant byte address 0x4 - core index']
  #allocation1 [shape = 'u32[144,128]{1,0:T(1,128)}', space=vmem, size = 0x12000, scoped, tag = 'internal scratch']
  %s0 = inlined_call_operand.hbm [shape: bf16[2,512,128], index: 0, kind: input, shape index: {}]
  %s1 = inlined_call_operand.hbm [shape: bf16[4,128,96], index: 1, kind: input, shape index: {}]
  %s2 = inlined_call_operand.hbm [shape: f32[512,16], index: 2, kind: input, shape index: {}]
  %s3 = inlined_call_operand.hbm [shape: f32[512,16], index: 3, kind: input, shape index: {}]
  %s4 = inlined_call_operand.hbm [shape: bf16[2,4,512,32], index: 4, kind: output, shape index: {0}]
  %s5 = inlined_call_operand.hbm [shape: bf16[2,4,512,32], index: 5, kind: output, shape index: {1}]
  %s6 = inlined_call_operand.hbm [shape: bf16[2,4,512,32], index: 6, kind: output, shape index: {2}]
  %7 = xla_tuple %s4, %s5, %s6
  %s8 = sld [smem:[#allocation0]]
  $region81: #{tpu_custom_call.1} parent=0
    _
  %s10 = ssub.s32 1, %s8
  %s11 = scalar_select 0, %s10, %s8
  $region1: #{tpu_custom_call.1} parent=0
    #allocation2 [shape = 'u8[131072]{0}', space=vmem, size = 0x20000, scoped, tag = 'input window, operand 0']
    #allocation3 [shape = 's32[2]{0}', space=sflag, size = 0x8, scoped, tag = 'scoped memory for tpu_custom_call.1']
    #allocation4 [shape = 's32[2]{0}', space=sflag, size = 0x8, scoped, tag = 'scoped memory for tpu_custom_call.1']
    #allocation5 [shape = 'u8[65536]{0}', space=vmem, size = 0x10000, scoped, tag = 'input window, operand 1']
    #allocation6 [shape = 's32[2]{0}', space=sflag, size = 0x8, scoped, tag = 'scoped memory for tpu_custom_call.1']
    #allocation7 [shape = 'u8[262144]{0}', space=vmem, size = 0x40000, scoped, tag = 'input window, operand 2']
    #allocation8 [shape = 'u8[262144]{0}', space=vmem, size = 0x40000, scoped, tag = 'input window, operand 3']
    #allocation9 [shape = 's32[2]{0}', space=sflag, size = 0x8, scoped, tag = 'scoped memory for tpu_custom_call.1']
    #allocation10 [shape = 'u8[131072]{0}', space=vmem, size = 0x20000, scoped, tag = 'output window, operand 0']
    #allocation11 [shape = 'u8[131072]{0}', space=vmem, size = 0x20000, scoped, tag = 'output window, operand 1']
    #allocation12 [shape = 's32[2]{0}', space=sflag, size = 0x8, scoped, tag = 'scoped memory for tpu_custom_call.1']
    #allocation13 [shape = 'u8[131072]{0}', space=vmem, size = 0x20000, scoped, tag = 'output window, operand 2']
    %12 = vsyncpa [#allocation3], 0
    %s13 = scalar_lea.sflag [#allocation3], 1
    %14 = vsyncpa %s13, 0
    %15 = vsyncpa [#allocation6], 0
    %s16 = scalar_lea.sflag [#allocation6], 1
    %17 = vsyncpa %s16, 0
    %18 = vsyncpa [#allocation9], 0
    %s19 = scalar_lea.sflag [#allocation9], 1
    %20 = vsyncpa %s19, 0
    %21 = vsyncpa [#allocation4], 0
    %s22 = scalar_lea.sflag [#allocation4], 1
    %23 = vsyncpa %s22, 0
    %24 = vsyncpa [#allocation12], 0
    %s25 = scalar_lea.sflag [#allocation12], 1
    %26 = vsyncpa %s25, 0
    loop: start=0, step=1, limit=18
    $region2: #{tpu_custom_call.1} parent=1 // loop_pre_header
      _
    $region3: #{tpu_custom_call.1} parent=1 // loop_header
      %s28 = sphi 0, %s32
      %p29 = scmp.ge.s32.totalorder %s28, 18
      %s35 = sphi 0, %s54
      %s36 = sphi 0, %s50
      %s37 = sphi 0, %s46
      %s38 = sphi 0, %s35
      %s39 = sphi 0, %s36
      %s40 = sphi 0, %s37
      %s41 = sphi 0, %s38
      %s42 = sphi 0, %s39
      %s43 = sphi 0, %s40
      %s59 = sphi 0, %s61
      %s62 = sphi 0, %s59
      %s63 = sphi 0, %s62
      %s79 = sphi 0, %s63
      %s85 = sphi 0, %s87
      %s88 = sphi 0, %s85
      %s89 = sphi 0, %s88
      %s105 = sphi 0, %s89
      %s111 = sphi 0, %s113
      %s114 = sphi 0, %s111
      %s115 = sphi 0, %s114
      %s131 = sphi 0, %s115
      %s137 = sphi 0, %s139
      %s140 = sphi 0, %s137
      %s141 = sphi 0, %s140
      %s157 = sphi 0, %s141
      %s167 = sphi 0, %s169
      %s170 = sphi 0, %s167
      %s171 = sphi 0, %s170
      %s187 = sphi 0, %s171
      %s197 = sphi 0, %s199
      %s200 = sphi 0, %s197
      %s201 = sphi 0, %s200
      %s217 = sphi 0, %s201
      %s227 = sphi 0, %s229
      %s230 = sphi 0, %s227
      %s231 = sphi 0, %s230
      %s247 = sphi 0, %s231
    $region4: #{tpu_custom_call.1} parent=1 // loop_header_branch
      %31 = sbr.rel (%p29) target = $region8
    $region5: #{tpu_custom_call.1} parent=1 // loop_body
      %s33 = ssub.s32 %s28, 1
      %s34 = ssub.s32 %s28, 2
      %s44 = sadd.s32 1, %s37
      %p45 = scmp.ge.s32.totalorder %s44, 4
      %s46 = scalar_select %p45, 0, %s44
      %s47 = sadd.s32 1, %s36
      %s48 = scalar_select %p45, %s47, %s36
      %p49 = scmp.ge.s32.totalorder %s48, 2
      %s50 = scalar_select %p49, 0, %s48
      %s51 = sadd.s32 1, %s35
      %s52 = scalar_select %p49, %s51, %s35
      %p53 = scmp.ge.s32.totalorder %s52, 2
      %s54 = scalar_select %p53, 0, %s52
      %s55 = ssub.s32 %s35, %s54
      %s56 = ssub.s32 %s36, %s50
      %s57 = sor.u32 %s55, %s56
      %p58 = scmp.eq.s32.totalorder %s57, 0
      %s60 = sadd.s32 %s59, 1
      %s61 = scalar_select %p58, %s59, %s60
      %p64 = pneg %p58
      %p65 = scmp.eq.s32.totalorder %s28, 15
      %p66 = por %p64, %p65
      %p67 = scmp.ne.s32.totalorder %s59, %s62
      %p68 = scmp.eq.s32.totalorder %s28, 0
      %p69 = por %p67, %p68
      %p70 = scmp.ne.s32.totalorder %s59, %s62
      %p71 = scmp.eq.s32.totalorder %s33, 15
      %p72 = por %p70, %p71
      %p73 = scmp.ne.s32.totalorder %s62, %s63
      %p74 = scmp.eq.s32.totalorder %s33, 0
      %p75 = por %p73, %p74
      %p76 = scmp.ne.s32.totalorder %s62, %s63
      %p77 = scmp.eq.s32.totalorder %s34, 15
      %p78 = por %p76, %p77
      %p80 = scmp.ne.s32.totalorder %s63, %s79
      %p81 = scmp.eq.s32.totalorder %s34, 0
      %p82 = por %p80, %p81
      %s83 = ssub.s32 %s37, %s46
      %p84 = scmp.eq.s32.totalorder %s83, 0
      %s86 = sadd.s32 %s85, 1
      %s87 = scalar_select %p84, %s85, %s86
      %p90 = pneg %p84
      %p91 = scmp.eq.s32.totalorder %s28, 15
      %p92 = por %p90, %p91
      %p93 = scmp.ne.s32.totalorder %s85, %s88
      %p94 = scmp.eq.s32.totalorder %s28, 0
      %p95 = por %p93, %p94
      %p96 = scmp.ne.s32.totalorder %s85, %s88
      %p97 = scmp.eq.s32.totalorder %s33, 15
      %p98 = por %p96, %p97
      %p99 = scmp.ne.s32.totalorder %s88, %s89
      %p100 = scmp.eq.s32.totalorder %s33, 0
      %p101 = por %p99, %p100
      %p102 = scmp.ne.s32.totalorder %s88, %s89
      %p103 = scmp.eq.s32.totalorder %s34, 15
      %p104 = por %p102, %p103
      %p106 = scmp.ne.s32.totalorder %s89, %s105
      %p107 = scmp.eq.s32.totalorder %s34, 0
      %p108 = por %p106, %p107
      %s109 = ssub.s32 %s36, %s50
      %p110 = scmp.eq.s32.totalorder %s109, 0
      %s112 = sadd.s32 %s111, 1
      %s113 = scalar_select %p110, %s111, %s112
      %p116 = pneg %p110
      %p117 = scmp.eq.s32.totalorder %s28, 15
      %p118 = por %p116, %p117
      %p119 = scmp.ne.s32.totalorder %s111, %s114
      %p120 = scmp.eq.s32.totalorder %s28, 0
      %p121 = por %p119, %p120
      %p122 = scmp.ne.s32.totalorder %s111, %s114
      %p123 = scmp.eq.s32.totalorder %s33, 15
      %p124 = por %p122, %p123
      %p125 = scmp.ne.s32.totalorder %s114, %s115
      %p126 = scmp.eq.s32.totalorder %s33, 0
      %p127 = por %p125, %p126
      %p128 = scmp.ne.s32.totalorder %s114, %s115
      %p129 = scmp.eq.s32.totalorder %s34, 15
      %p130 = por %p128, %p129
      %p132 = scmp.ne.s32.totalorder %s115, %s131
      %p133 = scmp.eq.s32.totalorder %s34, 0
      %p134 = por %p132, %p133
      %s135 = ssub.s32 %s36, %s50
      %p136 = scmp.eq.s32.totalorder %s135, 0
      %s138 = sadd.s32 %s137, 1
      %s139 = scalar_select %p136, %s137, %s138
      %p142 = pneg %p136
      %p143 = scmp.eq.s32.totalorder %s28, 15
      %p144 = por %p142, %p143
      %p145 = scmp.ne.s32.totalorder %s137, %s140
      %p146 = scmp.eq.s32.totalorder %s28, 0
      %p147 = por %p145, %p146
      %p148 = scmp.ne.s32.totalorder %s137, %s140
      %p149 = scmp.eq.s32.totalorder %s33, 15
      %p150 = por %p148, %p149
      %p151 = scmp.ne.s32.totalorder %s140, %s141
      %p152 = scmp.eq.s32.totalorder %s33, 0
      %p153 = por %p151, %p152
      %p154 = scmp.ne.s32.totalorder %s140, %s141
      %p155 = scmp.eq.s32.totalorder %s34, 15
      %p156 = por %p154, %p155
      %p158 = scmp.ne.s32.totalorder %s141, %s157
      %p159 = scmp.eq.s32.totalorder %s34, 0
      %p160 = por %p158, %p159
      %s161 = ssub.s32 %s35, %s54
      %s162 = ssub.s32 %s37, %s46
      %s163 = sor.u32 %s161, %s162
      %s164 = ssub.s32 %s36, %s50
      %s165 = sor.u32 %s163, %s164
      %p166 = scmp.eq.s32.totalorder %s165, 0
      %s168 = sadd.s32 %s167, 1
      %s169 = scalar_select %p166, %s167, %s168
      %p172 = pneg %p166
      %p173 = scmp.eq.s32.totalorder %s28, 15
      %p174 = por %p172, %p173
      %p175 = scmp.ne.s32.totalorder %s167, %s170
      %p176 = scmp.eq.s32.totalorder %s28, 0
      %p177 = por %p175, %p176
      %p178 = scmp.ne.s32.totalorder %s167, %s170
      %p179 = scmp.eq.s32.totalorder %s33, 15
      %p180 = por %p178, %p179
      %p181 = scmp.ne.s32.totalorder %s170, %s171
      %p182 = scmp.eq.s32.totalorder %s33, 0
      %p183 = por %p181, %p182
      %p184 = scmp.ne.s32.totalorder %s170, %s171
      %p185 = scmp.eq.s32.totalorder %s34, 15
      %p186 = por %p184, %p185
      %p188 = scmp.ne.s32.totalorder %s171, %s187
      %p189 = scmp.eq.s32.totalorder %s34, 0
      %p190 = por %p188, %p189
      %s191 = ssub.s32 %s35, %s54
      %s192 = ssub.s32 %s37, %s46
      %s193 = sor.u32 %s191, %s192
      %s194 = ssub.s32 %s36, %s50
      %s195 = sor.u32 %s193, %s194
      %p196 = scmp.eq.s32.totalorder %s195, 0
      %s198 = sadd.s32 %s197, 1
      %s199 = scalar_select %p196, %s197, %s198
      %p202 = pneg %p196
      %p203 = scmp.eq.s32.totalorder %s28, 15
      %p204 = por %p202, %p203
      %p205 = scmp.ne.s32.totalorder %s197, %s200
      %p206 = scmp.eq.s32.totalorder %s28, 0
      %p207 = por %p205, %p206
      %p208 = scmp.ne.s32.totalorder %s197, %s200
      %p209 = scmp.eq.s32.totalorder %s33, 15
      %p210 = por %p208, %p209
      %p211 = scmp.ne.s32.totalorder %s200, %s201
      %p212 = scmp.eq.s32.totalorder %s33, 0
      %p213 = por %p211, %p212
      %p214 = scmp.ne.s32.totalorder %s200, %s201
      %p215 = scmp.eq.s32.totalorder %s34, 15
      %p216 = por %p214, %p215
      %p218 = scmp.ne.s32.totalorder %s201, %s217
      %p219 = scmp.eq.s32.totalorder %s34, 0
      %p220 = por %p218, %p219
      %s221 = ssub.s32 %s35, %s54
      %s222 = ssub.s32 %s37, %s46
      %s223 = sor.u32 %s221, %s222
      %s224 = ssub.s32 %s36, %s50
      %s225 = sor.u32 %s223, %s224
      %p226 = scmp.eq.s32.totalorder %s225, 0
      %s228 = sadd.s32 %s227, 1
      %s229 = scalar_select %p226, %s227, %s228
      %p232 = pneg %p226
      %p233 = scmp.eq.s32.totalorder %s28, 15
      %p234 = por %p232, %p233
      %p235 = scmp.ne.s32.totalorder %s227, %s230
      %p236 = scmp.eq.s32.totalorder %s28, 0
      %p237 = por %p235, %p236
      %p238 = scmp.ne.s32.totalorder %s227, %s230
      %p239 = scmp.eq.s32.totalorder %s33, 15
      %p240 = por %p238, %p239
      %p241 = scmp.ne.s32.totalorder %s230, %s231
      %p242 = scmp.eq.s32.totalorder %s33, 0
      %p243 = por %p241, %p242
      %p244 = scmp.ne.s32.totalorder %s230, %s231
      %p245 = scmp.eq.s32.totalorder %s34, 15
      %p246 = por %p244, %p245
      %p248 = scmp.ne.s32.totalorder %s231, %s247
      %p249 = scmp.eq.s32.totalorder %s34, 0
      %p250 = por %p248, %p249
      %p251 = scmp.le.s32.totalorder 1, %s28
      %p252 = scmp.lt.s32.totalorder %s28, 17
      %p253 = pnand %p251, %p252
      %p254 = pneg %p253
      // Predicated region
      $region9: #{tpu_custom_call.1} parent=5 // pred_check
        _
      $region10: #{tpu_custom_call.1} parent=5 // pred_check_branch
        %256 = sbr.rel (%p253) target = $region12
      $region11: #{tpu_custom_call.1} parent=5 // pred_region
        %s257 = ssub.s32 %s28, 1
      $region12: #{tpu_custom_call.1} parent=5 // pred_fallthru
        _
      %p258 = scmp.lt.s32.totalorder %s28, 16
      // Predicated region
      $region13: #{tpu_custom_call.1} parent=5 // pred_check
        %p259 = pneg %p258
      $region14: #{tpu_custom_call.1} parent=5 // pred_check_branch
        %261 = sbr.rel (%p259) target = $region16
      $region15: #{tpu_custom_call.1} parent=5 // pred_region
        // Predicated region
        $region17: #{tpu_custom_call.1} parent=15 // pred_check
          %p262 = pneg %p69
        $region18: #{tpu_custom_call.1} parent=15 // pred_check_branch
          %264 = sbr.rel (%p262) target = $region20
        $region19: #{tpu_custom_call.1} parent=15 // pred_region
          %s265 = sand.u32 %s59, 1
          %s266 = scalar_lea.sflag [#allocation3], %s265
          %s267 = sand.u32 %s59, 1
          %s268 = smul.addr %s267, 128
          %s269 = scalar_lea.vmem [#allocation2], %s268
          %s270 = smul.u32 32, %s36
          %s272 = ssub.s32 2048, 2048
          %273 = vsyncadd %s266, %s272
          %s274 = smul.addr %s35, 64
          %s275 = sadd.s32 %s270, %s274
          %s276 = smul.addr %s275, 64
          %s277 = scalar_lea.hbm %s0, %s276
          %s278 = sshll.u32 %s269, 4
          %s279 = int_to_ptr.vmem [resolvable:$true] %s278
          %284 = dma.hbm_to_vmem [thread:$0]  %s277, 2048, %s279, %s266, 64, 64, 4
        $region20: #{tpu_custom_call.1} parent=15 // pred_fallthru
          _
        // Predicated region
        $region21: #{tpu_custom_call.1} parent=15 // pred_check
          %p285 = pneg %p95
        $region22: #{tpu_custom_call.1} parent=15 // pred_check_branch
          %287 = sbr.rel (%p285) target = $region24
        $region23: #{tpu_custom_call.1} parent=15 // pred_region
          %s288 = sand.u32 %s28, 1
          %s289 = scalar_lea.sflag [#allocation6], %s288
          %s290 = sand.u32 %s85, 1
          %s291 = smul.addr %s290, 64
          %s292 = scalar_lea.vmem [#allocation5], %s291
          %s294 = ssub.s32 1024, 1024
          %295 = vsyncadd %s289, %s294
          %s296 = smul.addr %s37, 16
          %s297 = smul.addr %s296, 64
          %s298 = scalar_lea.hbm %s1, %s297
          %s299 = sshll.u32 %s292, 4
          %s300 = int_to_ptr.vmem [resolvable:$true] %s299
          %305 = dma.hbm_to_vmem [thread:$0]  %s298, 1024, %s300, %s289, 64, 64, 4
        $region24: #{tpu_custom_call.1} parent=15 // pred_fallthru
          _
        // Predicated region
        $region25: #{tpu_custom_call.1} parent=15 // pred_check
          %p306 = pneg %p121
        $region26: #{tpu_custom_call.1} parent=15 // pred_check_branch
          %308 = sbr.rel (%p306) target = $region28
        $region27: #{tpu_custom_call.1} parent=15 // pred_region
          %s309 = sand.u32 %s28, 1
          %s310 = scalar_lea.sflag [#allocation6], %s309
          %s311 = sand.u32 %s111, 1
          %s312 = smul.addr %s311, 256
          %s313 = scalar_lea.vmem [#allocation7], %s312
          %s314 = smul.u32 32, %s36
          %s316 = ssub.s32 4096, 4096
          %317 = vsyncadd %s310, %s316
          %s318 = smul.addr %s314, 128
          %s319 = scalar_lea.hbm %s2, %s318
          %s320 = sshll.u32 %s313, 4
          %s321 = int_to_ptr.vmem [resolvable:$true] %s320
          %326 = dma.hbm_to_vmem [thread:$0]  %s319, 4096, %s321, %s310, 128, 128, 8
        $region28: #{tpu_custom_call.1} parent=15 // pred_fallthru
          _
        // Predicated region
        $region29: #{tpu_custom_call.1} parent=15 // pred_check
          %p327 = pneg %p147
        $region30: #{tpu_custom_call.1} parent=15 // pred_check_branch
          %329 = sbr.rel (%p327) target = $region32
        $region31: #{tpu_custom_call.1} parent=15 // pred_region
          %s330 = sand.u32 %s137, 1
          %s331 = scalar_lea.sflag [#allocation9], %s330
          %s332 = sand.u32 %s137, 1
          %s333 = smul.addr %s332, 256
          %s334 = scalar_lea.vmem [#allocation8], %s333
          %s335 = smul.u32 32, %s36
          %s337 = ssub.s32 4096, 4096
          %338 = vsyncadd %s331, %s337
          %s339 = smul.addr %s335, 128
          %s340 = scalar_lea.hbm %s3, %s339
          %s341 = sshll.u32 %s334, 4
          %s342 = int_to_ptr.vmem [resolvable:$true] %s341
          %347 = dma.hbm_to_vmem [thread:$0]  %s340, 4096, %s342, %s331, 128, 128, 8
        $region32: #{tpu_custom_call.1} parent=15 // pred_fallthru
          _
      $region16: #{tpu_custom_call.1} parent=5 // pred_fallthru
        _
      %p348 = scmp.le.s32.totalorder 1, %s28
      %p349 = scmp.lt.s32.totalorder %s28, 17
      %p350 = pnand %p348, %p349
      %p351 = pneg %p350
      // Predicated region
      $region33: #{tpu_custom_call.1} parent=5 // pred_check
        _
      $region34: #{tpu_custom_call.1} parent=5 // pred_check_branch
        %353 = sbr.rel (%p350) target = $region36
      $region35: #{tpu_custom_call.1} parent=5 // pred_region
        %s354 = ssub.s32 %s28, 1
        %s355 = sand.u32 %s62, 1
        %s356 = scalar_lea.sflag [#allocation3], %s355
        %s357 = sand.u32 %s62, 1
        %s358 = smul.addr %s357, 128
        %s359 = scalar_lea.vmem [#allocation2], %s358
        // Predicated region
        $region37: #{tpu_custom_call.1} parent=35 // pred_check
          %p360 = pneg %p75
        $region38: #{tpu_custom_call.1} parent=35 // pred_check_branch
          %362 = sbr.rel (%p360) target = $region40
        $region39: #{tpu_custom_call.1} parent=35 // pred_region
          %363 = dma.done %s356, 2048
        $region40: #{tpu_custom_call.1} parent=35 // pred_fallthru
          _
        %s364 = sand.u32 %s33, 1
        %s365 = scalar_lea.sflag [#allocation6], %s364
        %s366 = sand.u32 %s88, 1
        %s367 = smul.addr %s366, 64
        %s368 = scalar_lea.vmem [#allocation5], %s367
        // Predicated region
        $region41: #{tpu_custom_call.1} parent=35 // pred_check
          %p369 = pneg %p101
        $region42: #{tpu_custom_call.1} parent=35 // pred_check_branch
          %371 = sbr.rel (%p369) target = $region44
        $region43: #{tpu_custom_call.1} parent=35 // pred_region
          %372 = dma.done %s365, 1024
        $region44: #{tpu_custom_call.1} parent=35 // pred_fallthru
          _
        %s373 = sand.u32 %s33, 1
        %s374 = scalar_lea.sflag [#allocation6], %s373
        %s375 = sand.u32 %s114, 1
        %s376 = smul.addr %s375, 256
        %s377 = scalar_lea.vmem [#allocation7], %s376
        // Predicated region
        $region45: #{tpu_custom_call.1} parent=35 // pred_check
          %p378 = pneg %p127
        $region46: #{tpu_custom_call.1} parent=35 // pred_check_branch
          %380 = sbr.rel (%p378) target = $region48
        $region47: #{tpu_custom_call.1} parent=35 // pred_region
          %381 = dma.done %s374, 4096
        $region48: #{tpu_custom_call.1} parent=35 // pred_fallthru
          _
        %s382 = sand.u32 %s140, 1
        %s383 = scalar_lea.sflag [#allocation9], %s382
        %s384 = sand.u32 %s140, 1
        %s385 = smul.addr %s384, 256
        %s386 = scalar_lea.vmem [#allocation8], %s385
        // Predicated region
        $region49: #{tpu_custom_call.1} parent=35 // pred_check
          %p387 = pneg %p153
        $region50: #{tpu_custom_call.1} parent=35 // pred_check_branch
          %389 = sbr.rel (%p387) target = $region52
        $region51: #{tpu_custom_call.1} parent=35 // pred_region
          %390 = dma.done %s383, 4096
        $region52: #{tpu_custom_call.1} parent=35 // pred_fallthru
          _
        %s391 = sand.u32 %s62, 1
        %s392 = scalar_lea.sflag [#allocation3], %s391
        %s393 = sand.u32 %s62, 1
        %s394 = smul.addr %s393, 128
        %s395 = scalar_lea.vmem [#allocation2], %s394
        %p396 = pneg %p75
        %p397 = pneg %p72
        %s398 = sand.u32 %s33, 1
        %s399 = scalar_lea.sflag [#allocation6], %s398
        %s400 = sand.u32 %s88, 1
        %s401 = smul.addr %s400, 64
        %s402 = scalar_lea.vmem [#allocation5], %s401
        %p403 = pneg %p101
        %p404 = pneg %p98
        %s405 = sand.u32 %s33, 1
        %s406 = scalar_lea.sflag [#allocation6], %s405
        %s407 = sand.u32 %s114, 1
        %s408 = smul.addr %s407, 256
        %s409 = scalar_lea.vmem [#allocation7], %s408
        %p410 = pneg %p127
        %p411 = pneg %p124
        %s412 = sand.u32 %s140, 1
        %s413 = scalar_lea.sflag [#allocation9], %s412
        %s414 = sand.u32 %s140, 1
        %s415 = smul.addr %s414, 256
        %s416 = scalar_lea.vmem [#allocation8], %s415
        %p417 = pneg %p153
        %p418 = pneg %p150
        %p419 = pneg %p183
        %p420 = pneg %p180
        %s421 = sand.u32 %s170, 1
        %s422 = scalar_lea.sflag [#allocation4], %s421
        %s423 = sand.u32 %s170, 1
        %s424 = smul.addr %s423, 128
        %s425 = scalar_lea.vmem [#allocation10], %s424
        %p426 = pneg %p213
        %p427 = pneg %p210
        %s428 = sand.u32 %s33, 1
        %s429 = scalar_lea.sflag [#allocation12], %s428
        %s430 = sand.u32 %s200, 1
        %s431 = smul.addr %s430, 128
        %s432 = scalar_lea.vmem [#allocation11], %s431
        %p433 = pneg %p243
        %p434 = pneg %p240
        %s435 = sand.u32 %s33, 1
        %s436 = scalar_lea.sflag [#allocation12], %s435
        %s437 = sand.u32 %s230, 1
        %s438 = smul.addr %s437, 128
        %s439 = scalar_lea.vmem [#allocation13], %s438
        %s440 = smul.u32 32, %s39
        %s441 = smul.u32 32, %s39
        %s442 = smul.u32 32, %s39
        %s443 = smul.u32 32, %s39
        %s444 = smul.u32 32, %s39
        %s445 = smul.u32 32, %s39
        %v447 = vld [vmem:[%s359] sm:$0xf]
        %v448 = vld [vmem:[%s359 + $0x4] sm:$0xf]
        %v449 = vld [vmem:[%s359 + $0x8] sm:$0xf]
        %v450 = vld [vmem:[%s359 + $0xc] sm:$0xf]
        %v451 = vld [vmem:[%s359 + $0x10] sm:$0xf]
        %v452 = vld [vmem:[%s359 + $0x14] sm:$0xf]
        %v453 = vld [vmem:[%s359 + $0x18] sm:$0xf]
        %v454 = vld [vmem:[%s359 + $0x1c] sm:$0xf]
        %v455 = vld [vmem:[%s359 + $0x20] sm:$0xf]
        %v456 = vld [vmem:[%s359 + $0x24] sm:$0xf]
        %v457 = vld [vmem:[%s359 + $0x28] sm:$0xf]
        %v458 = vld [vmem:[%s359 + $0x2c] sm:$0xf]
        %v459 = vld [vmem:[%s359 + $0x30] sm:$0xf]
        %v460 = vld [vmem:[%s359 + $0x34] sm:$0xf]
        %v461 = vld [vmem:[%s359 + $0x38] sm:$0xf]
        %v462 = vld [vmem:[%s359 + $0x3c] sm:$0xf]
        %v463 = vld [vmem:[%s359 + $0x40] sm:$0xf]
        %v464 = vld [vmem:[%s359 + $0x44] sm:$0xf]
        %v465 = vld [vmem:[%s359 + $0x48] sm:$0xf]
        %v466 = vld [vmem:[%s359 + $0x4c] sm:$0xf]
        %v467 = vld [vmem:[%s359 + $0x50] sm:$0xf]
        %v468 = vld [vmem:[%s359 + $0x54] sm:$0xf]
        %v469 = vld [vmem:[%s359 + $0x58] sm:$0xf]
        %v470 = vld [vmem:[%s359 + $0x5c] sm:$0xf]
        %v471 = vld [vmem:[%s359 + $0x60] sm:$0xf]
        %v472 = vld [vmem:[%s359 + $0x64] sm:$0xf]
        %v473 = vld [vmem:[%s359 + $0x68] sm:$0xf]
        %v474 = vld [vmem:[%s359 + $0x6c] sm:$0xf]
        %v475 = vld [vmem:[%s359 + $0x70] sm:$0xf]
        %v476 = vld [vmem:[%s359 + $0x74] sm:$0xf]
        %v477 = vld [vmem:[%s359 + $0x78] sm:$0xf]
        %v478 = vld [vmem:[%s359 + $0x7c] sm:$0xf]
        %v479 = vld [vmem:[%s368] sm:$0xf]
        %v480 = vld [vmem:[%s368 + $0x4] sm:$0xf]
        %v481 = vld [vmem:[%s368 + $0x8] sm:$0xf]
        %v482 = vld [vmem:[%s368 + $0xc] sm:$0xf]
        %v483 = vld [vmem:[%s368 + $0x10] sm:$0xf]
        %v484 = vld [vmem:[%s368 + $0x14] sm:$0xf]
        %v485 = vld [vmem:[%s368 + $0x18] sm:$0xf]
        %v486 = vld [vmem:[%s368 + $0x1c] sm:$0xf]
        %v487 = vld [vmem:[%s368 + $0x20] sm:$0xf]
        %v488 = vld [vmem:[%s368 + $0x24] sm:$0xf]
        %v489 = vld [vmem:[%s368 + $0x28] sm:$0xf]
        %v490 = vld [vmem:[%s368 + $0x2c] sm:$0xf]
        %v491 = vld [vmem:[%s368 + $0x30] sm:$0xf]
        %v492 = vld [vmem:[%s368 + $0x34] sm:$0xf]
        %v493 = vld [vmem:[%s368 + $0x38] sm:$0xf]
        %v494 = vld [vmem:[%s368 + $0x3c] sm:$0xf]
        %v527 = vunpack.c.l.b16 %v447
        %v528 = vunpack.c.l.b16 %v448
        %v529 = vunpack.c.l.b16 %v449
        %v530 = vunpack.c.l.b16 %v450
        %v531 = vunpack.c.l.b16 %v451
        %v532 = vunpack.c.l.b16 %v452
        %v533 = vunpack.c.l.b16 %v453
        %v534 = vunpack.c.l.b16 %v454
        %v535 = vunpack.c.l.b16 %v455
        %v536 = vunpack.c.l.b16 %v456
        %v537 = vunpack.c.l.b16 %v457
        %v538 = vunpack.c.l.b16 %v458
        %v539 = vunpack.c.l.b16 %v459
        %v540 = vunpack.c.l.b16 %v460
        %v541 = vunpack.c.l.b16 %v461
        %v542 = vunpack.c.l.b16 %v462
        %v543 = vunpack.c.l.b16 %v463
        %v544 = vunpack.c.l.b16 %v464
        %v545 = vunpack.c.l.b16 %v465
        %v546 = vunpack.c.l.b16 %v466
        %v547 = vunpack.c.l.b16 %v467
        %v548 = vunpack.c.l.b16 %v468
        %v549 = vunpack.c.l.b16 %v469
        %v550 = vunpack.c.l.b16 %v470
        %v551 = vunpack.c.l.b16 %v471
        %v552 = vunpack.c.l.b16 %v472
        %v553 = vunpack.c.l.b16 %v473
        %v554 = vunpack.c.l.b16 %v474
        %v555 = vunpack.c.l.b16 %v475
        %v556 = vunpack.c.l.b16 %v476
        %v557 = vunpack.c.l.b16 %v477
        %v558 = vunpack.c.l.b16 %v478
        %v559 = vpack.c.b16 %v528, %v527
        %v560 = vpack.c.b16 %v530, %v529
        %v561 = vpack.c.b16 %v532, %v531
        %v562 = vpack.c.b16 %v534, %v533
        %v563 = vpack.c.b16 %v536, %v535
        %v564 = vpack.c.b16 %v538, %v537
        %v565 = vpack.c.b16 %v540, %v539
        %v566 = vpack.c.b16 %v542, %v541
        %v567 = vpack.c.b16 %v544, %v543
        %v568 = vpack.c.b16 %v546, %v545
        %v569 = vpack.c.b16 %v548, %v547
        %v570 = vpack.c.b16 %v550, %v549
        %v571 = vpack.c.b16 %v552, %v551
        %v572 = vpack.c.b16 %v554, %v553
        %v573 = vpack.c.b16 %v556, %v555
        %v574 = vpack.c.b16 %v558, %v557
        %v607 = vunpack.c.l.b16 %v479
        %v608 = vunpack.c.l.b16 %v480
        %v609 = vunpack.c.l.b16 %v481
        %v610 = vunpack.c.l.b16 %v482
        %v611 = vunpack.c.l.b16 %v483
        %v612 = vunpack.c.l.b16 %v484
        %v613 = vunpack.c.l.b16 %v485
        %v614 = vunpack.c.l.b16 %v486
        %v615 = vunpack.c.l.b16 %v487
        %v616 = vunpack.c.l.b16 %v488
        %v617 = vunpack.c.l.b16 %v489
        %v618 = vunpack.c.l.b16 %v490
        %v619 = vunpack.c.l.b16 %v491
        %v620 = vunpack.c.l.b16 %v492
        %v621 = vunpack.c.l.b16 %v493
        %v622 = vunpack.c.l.b16 %v494
        %v623 = vpack.c.b16 %v608, %v607
        %v624 = vpack.c.b16 %v610, %v609
        %v625 = vpack.c.b16 %v612, %v611
        %v626 = vpack.c.b16 %v614, %v613
        %v627 = vpack.c.b16 %v616, %v615
        %v628 = vpack.c.b16 %v618, %v617
        %v629 = vpack.c.b16 %v620, %v619
        %v630 = vpack.c.b16 %v622, %v621
        %639 = vmatprep.subr.bf16.mxu0 0
        %640 = vmatpush1.bf16.msra.mxu0 %v623
        %641 = vmatprep.subr.bf16.mxu0 0
        %642 = vmatpush1.bf16.msra.mxu0 %v624
        %643 = vmatprep.subr.bf16.mxu0 0
        %644 = vmatpush1.bf16.msra.mxu0 %v625
        %645 = vmatprep.subr.bf16.mxu0 0
        %646 = vmatpush1.bf16.msra.mxu0 %v626
        %647 = vmatprep.subr.bf16.mxu0 0
        %648 = vmatpush1.bf16.msra.mxu0 %v627
        %649 = vmatprep.subr.bf16.mxu0 0
        %650 = vmatpush1.bf16.msra.mxu0 %v628
        %651 = vmatprep.subr.bf16.mxu0 0
        %652 = vmatpush1.bf16.msra.mxu0 %v629
        %653 = vmatprep.subr.bf16.mxu0 0
        %654 = vmatpush1.bf16.msra.mxu0 %v630
        %655 = vmatprep.subr.bf16.mxu0 0
        %656 = vmatpush1.bf16.msra.mxu0 0
        %657 = vmatprep.subr.bf16.mxu0 0
        %658 = vmatpush1.bf16.msra.mxu0 0
        %659 = vmatprep.subr.bf16.mxu0 0
        %660 = vmatpush1.bf16.msra.mxu0 0
        %661 = vmatprep.subr.bf16.mxu0 0
        %662 = vmatpush1.bf16.msra.mxu0 0
        %663 = vmatprep.subr.bf16.mxu0 0
        %664 = vmatpush1.bf16.msra.mxu0 0
        %665 = vmatprep.subr.bf16.mxu0 0
        %666 = vmatpush1.bf16.msra.mxu0 0
        %667 = vmatprep.subr.bf16.mxu0 0
        %668 = vmatpush1.bf16.msra.mxu0 0
        %669 = vmatprep.subr.bf16.mxu0 0
        %670 = vmatpush1.bf16.msra.mxu0 0
        %671 = vmatprep.mubr.bf16.mxu0 0
        %672 = vmatmul.mubr.bf16.gmra.mrb[0].mxu0 %v559
        %v673 = vpop.f32.mrb[0].mxu0
        %v674 = vadd.f32 0.0, %v673
        %v675 = vpop.f32.mrb[0].mxu0
        %v676 = vpop.f32.mrb[0].mxu0
        %v677 = vadd.f32 0.0, %v676
        %v678 = vpop.f32.mrb[0].mxu0
        %679 = vmatprep.mubr.bf16.mxu0 0
        %680 = vmatmul.mubr.bf16.gmra.mrb[0].mxu0 %v560
        %v681 = vpop.f32.mrb[0].mxu0
        %v682 = vadd.f32 0.0, %v681
        %v683 = vpop.f32.mrb[0].mxu0
        %v684 = vpop.f32.mrb[0].mxu0
        %v685 = vadd.f32 0.0, %v684
        %v686 = vpop.f32.mrb[0].mxu0
        %687 = vmatprep.mubr.bf16.mxu0 0
        %688 = vmatmul.mubr.bf16.gmra.mrb[0].mxu0 %v561
        %v689 = vpop.f32.mrb[0].mxu0
        %v690 = vadd.f32 0.0, %v689
        %v691 = vpop.f32.mrb[0].mxu0
        %v692 = vpop.f32.mrb[0].mxu0
        %v693 = vadd.f32 0.0, %v692
        %v694 = vpop.f32.mrb[0].mxu0
        %695 = vmatprep.mubr.bf16.mxu0 0
        %696 = vmatmul.mubr.bf16.gmra.mrb[0].mxu0 %v562
        %v697 = vpop.f32.mrb[0].mxu0
        %v698 = vadd.f32 0.0, %v697
        %v699 = vpop.f32.mrb[0].mxu0
        %v700 = vpop.f32.mrb[0].mxu0
        %v701 = vadd.f32 0.0, %v700
        %v702 = vpop.f32.mrb[0].mxu0
        %703 = vmatprep.mubr.bf16.mxu0 0
        %704 = vmatmul.mubr.bf16.gmra.mrb[0].mxu0 %v563
        %v705 = vpop.f32.mrb[0].mxu0
        %v706 = vadd.f32 0.0, %v705
        %v707 = vpop.f32.mrb[0].mxu0
        %v708 = vpop.f32.mrb[0].mxu0
        %v709 = vadd.f32 0.0, %v708
        %v710 = vpop.f32.mrb[0].mxu0
        %711 = vmatprep.mubr.bf16.mxu0 0
        %712 = vmatmul.mubr.bf16.gmra.mrb[0].mxu0 %v564
        %v713 = vpop.f32.mrb[0].mxu0
        %v714 = vadd.f32 0.0, %v713
        %v715 = vpop.f32.mrb[0].mxu0
        %v716 = vpop.f32.mrb[0].mxu0
        %v717 = vadd.f32 0.0, %v716
        %v718 = vpop.f32.mrb[0].mxu0
        %719 = vmatprep.mubr.bf16.mxu0 0
        %720 = vmatmul.mubr.bf16.gmra.mrb[0].mxu0 %v565
        %v721 = vpop.f32.mrb[0].mxu0
        %v722 = vadd.f32 0.0, %v721
        %v723 = vpop.f32.mrb[0].mxu0
        %v724 = vpop.f32.mrb[0].mxu0
        %v725 = vadd.f32 0.0, %v724
        %v726 = vpop.f32.mrb[0].mxu0
        %727 = vmatprep.mubr.bf16.mxu0 0
        %728 = vmatmul.mubr.bf16.gmra.mrb[0].mxu0 %v566
        %v729 = vpop.f32.mrb[0].mxu0
        %v730 = vadd.f32 0.0, %v729
        %v731 = vpop.f32.mrb[0].mxu0
        %v732 = vpop.f32.mrb[0].mxu0
        %v733 = vadd.f32 0.0, %v732
        %v734 = vpop.f32.mrb[0].mxu0
        %735 = vmatprep.mubr.bf16.mxu0 0
        %736 = vmatmul.mubr.bf16.gmra.mrb[0].mxu0 %v567
        %v737 = vpop.f32.mrb[0].mxu0
        %v738 = vadd.f32 0.0, %v737
        %v739 = vpop.f32.mrb[0].mxu0
        %v740 = vpop.f32.mrb[0].mxu0
        %v741 = vadd.f32 0.0, %v740
        %v742 = vpop.f32.mrb[0].mxu0
        %743 = vmatprep.mubr.bf16.mxu0 0
        %744 = vmatmul.mubr.bf16.gmra.mrb[0].mxu0 %v568
        %v745 = vpop.f32.mrb[0].mxu0
        %v746 = vadd.f32 0.0, %v745
        %v747 = vpop.f32.mrb[0].mxu0
        %v748 = vpop.f32.mrb[0].mxu0
        %v749 = vadd.f32 0.0, %v748
        %v750 = vpop.f32.mrb[0].mxu0
        %751 = vmatprep.mubr.bf16.mxu0 0
        %752 = vmatmul.mubr.bf16.gmra.mrb[0].mxu0 %v569
        %v753 = vpop.f32.mrb[0].mxu0
        %v754 = vadd.f32 0.0, %v753
        %v755 = vpop.f32.mrb[0].mxu0
        %v756 = vpop.f32.mrb[0].mxu0
        %v757 = vadd.f32 0.0, %v756
        %v758 = vpop.f32.mrb[0].mxu0
        %759 = vmatprep.mubr.bf16.mxu0 0
        %760 = vmatmul.mubr.bf16.gmra.mrb[0].mxu0 %v570
        %v761 = vpop.f32.mrb[0].mxu0
        %v762 = vadd.f32 0.0, %v761
        %v763 = vpop.f32.mrb[0].mxu0
        %v764 = vpop.f32.mrb[0].mxu0
        %v765 = vadd.f32 0.0, %v764
        %v766 = vpop.f32.mrb[0].mxu0
        %767 = vmatprep.mubr.bf16.mxu0 0
        %768 = vmatmul.mubr.bf16.gmra.mrb[0].mxu0 %v571
        %v769 = vpop.f32.mrb[0].mxu0
        %v770 = vadd.f32 0.0, %v769
        %v771 = vpop.f32.mrb[0].mxu0
        %v772 = vpop.f32.mrb[0].mxu0
        %v773 = vadd.f32 0.0, %v772
        %v774 = vpop.f32.mrb[0].mxu0
        %775 = vmatprep.mubr.bf16.mxu0 0
        %776 = vmatmul.mubr.bf16.gmra.mrb[0].mxu0 %v572
        %v777 = vpop.f32.mrb[0].mxu0
        %v778 = vadd.f32 0.0, %v777
        %v779 = vpop.f32.mrb[0].mxu0
        %v780 = vpop.f32.mrb[0].mxu0
        %v781 = vadd.f32 0.0, %v780
        %v782 = vpop.f32.mrb[0].mxu0
        %783 = vmatprep.mubr.bf16.mxu0 0
        %784 = vmatmul.mubr.bf16.gmra.mrb[0].mxu0 %v573
        %v785 = vpop.f32.mrb[0].mxu0
        %v786 = vadd.f32 0.0, %v785
        %v787 = vpop.f32.mrb[0].mxu0
        %v788 = vpop.f32.mrb[0].mxu0
        %v789 = vadd.f32 0.0, %v788
        %v790 = vpop.f32.mrb[0].mxu0
        %791 = vmatprep.mubr.bf16.mxu0 0
        %792 = vmatmul.mubr.bf16.gmra.mrb[0].mxu0 %v574
        %v793 = vpop.f32.mrb[0].mxu0
        %v794 = vadd.f32 0.0, %v793
        %v795 = vpop.f32.mrb[0].mxu0
        %v796 = vpop.f32.mrb[0].mxu0
        %v797 = vadd.f32 0.0, %v796
        %v798 = vpop.f32.mrb[0].mxu0
        %799 = vdwg.mxu0
        %v800 = vld [vmem:[%s377] sm:$0xff]
        %v801 = vld [vmem:[%s377 + $0x8] sm:$0xff]
        %v802 = vld [vmem:[%s377 + $0x10] sm:$0xff]
        %v803 = vld [vmem:[%s377 + $0x18] sm:$0xff]
        %v804 = vld [vmem:[%s377 + $0x20] sm:$0xff]
        %v805 = vld [vmem:[%s377 + $0x28] sm:$0xff]
        %v806 = vld [vmem:[%s377 + $0x30] sm:$0xff]
        %v807 = vld [vmem:[%s377 + $0x38] sm:$0xff]
        %v808 = vld [vmem:[%s377 + $0x40] sm:$0xff]
        %v809 = vld [vmem:[%s377 + $0x48] sm:$0xff]
        %v810 = vld [vmem:[%s377 + $0x50] sm:$0xff]
        %v811 = vld [vmem:[%s377 + $0x58] sm:$0xff]
        %v812 = vld [vmem:[%s377 + $0x60] sm:$0xff]
        %v813 = vld [vmem:[%s377 + $0x68] sm:$0xff]
        %v814 = vld [vmem:[%s377 + $0x70] sm:$0xff]
        %v815 = vld [vmem:[%s377 + $0x78] sm:$0xff]
        %v816 = vld [vmem:[%s377 + $0x80] sm:$0xff]
        %v817 = vld [vmem:[%s377 + $0x88] sm:$0xff]
        %v818 = vld [vmem:[%s377 + $0x90] sm:$0xff]
        %v819 = vld [vmem:[%s377 + $0x98] sm:$0xff]
        %v820 = vld [vmem:[%s377 + $0xa0] sm:$0xff]
        %v821 = vld [vmem:[%s377 + $0xa8] sm:$0xff]
        %v822 = vld [vmem:[%s377 + $0xb0] sm:$0xff]
        %v823 = vld [vmem:[%s377 + $0xb8] sm:$0xff]
        %v824 = vld [vmem:[%s377 + $0xc0] sm:$0xff]
        %v825 = vld [vmem:[%s377 + $0xc8] sm:$0xff]
        %v826 = vld [vmem:[%s377 + $0xd0] sm:$0xff]
        %v827 = vld [vmem:[%s377 + $0xd8] sm:$0xff]
        %v828 = vld [vmem:[%s377 + $0xe0] sm:$0xff]
        %v829 = vld [vmem:[%s377 + $0xe8] sm:$0xff]
        %v830 = vld [vmem:[%s377 + $0xf0] sm:$0xff]
        %v831 = vld [vmem:[%s377 + $0xf8] sm:$0xff]
        %v832 = vld [vmem:[%s386] sm:$0xff]
        %v833 = vld [vmem:[%s386 + $0x8] sm:$0xff]
        %v834 = vld [vmem:[%s386 + $0x10] sm:$0xff]
        %v835 = vld [vmem:[%s386 + $0x18] sm:$0xff]
        %v836 = vld [vmem:[%s386 + $0x20] sm:$0xff]
        %v837 = vld [vmem:[%s386 + $0x28] sm:$0xff]
        %v838 = vld [vmem:[%s386 + $0x30] sm:$0xff]
        %v839 = vld [vmem:[%s386 + $0x38] sm:$0xff]
        %v840 = vld [vmem:[%s386 + $0x40] sm:$0xff]
        %v841 = vld [vmem:[%s386 + $0x48] sm:$0xff]
        %v842 = vld [vmem:[%s386 + $0x50] sm:$0xff]
        %v843 = vld [vmem:[%s386 + $0x58] sm:$0xff]
        %v844 = vld [vmem:[%s386 + $0x60] sm:$0xff]
        %v845 = vld [vmem:[%s386 + $0x68] sm:$0xff]
        %v846 = vld [vmem:[%s386 + $0x70] sm:$0xff]
        %v847 = vld [vmem:[%s386 + $0x78] sm:$0xff]
        %v848 = vld [vmem:[%s386 + $0x80] sm:$0xff]
        %v849 = vld [vmem:[%s386 + $0x88] sm:$0xff]
        %v850 = vld [vmem:[%s386 + $0x90] sm:$0xff]
        %v851 = vld [vmem:[%s386 + $0x98] sm:$0xff]
        %v852 = vld [vmem:[%s386 + $0xa0] sm:$0xff]
        %v853 = vld [vmem:[%s386 + $0xa8] sm:$0xff]
        %v854 = vld [vmem:[%s386 + $0xb0] sm:$0xff]
        %v855 = vld [vmem:[%s386 + $0xb8] sm:$0xff]
        %v856 = vld [vmem:[%s386 + $0xc0] sm:$0xff]
        %v857 = vld [vmem:[%s386 + $0xc8] sm:$0xff]
        %v858 = vld [vmem:[%s386 + $0xd0] sm:$0xff]
        %v859 = vld [vmem:[%s386 + $0xd8] sm:$0xff]
        %v860 = vld [vmem:[%s386 + $0xe0] sm:$0xff]
        %v861 = vld [vmem:[%s386 + $0xe8] sm:$0xff]
        %v862 = vld [vmem:[%s386 + $0xf0] sm:$0xff]
        %v863 = vld [vmem:[%s386 + $0xf8] sm:$0xff]
        %v864 = vmul.f32 %v674, %v800
        %v865 = vmul.f32 %v677, %v801
        %v866 = vmul.f32 %v682, %v802
        %v867 = vmul.f32 %v685, %v803
        %v868 = vmul.f32 %v690, %v804
        %v869 = vmul.f32 %v693, %v805
        %v870 = vmul.f32 %v698, %v806
        %v871 = vmul.f32 %v701, %v807
        %v872 = vmul.f32 %v706, %v808
        %v873 = vmul.f32 %v709, %v809
        %v874 = vmul.f32 %v714, %v810
        %v875 = vmul.f32 %v717, %v811
        %v876 = vmul.f32 %v722, %v812
        %v877 = vmul.f32 %v725, %v813
        %v878 = vmul.f32 %v730, %v814
        %v879 = vmul.f32 %v733, %v815
        %v880 = vmul.f32 %v738, %v816
        %v881 = vmul.f32 %v741, %v817
        %v882 = vmul.f32 %v746, %v818
        %v883 = vmul.f32 %v749, %v819
        %v884 = vmul.f32 %v754, %v820
        %v885 = vmul.f32 %v757, %v821
        %v886 = vmul.f32 %v762, %v822
        %v887 = vmul.f32 %v765, %v823
        %v888 = vmul.f32 %v770, %v824
        %v889 = vmul.f32 %v773, %v825
        %v890 = vmul.f32 %v778, %v826
        %v891 = vmul.f32 %v781, %v827
        %v892 = vmul.f32 %v786, %v828
        %v893 = vmul.f32 %v789, %v829
        %v894 = vmul.f32 %v794, %v830
        %v895 = vmul.f32 %v797, %v831
        %928 = vrot.lane.b32.xlu0 %v832, 16
        %v929 = vpop.permute.xlu0 %928
        %930 = vrot.lane.b32.xlu0 %v833, 16
        %v931 = vpop.permute.xlu0 %930
        %932 = vrot.lane.b32.xlu0 %v834, 16
        %v933 = vpop.permute.xlu0 %932
        %934 = vrot.lane.b32.xlu0 %v835, 16
        %v935 = vpop.permute.xlu0 %934
        %936 = vrot.lane.b32.xlu0 %v836, 16
        %v937 = vpop.permute.xlu0 %936
        %938 = vrot.lane.b32.xlu0 %v837, 16
        %v939 = vpop.permute.xlu0 %938
        %940 = vrot.lane.b32.xlu0 %v838, 16
        %v941 = vpop.permute.xlu0 %940
        %942 = vrot.lane.b32.xlu0 %v839, 16
        %v943 = vpop.permute.xlu0 %942
        %944 = vrot.lane.b32.xlu0 %v840, 16
        %v945 = vpop.permute.xlu0 %944
        %946 = vrot.lane.b32.xlu0 %v841, 16
        %v947 = vpop.permute.xlu0 %946
        %948 = vrot.lane.b32.xlu0 %v842, 16
        %v949 = vpop.permute.xlu0 %948
        %950 = vrot.lane.b32.xlu0 %v843, 16
        %v951 = vpop.permute.xlu0 %950
        %952 = vrot.lane.b32.xlu0 %v844, 16
        %v953 = vpop.permute.xlu0 %952
        %954 = vrot.lane.b32.xlu0 %v845, 16
        %v955 = vpop.permute.xlu0 %954
        %956 = vrot.lane.b32.xlu0 %v846, 16
        %v957 = vpop.permute.xlu0 %956
        %958 = vrot.lane.b32.xlu0 %v847, 16
        %v959 = vpop.permute.xlu0 %958
        %960 = vrot.lane.b32.xlu0 %v848, 16
        %v961 = vpop.permute.xlu0 %960
        %962 = vrot.lane.b32.xlu0 %v849, 16
        %v963 = vpop.permute.xlu0 %962
        %964 = vrot.lane.b32.xlu0 %v850, 16
        %v965 = vpop.permute.xlu0 %964
        %966 = vrot.lane.b32.xlu0 %v851, 16
        %v967 = vpop.permute.xlu0 %966
        %968 = vrot.lane.b32.xlu0 %v852, 16
        %v969 = vpop.permute.xlu0 %968
        %970 = vrot.lane.b32.xlu0 %v853, 16
        %v971 = vpop.permute.xlu0 %970
        %972 = vrot.lane.b32.xlu0 %v854, 16
        %v973 = vpop.permute.xlu0 %972
        %974 = vrot.lane.b32.xlu0 %v855, 16
        %v975 = vpop.permute.xlu0 %974
        %976 = vrot.lane.b32.xlu0 %v856, 16
        %v977 = vpop.permute.xlu0 %976
        %978 = vrot.lane.b32.xlu0 %v857, 16
        %v979 = vpop.permute.xlu0 %978
        %980 = vrot.lane.b32.xlu0 %v858, 16
        %v981 = vpop.permute.xlu0 %980
        %982 = vrot.lane.b32.xlu0 %v859, 16
        %v983 = vpop.permute.xlu0 %982
        %984 = vrot.lane.b32.xlu0 %v860, 16
        %v985 = vpop.permute.xlu0 %984
        %986 = vrot.lane.b32.xlu0 %v861, 16
        %v987 = vpop.permute.xlu0 %986
        %988 = vrot.lane.b32.xlu0 %v862, 16
        %v989 = vpop.permute.xlu0 %988
        %990 = vrot.lane.b32.xlu0 %v863, 16
        %v991 = vpop.permute.xlu0 %990
        %v1024 = vmul.f32 %v674, %v929
        %v1025 = vmul.f32 %v677, %v931
        %v1026 = vmul.f32 %v682, %v933
        %v1027 = vmul.f32 %v685, %v935
        %v1028 = vmul.f32 %v690, %v937
        %v1029 = vmul.f32 %v693, %v939
        %v1030 = vmul.f32 %v698, %v941
        %v1031 = vmul.f32 %v701, %v943
        %v1032 = vmul.f32 %v706, %v945
        %v1033 = vmul.f32 %v709, %v947
        %v1034 = vmul.f32 %v714, %v949
        %v1035 = vmul.f32 %v717, %v951
        %v1036 = vmul.f32 %v722, %v953
        %v1037 = vmul.f32 %v725, %v955
        %v1038 = vmul.f32 %v730, %v957
        %v1039 = vmul.f32 %v733, %v959
        %v1040 = vmul.f32 %v738, %v961
        %v1041 = vmul.f32 %v741, %v963
        %v1042 = vmul.f32 %v746, %v965
        %v1043 = vmul.f32 %v749, %v967
        %v1044 = vmul.f32 %v754, %v969
        %v1045 = vmul.f32 %v757, %v971
        %v1046 = vmul.f32 %v762, %v973
        %v1047 = vmul.f32 %v765, %v975
        %v1048 = vmul.f32 %v770, %v977
        %v1049 = vmul.f32 %v773, %v979
        %v1050 = vmul.f32 %v778, %v981
        %v1051 = vmul.f32 %v781, %v983
        %v1052 = vmul.f32 %v786, %v985
        %v1053 = vmul.f32 %v789, %v987
        %v1054 = vmul.f32 %v794, %v989
        %v1055 = vmul.f32 %v797, %v991
        %1088 = vrot.lane.b32.xlu0 %v1024, 112
        %v1089 = vpop.permute.xlu0 %1088
        %1090 = vrot.lane.b32.xlu0 %v1025, 112
        %v1091 = vpop.permute.xlu0 %1090
        %1092 = vrot.lane.b32.xlu0 %v1026, 112
        %v1093 = vpop.permute.xlu0 %1092
        %1094 = vrot.lane.b32.xlu0 %v1027, 112
        %v1095 = vpop.permute.xlu0 %1094
        %1096 = vrot.lane.b32.xlu0 %v1028, 112
        %v1097 = vpop.permute.xlu0 %1096
        %1098 = vrot.lane.b32.xlu0 %v1029, 112
        %v1099 = vpop.permute.xlu0 %1098
        %1100 = vrot.lane.b32.xlu0 %v1030, 112
        %v1101 = vpop.permute.xlu0 %1100
        %1102 = vrot.lane.b32.xlu0 %v1031, 112
        %v1103 = vpop.permute.xlu0 %1102
        %1104 = vrot.lane.b32.xlu0 %v1032, 112
        %v1105 = vpop.permute.xlu0 %1104
        %1106 = vrot.lane.b32.xlu0 %v1033, 112
        %v1107 = vpop.permute.xlu0 %1106
        %1108 = vrot.lane.b32.xlu0 %v1034, 112
        %v1109 = vpop.permute.xlu0 %1108
        %1110 = vrot.lane.b32.xlu0 %v1035, 112
        %v1111 = vpop.permute.xlu0 %1110
        %1112 = vrot.lane.b32.xlu0 %v1036, 112
        %v1113 = vpop.permute.xlu0 %1112
        %1114 = vrot.lane.b32.xlu0 %v1037, 112
        %v1115 = vpop.permute.xlu0 %1114
        %1116 = vrot.lane.b32.xlu0 %v1038, 112
        %v1117 = vpop.permute.xlu0 %1116
        %1118 = vrot.lane.b32.xlu0 %v1039, 112
        %v1119 = vpop.permute.xlu0 %1118
        %1120 = vrot.lane.b32.xlu0 %v1040, 112
        %v1121 = vpop.permute.xlu0 %1120
        %1122 = vrot.lane.b32.xlu0 %v1041, 112
        %v1123 = vpop.permute.xlu0 %1122
        %1124 = vrot.lane.b32.xlu0 %v1042, 112
        %v1125 = vpop.permute.xlu0 %1124
        %1126 = vrot.lane.b32.xlu0 %v1043, 112
        %v1127 = vpop.permute.xlu0 %1126
        %1128 = vrot.lane.b32.xlu0 %v1044, 112
        %v1129 = vpop.permute.xlu0 %1128
        %1130 = vrot.lane.b32.xlu0 %v1045, 112
        %v1131 = vpop.permute.xlu0 %1130
        %1132 = vrot.lane.b32.xlu0 %v1046, 112
        %v1133 = vpop.permute.xlu0 %1132
        %1134 = vrot.lane.b32.xlu0 %v1047, 112
        %v1135 = vpop.permute.xlu0 %1134
        %1136 = vrot.lane.b32.xlu0 %v1048, 112
        %v1137 = vpop.permute.xlu0 %1136
        %1138 = vrot.lane.b32.xlu0 %v1049, 112
        %v1139 = vpop.permute.xlu0 %1138
        %1140 = vrot.lane.b32.xlu0 %v1050, 112
        %v1141 = vpop.permute.xlu0 %1140
        %1142 = vrot.lane.b32.xlu0 %v1051, 112
        %v1143 = vpop.permute.xlu0 %1142
        %1144 = vrot.lane.b32.xlu0 %v1052, 112
        %v1145 = vpop.permute.xlu0 %1144
        %1146 = vrot.lane.b32.xlu0 %v1053, 112
        %v1147 = vpop.permute.xlu0 %1146
        %1148 = vrot.lane.b32.xlu0 %v1054, 112
        %v1149 = vpop.permute.xlu0 %1148
        %1150 = vrot.lane.b32.xlu0 %v1055, 112
        %v1151 = vpop.permute.xlu0 %1150
        %v1184 = vsub.f32 %v864, %v1089
        %v1185 = vsub.f32 %v865, %v1091
        %v1186 = vsub.f32 %v866, %v1093
        %v1187 = vsub.f32 %v867, %v1095
        %v1188 = vsub.f32 %v868, %v1097
        %v1189 = vsub.f32 %v869, %v1099
        %v1190 = vsub.f32 %v870, %v1101
        %v1191 = vsub.f32 %v871, %v1103
        %v1192 = vsub.f32 %v872, %v1105
        %v1193 = vsub.f32 %v873, %v1107
        %v1194 = vsub.f32 %v874, %v1109
        %v1195 = vsub.f32 %v875, %v1111
        %v1196 = vsub.f32 %v876, %v1113
        %v1197 = vsub.f32 %v877, %v1115
        %v1198 = vsub.f32 %v878, %v1117
        %v1199 = vsub.f32 %v879, %v1119
        %v1200 = vsub.f32 %v880, %v1121
        %v1201 = vsub.f32 %v881, %v1123
        %v1202 = vsub.f32 %v882, %v1125
        %v1203 = vsub.f32 %v883, %v1127
        %v1204 = vsub.f32 %v884, %v1129
        %v1205 = vsub.f32 %v885, %v1131
        %v1206 = vsub.f32 %v886, %v1133
        %v1207 = vsub.f32 %v887, %v1135
        %v1208 = vsub.f32 %v888, %v1137
        %v1209 = vsub.f32 %v889, %v1139
        %v1210 = vsub.f32 %v890, %v1141
        %v1211 = vsub.f32 %v891, %v1143
        %v1212 = vsub.f32 %v892, %v1145
        %v1213 = vsub.f32 %v893, %v1147
        %v1214 = vsub.f32 %v894, %v1149
        %v1215 = vsub.f32 %v895, %v1151
        %v1216 = vmul.f32 %v1184, 0.17677669
        %v1217 = vmul.f32 %v1185, 0.17677669
        %v1218 = vmul.f32 %v1186, 0.17677669
        %v1219 = vmul.f32 %v1187, 0.17677669
        %v1220 = vmul.f32 %v1188, 0.17677669
        %v1221 = vmul.f32 %v1189, 0.17677669
        %v1222 = vmul.f32 %v1190, 0.17677669
        %v1223 = vmul.f32 %v1191, 0.17677669
        %v1224 = vmul.f32 %v1192, 0.17677669
        %v1225 = vmul.f32 %v1193, 0.17677669
        %v1226 = vmul.f32 %v1194, 0.17677669
        %v1227 = vmul.f32 %v1195, 0.17677669
        %v1228 = vmul.f32 %v1196, 0.17677669
        %v1229 = vmul.f32 %v1197, 0.17677669
        %v1230 = vmul.f32 %v1198, 0.17677669
        %v1231 = vmul.f32 %v1199, 0.17677669
        %v1232 = vmul.f32 %v1200, 0.17677669
        %v1233 = vmul.f32 %v1201, 0.17677669
        %v1234 = vmul.f32 %v1202, 0.17677669
        %v1235 = vmul.f32 %v1203, 0.17677669
        %v1236 = vmul.f32 %v1204, 0.17677669
        %v1237 = vmul.f32 %v1205, 0.17677669
        %v1238 = vmul.f32 %v1206, 0.17677669
        %v1239 = vmul.f32 %v1207, 0.17677669
        %v1240 = vmul.f32 %v1208, 0.17677669
        %v1241 = vmul.f32 %v1209, 0.17677669
        %v1242 = vmul.f32 %v1210, 0.17677669
        %v1243 = vmul.f32 %v1211, 0.17677669
        %v1244 = vmul.f32 %v1212, 0.17677669
        %v1245 = vmul.f32 %v1213, 0.17677669
        %v1246 = vmul.f32 %v1214, 0.17677669
        %v1247 = vmul.f32 %v1215, 0.17677669
        %v1248 = vpack.c.bf16 %v1217, %v1216
        %v1249 = vpack.c.bf16 %v1219, %v1218
        %v1250 = vpack.c.bf16 %v1221, %v1220
        %v1251 = vpack.c.bf16 %v1223, %v1222
        %v1252 = vpack.c.bf16 %v1225, %v1224
        %v1253 = vpack.c.bf16 %v1227, %v1226
        %v1254 = vpack.c.bf16 %v1229, %v1228
        %v1255 = vpack.c.bf16 %v1231, %v1230
        %v1256 = vpack.c.bf16 %v1233, %v1232
        %v1257 = vpack.c.bf16 %v1235, %v1234
        %v1258 = vpack.c.bf16 %v1237, %v1236
        %v1259 = vpack.c.bf16 %v1239, %v1238
        %v1260 = vpack.c.bf16 %v1241, %v1240
        %v1261 = vpack.c.bf16 %v1243, %v1242
        %v1262 = vpack.c.bf16 %v1245, %v1244
        %v1263 = vpack.c.bf16 %v1247, %v1246
        %v1280 = vunpack.c.l.b16 %v1248
        %v1281 = vunpack.c.h.b16 %v1248
        %v1282 = vunpack.c.l.b16 %v1249
        %v1283 = vunpack.c.h.b16 %v1249
        %v1284 = vunpack.c.l.b16 %v1250
        %v1285 = vunpack.c.h.b16 %v1250
        %v1286 = vunpack.c.l.b16 %v1251
        %v1287 = vunpack.c.h.b16 %v1251
        %v1288 = vunpack.c.l.b16 %v1252
        %v1289 = vunpack.c.h.b16 %v1252
        %v1290 = vunpack.c.l.b16 %v1253
        %v1291 = vunpack.c.h.b16 %v1253
        %v1292 = vunpack.c.l.b16 %v1254
        %v1293 = vunpack.c.h.b16 %v1254
        %v1294 = vunpack.c.l.b16 %v1255
        %v1295 = vunpack.c.h.b16 %v1255
        %v1296 = vunpack.c.l.b16 %v1256
        %v1297 = vunpack.c.h.b16 %v1256
        %v1298 = vunpack.c.l.b16 %v1257
        %v1299 = vunpack.c.h.b16 %v1257
        %v1300 = vunpack.c.l.b16 %v1258
        %v1301 = vunpack.c.h.b16 %v1258
        %v1302 = vunpack.c.l.b16 %v1259
        %v1303 = vunpack.c.h.b16 %v1259
        %v1304 = vunpack.c.l.b16 %v1260
        %v1305 = vunpack.c.h.b16 %v1260
        %v1306 = vunpack.c.l.b16 %v1261
        %v1307 = vunpack.c.h.b16 %v1261
        %v1308 = vunpack.c.l.b16 %v1262
        %v1309 = vunpack.c.h.b16 %v1262
        %v1310 = vunpack.c.l.b16 %v1263
        %v1311 = vunpack.c.h.b16 %v1263
        %v1312 = vpack.c.b16 %v1280, %v1280
        %v1313 = vpack.c.b16 %v1281, %v1281
        %v1314 = vpack.c.b16 %v1282, %v1282
        %v1315 = vpack.c.b16 %v1283, %v1283
        %v1316 = vpack.c.b16 %v1284, %v1284
        %v1317 = vpack.c.b16 %v1285, %v1285
        %v1318 = vpack.c.b16 %v1286, %v1286
        %v1319 = vpack.c.b16 %v1287, %v1287
        %v1320 = vpack.c.b16 %v1288, %v1288
        %v1321 = vpack.c.b16 %v1289, %v1289
        %v1322 = vpack.c.b16 %v1290, %v1290
        %v1323 = vpack.c.b16 %v1291, %v1291
        %v1324 = vpack.c.b16 %v1292, %v1292
        %v1325 = vpack.c.b16 %v1293, %v1293
        %v1326 = vpack.c.b16 %v1294, %v1294
        %v1327 = vpack.c.b16 %v1295, %v1295
        %v1328 = vpack.c.b16 %v1296, %v1296
        %v1329 = vpack.c.b16 %v1297, %v1297
        %v1330 = vpack.c.b16 %v1298, %v1298
        %v1331 = vpack.c.b16 %v1299, %v1299
        %v1332 = vpack.c.b16 %v1300, %v1300
        %v1333 = vpack.c.b16 %v1301, %v1301
        %v1334 = vpack.c.b16 %v1302, %v1302
        %v1335 = vpack.c.b16 %v1303, %v1303
        %v1336 = vpack.c.b16 %v1304, %v1304
        %v1337 = vpack.c.b16 %v1305, %v1305
        %v1338 = vpack.c.b16 %v1306, %v1306
        %v1339 = vpack.c.b16 %v1307, %v1307
        %v1340 = vpack.c.b16 %v1308, %v1308
        %v1341 = vpack.c.b16 %v1309, %v1309
        %v1342 = vpack.c.b16 %v1310, %v1310
        %v1343 = vpack.c.b16 %v1311, %v1311
        %vm1376 = vcmask 125952
        %1377 = vst.msk [vmem:[%s425] sm:$0xf] %vm1376, %v1312
        %1378 = vst.msk [vmem:[%s425 + $0x4] sm:$0xf] %vm1376, %v1313
        %1379 = vst.msk [vmem:[%s425 + $0x8] sm:$0xf] %vm1376, %v1314
        %1380 = vst.msk [vmem:[%s425 + $0xc] sm:$0xf] %vm1376, %v1315
        %1381 = vst.msk [vmem:[%s425 + $0x10] sm:$0xf] %vm1376, %v1316
        %1382 = vst.msk [vmem:[%s425 + $0x14] sm:$0xf] %vm1376, %v1317
        %1383 = vst.msk [vmem:[%s425 + $0x18] sm:$0xf] %vm1376, %v1318
        %1384 = vst.msk [vmem:[%s425 + $0x1c] sm:$0xf] %vm1376, %v1319
        %1385 = vst.msk [vmem:[%s425 + $0x20] sm:$0xf] %vm1376, %v1320
        %1386 = vst.msk [vmem:[%s425 + $0x24] sm:$0xf] %vm1376, %v1321
        %1387 = vst.msk [vmem:[%s425 + $0x28] sm:$0xf] %vm1376, %v1322
        %1388 = vst.msk [vmem:[%s425 + $0x2c] sm:$0xf] %vm1376, %v1323
        %1389 = vst.msk [vmem:[%s425 + $0x30] sm:$0xf] %vm1376, %v1324
        %1390 = vst.msk [vmem:[%s425 + $0x34] sm:$0xf] %vm1376, %v1325
        %1391 = vst.msk [vmem:[%s425 + $0x38] sm:$0xf] %vm1376, %v1326
        %1392 = vst.msk [vmem:[%s425 + $0x3c] sm:$0xf] %vm1376, %v1327
        %1393 = vst.msk [vmem:[%s425 + $0x40] sm:$0xf] %vm1376, %v1328
        %1394 = vst.msk [vmem:[%s425 + $0x44] sm:$0xf] %vm1376, %v1329
        %1395 = vst.msk [vmem:[%s425 + $0x48] sm:$0xf] %vm1376, %v1330
        %1396 = vst.msk [vmem:[%s425 + $0x4c] sm:$0xf] %vm1376, %v1331
        %1397 = vst.msk [vmem:[%s425 + $0x50] sm:$0xf] %vm1376, %v1332
        %1398 = vst.msk [vmem:[%s425 + $0x54] sm:$0xf] %vm1376, %v1333
        %1399 = vst.msk [vmem:[%s425 + $0x58] sm:$0xf] %vm1376, %v1334
        %1400 = vst.msk [vmem:[%s425 + $0x5c] sm:$0xf] %vm1376, %v1335
        %1401 = vst.msk [vmem:[%s425 + $0x60] sm:$0xf] %vm1376, %v1336
        %1402 = vst.msk [vmem:[%s425 + $0x64] sm:$0xf] %vm1376, %v1337
        %1403 = vst.msk [vmem:[%s425 + $0x68] sm:$0xf] %vm1376, %v1338
        %1404 = vst.msk [vmem:[%s425 + $0x6c] sm:$0xf] %vm1376, %v1339
        %1405 = vst.msk [vmem:[%s425 + $0x70] sm:$0xf] %vm1376, %v1340
        %1406 = vst.msk [vmem:[%s425 + $0x74] sm:$0xf] %vm1376, %v1341
        %1407 = vst.msk [vmem:[%s425 + $0x78] sm:$0xf] %vm1376, %v1342
        %1408 = vst.msk [vmem:[%s425 + $0x7c] sm:$0xf] %vm1376, %v1343
        %v1409 = vmul.f32 %v674, %v832
        %v1410 = vmul.f32 %v677, %v833
        %v1411 = vmul.f32 %v682, %v834
        %v1412 = vmul.f32 %v685, %v835
        %v1413 = vmul.f32 %v690, %v836
        %v1414 = vmul.f32 %v693, %v837
        %v1415 = vmul.f32 %v698, %v838
        %v1416 = vmul.f32 %v701, %v839
        %v1417 = vmul.f32 %v706, %v840
        %v1418 = vmul.f32 %v709, %v841
        %v1419 = vmul.f32 %v714, %v842
        %v1420 = vmul.f32 %v717, %v843
        %v1421 = vmul.f32 %v722, %v844
        %v1422 = vmul.f32 %v725, %v845
        %v1423 = vmul.f32 %v730, %v846
        %v1424 = vmul.f32 %v733, %v847
        %v1425 = vmul.f32 %v738, %v848
        %v1426 = vmul.f32 %v741, %v849
        %v1427 = vmul.f32 %v746, %v850
        %v1428 = vmul.f32 %v749, %v851
        %v1429 = vmul.f32 %v754, %v852
        %v1430 = vmul.f32 %v757, %v853
        %v1431 = vmul.f32 %v762, %v854
        %v1432 = vmul.f32 %v765, %v855
        %v1433 = vmul.f32 %v770, %v856
        %v1434 = vmul.f32 %v773, %v857
        %v1435 = vmul.f32 %v778, %v858
        %v1436 = vmul.f32 %v781, %v859
        %v1437 = vmul.f32 %v786, %v860
        %v1438 = vmul.f32 %v789, %v861
        %v1439 = vmul.f32 %v794, %v862
        %v1440 = vmul.f32 %v797, %v863
        %1473 = vrot.lane.b32.xlu0 %v800, 16
        %v1474 = vpop.permute.xlu0 %1473
        %1475 = vrot.lane.b32.xlu0 %v801, 16
        %v1476 = vpop.permute.xlu0 %1475
        %1477 = vrot.lane.b32.xlu0 %v802, 16
        %v1478 = vpop.permute.xlu0 %1477
        %1479 = vrot.lane.b32.xlu0 %v803, 16
        %v1480 = vpop.permute.xlu0 %1479
        %1481 = vrot.lane.b32.xlu0 %v804, 16
        %v1482 = vpop.permute.xlu0 %1481
        %1483 = vrot.lane.b32.xlu0 %v805, 16
        %v1484 = vpop.permute.xlu0 %1483
        %1485 = vrot.lane.b32.xlu0 %v806, 16
        %v1486 = vpop.permute.xlu0 %1485
        %1487 = vrot.lane.b32.xlu0 %v807, 16
        %v1488 = vpop.permute.xlu0 %1487
        %1489 = vrot.lane.b32.xlu0 %v808, 16
        %v1490 = vpop.permute.xlu0 %1489
        %1491 = vrot.lane.b32.xlu0 %v809, 16
        %v1492 = vpop.permute.xlu0 %1491
        %1493 = vrot.lane.b32.xlu0 %v810, 16
        %v1494 = vpop.permute.xlu0 %1493
        %1495 = vrot.lane.b32.xlu0 %v811, 16
        %v1496 = vpop.permute.xlu0 %1495
        %1497 = vrot.lane.b32.xlu0 %v812, 16
        %v1498 = vpop.permute.xlu0 %1497
        %1499 = vrot.lane.b32.xlu0 %v813, 16
        %v1500 = vpop.permute.xlu0 %1499
        %1501 = vrot.lane.b32.xlu0 %v814, 16
        %v1502 = vpop.permute.xlu0 %1501
        %1503 = vrot.lane.b32.xlu0 %v815, 16
        %v1504 = vpop.permute.xlu0 %1503
        %1505 = vrot.lane.b32.xlu0 %v816, 16
        %v1506 = vpop.permute.xlu0 %1505
        %1507 = vrot.lane.b32.xlu0 %v817, 16
        %v1508 = vpop.permute.xlu0 %1507
        %1509 = vrot.lane.b32.xlu0 %v818, 16
        %v1510 = vpop.permute.xlu0 %1509
        %1511 = vrot.lane.b32.xlu0 %v819, 16
        %v1512 = vpop.permute.xlu0 %1511
        %1513 = vrot.lane.b32.xlu0 %v820, 16
        %v1514 = vpop.permute.xlu0 %1513
        %1515 = vrot.lane.b32.xlu0 %v821, 16
        %v1516 = vpop.permute.xlu0 %1515
        %1517 = vrot.lane.b32.xlu0 %v822, 16
        %v1518 = vpop.permute.xlu0 %1517
        %1519 = vrot.lane.b32.xlu0 %v823, 16
        %v1520 = vpop.permute.xlu0 %1519
        %1521 = vrot.lane.b32.xlu0 %v824, 16
        %v1522 = vpop.permute.xlu0 %1521
        %1523 = vrot.lane.b32.xlu0 %v825, 16
        %v1524 = vpop.permute.xlu0 %1523
        %1525 = vrot.lane.b32.xlu0 %v826, 16
        %v1526 = vpop.permute.xlu0 %1525
        %1527 = vrot.lane.b32.xlu0 %v827, 16
        %v1528 = vpop.permute.xlu0 %1527
        %1529 = vrot.lane.b32.xlu0 %v828, 16
        %v1530 = vpop.permute.xlu0 %1529
        %1531 = vrot.lane.b32.xlu0 %v829, 16
        %v1532 = vpop.permute.xlu0 %1531
        %1533 = vrot.lane.b32.xlu0 %v830, 16
        %v1534 = vpop.permute.xlu0 %1533
        %1535 = vrot.lane.b32.xlu0 %v831, 16
        %v1536 = vpop.permute.xlu0 %1535
        %v1569 = vmul.f32 %v674, %v1474
        %v1570 = vmul.f32 %v677, %v1476
        %v1571 = vmul.f32 %v682, %v1478
        %v1572 = vmul.f32 %v685, %v1480
        %v1573 = vmul.f32 %v690, %v1482
        %v1574 = vmul.f32 %v693, %v1484
        %v1575 = vmul.f32 %v698, %v1486
        %v1576 = vmul.f32 %v701, %v1488
        %v1577 = vmul.f32 %v706, %v1490
        %v1578 = vmul.f32 %v709, %v1492
        %v1579 = vmul.f32 %v714, %v1494
        %v1580 = vmul.f32 %v717, %v1496
        %v1581 = vmul.f32 %v722, %v1498
        %v1582 = vmul.f32 %v725, %v1500
        %v1583 = vmul.f32 %v730, %v1502
        %v1584 = vmul.f32 %v733, %v1504
        %v1585 = vmul.f32 %v738, %v1506
        %v1586 = vmul.f32 %v741, %v1508
        %v1587 = vmul.f32 %v746, %v1510
        %v1588 = vmul.f32 %v749, %v1512
        %v1589 = vmul.f32 %v754, %v1514
        %v1590 = vmul.f32 %v757, %v1516
        %v1591 = vmul.f32 %v762, %v1518
        %v1592 = vmul.f32 %v765, %v1520
        %v1593 = vmul.f32 %v770, %v1522
        %v1594 = vmul.f32 %v773, %v1524
        %v1595 = vmul.f32 %v778, %v1526
        %v1596 = vmul.f32 %v781, %v1528
        %v1597 = vmul.f32 %v786, %v1530
        %v1598 = vmul.f32 %v789, %v1532
        %v1599 = vmul.f32 %v794, %v1534
        %v1600 = vmul.f32 %v797, %v1536
        %1633 = vrot.lane.b32.xlu0 %v1569, 112
        %v1634 = vpop.permute.xlu0 %1633
        %1635 = vrot.lane.b32.xlu0 %v1570, 112
        %v1636 = vpop.permute.xlu0 %1635
        %1637 = vrot.lane.b32.xlu0 %v1571, 112
        %v1638 = vpop.permute.xlu0 %1637
        %1639 = vrot.lane.b32.xlu0 %v1572, 112
        %v1640 = vpop.permute.xlu0 %1639
        %1641 = vrot.lane.b32.xlu0 %v1573, 112
        %v1642 = vpop.permute.xlu0 %1641
        %1643 = vrot.lane.b32.xlu0 %v1574, 112
        %v1644 = vpop.permute.xlu0 %1643
        %1645 = vrot.lane.b32.xlu0 %v1575, 112
        %v1646 = vpop.permute.xlu0 %1645
        %1647 = vrot.lane.b32.xlu0 %v1576, 112
        %v1648 = vpop.permute.xlu0 %1647
        %1649 = vrot.lane.b32.xlu0 %v1577, 112
        %v1650 = vpop.permute.xlu0 %1649
        %1651 = vrot.lane.b32.xlu0 %v1578, 112
        %v1652 = vpop.permute.xlu0 %1651
        %1653 = vrot.lane.b32.xlu0 %v1579, 112
        %v1654 = vpop.permute.xlu0 %1653
        %1655 = vrot.lane.b32.xlu0 %v1580, 112
        %v1656 = vpop.permute.xlu0 %1655
        %1657 = vrot.lane.b32.xlu0 %v1581, 112
        %v1658 = vpop.permute.xlu0 %1657
        %1659 = vrot.lane.b32.xlu0 %v1582, 112
        %v1660 = vpop.permute.xlu0 %1659
        %1661 = vrot.lane.b32.xlu0 %v1583, 112
        %v1662 = vpop.permute.xlu0 %1661
        %1663 = vrot.lane.b32.xlu0 %v1584, 112
        %v1664 = vpop.permute.xlu0 %1663
        %1665 = vrot.lane.b32.xlu0 %v1585, 112
        %v1666 = vpop.permute.xlu0 %1665
        %1667 = vrot.lane.b32.xlu0 %v1586, 112
        %v1668 = vpop.permute.xlu0 %1667
        %1669 = vrot.lane.b32.xlu0 %v1587, 112
        %v1670 = vpop.permute.xlu0 %1669
        %1671 = vrot.lane.b32.xlu0 %v1588, 112
        %v1672 = vpop.permute.xlu0 %1671
        %1673 = vrot.lane.b32.xlu0 %v1589, 112
        %v1674 = vpop.permute.xlu0 %1673
        %1675 = vrot.lane.b32.xlu0 %v1590, 112
        %v1676 = vpop.permute.xlu0 %1675
        %1677 = vrot.lane.b32.xlu0 %v1591, 112
        %v1678 = vpop.permute.xlu0 %1677
        %1679 = vrot.lane.b32.xlu0 %v1592, 112
        %v1680 = vpop.permute.xlu0 %1679
        %1681 = vrot.lane.b32.xlu0 %v1593, 112
        %v1682 = vpop.permute.xlu0 %1681
        %1683 = vrot.lane.b32.xlu0 %v1594, 112
        %v1684 = vpop.permute.xlu0 %1683
        %1685 = vrot.lane.b32.xlu0 %v1595, 112
        %v1686 = vpop.permute.xlu0 %1685
        %1687 = vrot.lane.b32.xlu0 %v1596, 112
        %v1688 = vpop.permute.xlu0 %1687
        %1689 = vrot.lane.b32.xlu0 %v1597, 112
        %v1690 = vpop.permute.xlu0 %1689
        %1691 = vrot.lane.b32.xlu0 %v1598, 112
        %v1692 = vpop.permute.xlu0 %1691
        %1693 = vrot.lane.b32.xlu0 %v1599, 112
        %v1694 = vpop.permute.xlu0 %1693
        %1695 = vrot.lane.b32.xlu0 %v1600, 112
        %v1696 = vpop.permute.xlu0 %1695
        %v1729 = vadd.f32 %v1409, %v1634
        %v1730 = vadd.f32 %v1410, %v1636
        %v1731 = vadd.f32 %v1411, %v1638
        %v1732 = vadd.f32 %v1412, %v1640
        %v1733 = vadd.f32 %v1413, %v1642
        %v1734 = vadd.f32 %v1414, %v1644
        %v1735 = vadd.f32 %v1415, %v1646
        %v1736 = vadd.f32 %v1416, %v1648
        %v1737 = vadd.f32 %v1417, %v1650
        %v1738 = vadd.f32 %v1418, %v1652
        %v1739 = vadd.f32 %v1419, %v1654
        %v1740 = vadd.f32 %v1420, %v1656
        %v1741 = vadd.f32 %v1421, %v1658
        %v1742 = vadd.f32 %v1422, %v1660
        %v1743 = vadd.f32 %v1423, %v1662
        %v1744 = vadd.f32 %v1424, %v1664
        %v1745 = vadd.f32 %v1425, %v1666
        %v1746 = vadd.f32 %v1426, %v1668
        %v1747 = vadd.f32 %v1427, %v1670
        %v1748 = vadd.f32 %v1428, %v1672
        %v1749 = vadd.f32 %v1429, %v1674
        %v1750 = vadd.f32 %v1430, %v1676
        %v1751 = vadd.f32 %v1431, %v1678
        %v1752 = vadd.f32 %v1432, %v1680
        %v1753 = vadd.f32 %v1433, %v1682
        %v1754 = vadd.f32 %v1434, %v1684
        %v1755 = vadd.f32 %v1435, %v1686
        %v1756 = vadd.f32 %v1436, %v1688
        %v1757 = vadd.f32 %v1437, %v1690
        %v1758 = vadd.f32 %v1438, %v1692
        %v1759 = vadd.f32 %v1439, %v1694
        %v1760 = vadd.f32 %v1440, %v1696
        %v1761 = vmul.f32 %v1729, 0.17677669
        %v1762 = vmul.f32 %v1730, 0.17677669
        %v1763 = vmul.f32 %v1731, 0.17677669
        %v1764 = vmul.f32 %v1732, 0.17677669
        %v1765 = vmul.f32 %v1733, 0.17677669
        %v1766 = vmul.f32 %v1734, 0.17677669
        %v1767 = vmul.f32 %v1735, 0.17677669
        %v1768 = vmul.f32 %v1736, 0.17677669
        %v1769 = vmul.f32 %v1737, 0.17677669
        %v1770 = vmul.f32 %v1738, 0.17677669
        %v1771 = vmul.f32 %v1739, 0.17677669
        %v1772 = vmul.f32 %v1740, 0.17677669
        %v1773 = vmul.f32 %v1741, 0.17677669
        %v1774 = vmul.f32 %v1742, 0.17677669
        %v1775 = vmul.f32 %v1743, 0.17677669
        %v1776 = vmul.f32 %v1744, 0.17677669
        %v1777 = vmul.f32 %v1745, 0.17677669
        %v1778 = vmul.f32 %v1746, 0.17677669
        %v1779 = vmul.f32 %v1747, 0.17677669
        %v1780 = vmul.f32 %v1748, 0.17677669
        %v1781 = vmul.f32 %v1749, 0.17677669
        %v1782 = vmul.f32 %v1750, 0.17677669
        %v1783 = vmul.f32 %v1751, 0.17677669
        %v1784 = vmul.f32 %v1752, 0.17677669
        %v1785 = vmul.f32 %v1753, 0.17677669
        %v1786 = vmul.f32 %v1754, 0.17677669
        %v1787 = vmul.f32 %v1755, 0.17677669
        %v1788 = vmul.f32 %v1756, 0.17677669
        %v1789 = vmul.f32 %v1757, 0.17677669
        %v1790 = vmul.f32 %v1758, 0.17677669
        %v1791 = vmul.f32 %v1759, 0.17677669
        %v1792 = vmul.f32 %v1760, 0.17677669
        %v1793 = vpack.c.bf16 %v1762, %v1761
        %v1794 = vpack.c.bf16 %v1764, %v1763
        %v1795 = vpack.c.bf16 %v1766, %v1765
        %v1796 = vpack.c.bf16 %v1768, %v1767
        %v1797 = vpack.c.bf16 %v1770, %v1769
        %v1798 = vpack.c.bf16 %v1772, %v1771
        %v1799 = vpack.c.bf16 %v1774, %v1773
        %v1800 = vpack.c.bf16 %v1776, %v1775
        %v1801 = vpack.c.bf16 %v1778, %v1777
        %v1802 = vpack.c.bf16 %v1780, %v1779
        %v1803 = vpack.c.bf16 %v1782, %v1781
        %v1804 = vpack.c.bf16 %v1784, %v1783
        %v1805 = vpack.c.bf16 %v1786, %v1785
        %v1806 = vpack.c.bf16 %v1788, %v1787
        %v1807 = vpack.c.bf16 %v1790, %v1789
        %v1808 = vpack.c.bf16 %v1792, %v1791
        %v1825 = vunpack.c.l.b16 %v1793
        %v1826 = vunpack.c.h.b16 %v1793
        %v1827 = vunpack.c.l.b16 %v1794
        %v1828 = vunpack.c.h.b16 %v1794
        %v1829 = vunpack.c.l.b16 %v1795
        %v1830 = vunpack.c.h.b16 %v1795
        %v1831 = vunpack.c.l.b16 %v1796
        %v1832 = vunpack.c.h.b16 %v1796
        %v1833 = vunpack.c.l.b16 %v1797
        %v1834 = vunpack.c.h.b16 %v1797
        %v1835 = vunpack.c.l.b16 %v1798
        %v1836 = vunpack.c.h.b16 %v1798
        %v1837 = vunpack.c.l.b16 %v1799
        %v1838 = vunpack.c.h.b16 %v1799
        %v1839 = vunpack.c.l.b16 %v1800
        %v1840 = vunpack.c.h.b16 %v1800
        %v1841 = vunpack.c.l.b16 %v1801
        %v1842 = vunpack.c.h.b16 %v1801
        %v1843 = vunpack.c.l.b16 %v1802
        %v1844 = vunpack.c.h.b16 %v1802
        %v1845 = vunpack.c.l.b16 %v1803
        %v1846 = vunpack.c.h.b16 %v1803
        %v1847 = vunpack.c.l.b16 %v1804
        %v1848 = vunpack.c.h.b16 %v1804
        %v1849 = vunpack.c.l.b16 %v1805
        %v1850 = vunpack.c.h.b16 %v1805
        %v1851 = vunpack.c.l.b16 %v1806
        %v1852 = vunpack.c.h.b16 %v1806
        %v1853 = vunpack.c.l.b16 %v1807
        %v1854 = vunpack.c.h.b16 %v1807
        %v1855 = vunpack.c.l.b16 %v1808
        %v1856 = vunpack.c.h.b16 %v1808
        %v1857 = vpack.c.b16 %v1825, %v1825
        %v1858 = vpack.c.b16 %v1826, %v1826
        %v1859 = vpack.c.b16 %v1827, %v1827
        %v1860 = vpack.c.b16 %v1828, %v1828
        %v1861 = vpack.c.b16 %v1829, %v1829
        %v1862 = vpack.c.b16 %v1830, %v1830
        %v1863 = vpack.c.b16 %v1831, %v1831
        %v1864 = vpack.c.b16 %v1832, %v1832
        %v1865 = vpack.c.b16 %v1833, %v1833
        %v1866 = vpack.c.b16 %v1834, %v1834
        %v1867 = vpack.c.b16 %v1835, %v1835
        %v1868 = vpack.c.b16 %v1836, %v1836
        %v1869 = vpack.c.b16 %v1837, %v1837
        %v1870 = vpack.c.b16 %v1838, %v1838
        %v1871 = vpack.c.b16 %v1839, %v1839
        %v1872 = vpack.c.b16 %v1840, %v1840
        %v1873 = vpack.c.b16 %v1841, %v1841
        %v1874 = vpack.c.b16 %v1842, %v1842
        %v1875 = vpack.c.b16 %v1843, %v1843
        %v1876 = vpack.c.b16 %v1844, %v1844
        %v1877 = vpack.c.b16 %v1845, %v1845
        %v1878 = vpack.c.b16 %v1846, %v1846
        %v1879 = vpack.c.b16 %v1847, %v1847
        %v1880 = vpack.c.b16 %v1848, %v1848
        %v1881 = vpack.c.b16 %v1849, %v1849
        %v1882 = vpack.c.b16 %v1850, %v1850
        %v1883 = vpack.c.b16 %v1851, %v1851
        %v1884 = vpack.c.b16 %v1852, %v1852
        %v1885 = vpack.c.b16 %v1853, %v1853
        %v1886 = vpack.c.b16 %v1854, %v1854
        %v1887 = vpack.c.b16 %v1855, %v1855
        %v1888 = vpack.c.b16 %v1856, %v1856
        %1889 = vrot.lane.b32.xlu0 %v1857, 16
        %v1890 = vpop.permute.xlu0 %1889
        %1891 = vrot.lane.b32.xlu0 %v1858, 16
        %v1892 = vpop.permute.xlu0 %1891
        %1893 = vrot.lane.b32.xlu0 %v1859, 16
        %v1894 = vpop.permute.xlu0 %1893
        %1895 = vrot.lane.b32.xlu0 %v1860, 16
        %v1896 = vpop.permute.xlu0 %1895
        %1897 = vrot.lane.b32.xlu0 %v1861, 16
        %v1898 = vpop.permute.xlu0 %1897
        %1899 = vrot.lane.b32.xlu0 %v1862, 16
        %v1900 = vpop.permute.xlu0 %1899
        %1901 = vrot.lane.b32.xlu0 %v1863, 16
        %v1902 = vpop.permute.xlu0 %1901
        %1903 = vrot.lane.b32.xlu0 %v1864, 16
        %v1904 = vpop.permute.xlu0 %1903
        %1905 = vrot.lane.b32.xlu0 %v1865, 16
        %v1906 = vpop.permute.xlu0 %1905
        %1907 = vrot.lane.b32.xlu0 %v1866, 16
        %v1908 = vpop.permute.xlu0 %1907
        %1909 = vrot.lane.b32.xlu0 %v1867, 16
        %v1910 = vpop.permute.xlu0 %1909
        %1911 = vrot.lane.b32.xlu0 %v1868, 16
        %v1912 = vpop.permute.xlu0 %1911
        %1913 = vrot.lane.b32.xlu0 %v1869, 16
        %v1914 = vpop.permute.xlu0 %1913
        %1915 = vrot.lane.b32.xlu0 %v1870, 16
        %v1916 = vpop.permute.xlu0 %1915
        %1917 = vrot.lane.b32.xlu0 %v1871, 16
        %v1918 = vpop.permute.xlu0 %1917
        %1919 = vrot.lane.b32.xlu0 %v1872, 16
        %v1920 = vpop.permute.xlu0 %1919
        %1921 = vrot.lane.b32.xlu0 %v1873, 16
        %v1922 = vpop.permute.xlu0 %1921
        %1923 = vrot.lane.b32.xlu0 %v1874, 16
        %v1924 = vpop.permute.xlu0 %1923
        %1925 = vrot.lane.b32.xlu0 %v1875, 16
        %v1926 = vpop.permute.xlu0 %1925
        %1927 = vrot.lane.b32.xlu0 %v1876, 16
        %v1928 = vpop.permute.xlu0 %1927
        %1929 = vrot.lane.b32.xlu0 %v1877, 16
        %v1930 = vpop.permute.xlu0 %1929
        %1931 = vrot.lane.b32.xlu0 %v1878, 16
        %v1932 = vpop.permute.xlu0 %1931
        %1933 = vrot.lane.b32.xlu0 %v1879, 16
        %v1934 = vpop.permute.xlu0 %1933
        %1935 = vrot.lane.b32.xlu0 %v1880, 16
        %v1936 = vpop.permute.xlu0 %1935
        %1937 = vrot.lane.b32.xlu0 %v1881, 16
        %v1938 = vpop.permute.xlu0 %1937
        %1939 = vrot.lane.b32.xlu0 %v1882, 16
        %v1940 = vpop.permute.xlu0 %1939
        %1941 = vrot.lane.b32.xlu0 %v1883, 16
        %v1942 = vpop.permute.xlu0 %1941
        %1943 = vrot.lane.b32.xlu0 %v1884, 16
        %v1944 = vpop.permute.xlu0 %1943
        %1945 = vrot.lane.b32.xlu0 %v1885, 16
        %v1946 = vpop.permute.xlu0 %1945
        %1947 = vrot.lane.b32.xlu0 %v1886, 16
        %v1948 = vpop.permute.xlu0 %1947
        %1949 = vrot.lane.b32.xlu0 %v1887, 16
        %v1950 = vpop.permute.xlu0 %1949
        %1951 = vrot.lane.b32.xlu0 %v1888, 16
        %v1952 = vpop.permute.xlu0 %1951
        %vm1985 = vcmask 257152
        %1986 = vst.msk [vmem:[%s425] sm:$0xf] %vm1985, %v1890
        %1987 = vst.msk [vmem:[%s425 + $0x4] sm:$0xf] %vm1985, %v1892
        %1988 = vst.msk [vmem:[%s425 + $0x8] sm:$0xf] %vm1985, %v1894
        %1989 = vst.msk [vmem:[%s425 + $0xc] sm:$0xf] %vm1985, %v1896
        %1990 = vst.msk [vmem:[%s425 + $0x10] sm:$0xf] %vm1985, %v1898
        %1991 = vst.msk [vmem:[%s425 + $0x14] sm:$0xf] %vm1985, %v1900
        %1992 = vst.msk [vmem:[%s425 + $0x18] sm:$0xf] %vm1985, %v1902
        %1993 = vst.msk [vmem:[%s425 + $0x1c] sm:$0xf] %vm1985, %v1904
        %1994 = vst.msk [vmem:[%s425 + $0x20] sm:$0xf] %vm1985, %v1906
        %1995 = vst.msk [vmem:[%s425 + $0x24] sm:$0xf] %vm1985, %v1908
        %1996 = vst.msk [vmem:[%s425 + $0x28] sm:$0xf] %vm1985, %v1910
        %1997 = vst.msk [vmem:[%s425 + $0x2c] sm:$0xf] %vm1985, %v1912
        %1998 = vst.msk [vmem:[%s425 + $0x30] sm:$0xf] %vm1985, %v1914
        %1999 = vst.msk [vmem:[%s425 + $0x34] sm:$0xf] %vm1985, %v1916
        %2000 = vst.msk [vmem:[%s425 + $0x38] sm:$0xf] %vm1985, %v1918
        %2001 = vst.msk [vmem:[%s425 + $0x3c] sm:$0xf] %vm1985, %v1920
        %2002 = vst.msk [vmem:[%s425 + $0x40] sm:$0xf] %vm1985, %v1922
        %2003 = vst.msk [vmem:[%s425 + $0x44] sm:$0xf] %vm1985, %v1924
        %2004 = vst.msk [vmem:[%s425 + $0x48] sm:$0xf] %vm1985, %v1926
        %2005 = vst.msk [vmem:[%s425 + $0x4c] sm:$0xf] %vm1985, %v1928
        %2006 = vst.msk [vmem:[%s425 + $0x50] sm:$0xf] %vm1985, %v1930
        %2007 = vst.msk [vmem:[%s425 + $0x54] sm:$0xf] %vm1985, %v1932
        %2008 = vst.msk [vmem:[%s425 + $0x58] sm:$0xf] %vm1985, %v1934
        %2009 = vst.msk [vmem:[%s425 + $0x5c] sm:$0xf] %vm1985, %v1936
        %2010 = vst.msk [vmem:[%s425 + $0x60] sm:$0xf] %vm1985, %v1938
        %2011 = vst.msk [vmem:[%s425 + $0x64] sm:$0xf] %vm1985, %v1940
        %2012 = vst.msk [vmem:[%s425 + $0x68] sm:$0xf] %vm1985, %v1942
        %2013 = vst.msk [vmem:[%s425 + $0x6c] sm:$0xf] %vm1985, %v1944
        %2014 = vst.msk [vmem:[%s425 + $0x70] sm:$0xf] %vm1985, %v1946
        %2015 = vst.msk [vmem:[%s425 + $0x74] sm:$0xf] %vm1985, %v1948
        %2016 = vst.msk [vmem:[%s425 + $0x78] sm:$0xf] %vm1985, %v1950
        %2017 = vst.msk [vmem:[%s425 + $0x7c] sm:$0xf] %vm1985, %v1952
        %2018 = vrot.lane.b32.xlu0 %v800, 32
        %v2019 = vpop.permute.xlu0 %2018
        %2020 = vrot.lane.b32.xlu0 %v801, 32
        %v2021 = vpop.permute.xlu0 %2020
        %2022 = vrot.lane.b32.xlu0 %v802, 32
        %v2023 = vpop.permute.xlu0 %2022
        %2024 = vrot.lane.b32.xlu0 %v803, 32
        %v2025 = vpop.permute.xlu0 %2024
        %2026 = vrot.lane.b32.xlu0 %v804, 32
        %v2027 = vpop.permute.xlu0 %2026
        %2028 = vrot.lane.b32.xlu0 %v805, 32
        %v2029 = vpop.permute.xlu0 %2028
        %2030 = vrot.lane.b32.xlu0 %v806, 32
        %v2031 = vpop.permute.xlu0 %2030
        %2032 = vrot.lane.b32.xlu0 %v807, 32
        %v2033 = vpop.permute.xlu0 %2032
        %2034 = vrot.lane.b32.xlu0 %v808, 32
        %v2035 = vpop.permute.xlu0 %2034
        %2036 = vrot.lane.b32.xlu0 %v809, 32
        %v2037 = vpop.permute.xlu0 %2036
        %2038 = vrot.lane.b32.xlu0 %v810, 32
        %v2039 = vpop.permute.xlu0 %2038
        %2040 = vrot.lane.b32.xlu0 %v811, 32
        %v2041 = vpop.permute.xlu0 %2040
        %2042 = vrot.lane.b32.xlu0 %v812, 32
        %v2043 = vpop.permute.xlu0 %2042
        %2044 = vrot.lane.b32.xlu0 %v813, 32
        %v2045 = vpop.permute.xlu0 %2044
        %2046 = vrot.lane.b32.xlu0 %v814, 32
        %v2047 = vpop.permute.xlu0 %2046
        %2048 = vrot.lane.b32.xlu0 %v815, 32
        %v2049 = vpop.permute.xlu0 %2048
        %2050 = vrot.lane.b32.xlu0 %v816, 32
        %v2051 = vpop.permute.xlu0 %2050
        %2052 = vrot.lane.b32.xlu0 %v817, 32
        %v2053 = vpop.permute.xlu0 %2052
        %2054 = vrot.lane.b32.xlu0 %v818, 32
        %v2055 = vpop.permute.xlu0 %2054
        %2056 = vrot.lane.b32.xlu0 %v819, 32
        %v2057 = vpop.permute.xlu0 %2056
        %2058 = vrot.lane.b32.xlu0 %v820, 32
        %v2059 = vpop.permute.xlu0 %2058
        %2060 = vrot.lane.b32.xlu0 %v821, 32
        %v2061 = vpop.permute.xlu0 %2060
        %2062 = vrot.lane.b32.xlu0 %v822, 32
        %v2063 = vpop.permute.xlu0 %2062
        %2064 = vrot.lane.b32.xlu0 %v823, 32
        %v2065 = vpop.permute.xlu0 %2064
        %2066 = vrot.lane.b32.xlu0 %v824, 32
        %v2067 = vpop.permute.xlu0 %2066
        %2068 = vrot.lane.b32.xlu0 %v825, 32
        %v2069 = vpop.permute.xlu0 %2068
        %2070 = vrot.lane.b32.xlu0 %v826, 32
        %v2071 = vpop.permute.xlu0 %2070
        %2072 = vrot.lane.b32.xlu0 %v827, 32
        %v2073 = vpop.permute.xlu0 %2072
        %2074 = vrot.lane.b32.xlu0 %v828, 32
        %v2075 = vpop.permute.xlu0 %2074
        %2076 = vrot.lane.b32.xlu0 %v829, 32
        %v2077 = vpop.permute.xlu0 %2076
        %2078 = vrot.lane.b32.xlu0 %v830, 32
        %v2079 = vpop.permute.xlu0 %2078
        %2080 = vrot.lane.b32.xlu0 %v831, 32
        %v2081 = vpop.permute.xlu0 %2080
        %v2114 = vmul.f32 %v674, %v2019
        %v2115 = vmul.f32 %v677, %v2021
        %v2116 = vmul.f32 %v682, %v2023
        %v2117 = vmul.f32 %v685, %v2025
        %v2118 = vmul.f32 %v690, %v2027
        %v2119 = vmul.f32 %v693, %v2029
        %v2120 = vmul.f32 %v698, %v2031
        %v2121 = vmul.f32 %v701, %v2033
        %v2122 = vmul.f32 %v706, %v2035
        %v2123 = vmul.f32 %v709, %v2037
        %v2124 = vmul.f32 %v714, %v2039
        %v2125 = vmul.f32 %v717, %v2041
        %v2126 = vmul.f32 %v722, %v2043
        %v2127 = vmul.f32 %v725, %v2045
        %v2128 = vmul.f32 %v730, %v2047
        %v2129 = vmul.f32 %v733, %v2049
        %v2130 = vmul.f32 %v738, %v2051
        %v2131 = vmul.f32 %v741, %v2053
        %v2132 = vmul.f32 %v746, %v2055
        %v2133 = vmul.f32 %v749, %v2057
        %v2134 = vmul.f32 %v754, %v2059
        %v2135 = vmul.f32 %v757, %v2061
        %v2136 = vmul.f32 %v762, %v2063
        %v2137 = vmul.f32 %v765, %v2065
        %v2138 = vmul.f32 %v770, %v2067
        %v2139 = vmul.f32 %v773, %v2069
        %v2140 = vmul.f32 %v778, %v2071
        %v2141 = vmul.f32 %v781, %v2073
        %v2142 = vmul.f32 %v786, %v2075
        %v2143 = vmul.f32 %v789, %v2077
        %v2144 = vmul.f32 %v794, %v2079
        %v2145 = vmul.f32 %v797, %v2081
        %2146 = vrot.lane.b32.xlu0 %v832, 48
        %v2147 = vpop.permute.xlu0 %2146
        %2148 = vrot.lane.b32.xlu0 %v833, 48
        %v2149 = vpop.permute.xlu0 %2148
        %2150 = vrot.lane.b32.xlu0 %v834, 48
        %v2151 = vpop.permute.xlu0 %2150
        %2152 = vrot.lane.b32.xlu0 %v835, 48
        %v2153 = vpop.permute.xlu0 %2152
        %2154 = vrot.lane.b32.xlu0 %v836, 48
        %v2155 = vpop.permute.xlu0 %2154
        %2156 = vrot.lane.b32.xlu0 %v837, 48
        %v2157 = vpop.permute.xlu0 %2156
        %2158 = vrot.lane.b32.xlu0 %v838, 48
        %v2159 = vpop.permute.xlu0 %2158
        %2160 = vrot.lane.b32.xlu0 %v839, 48
        %v2161 = vpop.permute.xlu0 %2160
        %2162 = vrot.lane.b32.xlu0 %v840, 48
        %v2163 = vpop.permute.xlu0 %2162
        %2164 = vrot.lane.b32.xlu0 %v841, 48
        %v2165 = vpop.permute.xlu0 %2164
        %2166 = vrot.lane.b32.xlu0 %v842, 48
        %v2167 = vpop.permute.xlu0 %2166
        %2168 = vrot.lane.b32.xlu0 %v843, 48
        %v2169 = vpop.permute.xlu0 %2168
        %2170 = vrot.lane.b32.xlu0 %v844, 48
        %v2171 = vpop.permute.xlu0 %2170
        %2172 = vrot.lane.b32.xlu0 %v845, 48
        %v2173 = vpop.permute.xlu0 %2172
        %2174 = vrot.lane.b32.xlu0 %v846, 48
        %v2175 = vpop.permute.xlu0 %2174
        %2176 = vrot.lane.b32.xlu0 %v847, 48
        %v2177 = vpop.permute.xlu0 %2176
        %2178 = vrot.lane.b32.xlu0 %v848, 48
        %v2179 = vpop.permute.xlu0 %2178
        %2180 = vrot.lane.b32.xlu0 %v849, 48
        %v2181 = vpop.permute.xlu0 %2180
        %2182 = vrot.lane.b32.xlu0 %v850, 48
        %v2183 = vpop.permute.xlu0 %2182
        %2184 = vrot.lane.b32.xlu0 %v851, 48
        %v2185 = vpop.permute.xlu0 %2184
        %2186 = vrot.lane.b32.xlu0 %v852, 48
        %v2187 = vpop.permute.xlu0 %2186
        %2188 = vrot.lane.b32.xlu0 %v853, 48
        %v2189 = vpop.permute.xlu0 %2188
        %2190 = vrot.lane.b32.xlu0 %v854, 48
        %v2191 = vpop.permute.xlu0 %2190
        %2192 = vrot.lane.b32.xlu0 %v855, 48
        %v2193 = vpop.permute.xlu0 %2192
        %2194 = vrot.lane.b32.xlu0 %v856, 48
        %v2195 = vpop.permute.xlu0 %2194
        %2196 = vrot.lane.b32.xlu0 %v857, 48
        %v2197 = vpop.permute.xlu0 %2196
        %2198 = vrot.lane.b32.xlu0 %v858, 48
        %v2199 = vpop.permute.xlu0 %2198
        %2200 = vrot.lane.b32.xlu0 %v859, 48
        %v2201 = vpop.permute.xlu0 %2200
        %2202 = vrot.lane.b32.xlu0 %v860, 48
        %v2203 = vpop.permute.xlu0 %2202
        %2204 = vrot.lane.b32.xlu0 %v861, 48
        %v2205 = vpop.permute.xlu0 %2204
        %2206 = vrot.lane.b32.xlu0 %v862, 48
        %v2207 = vpop.permute.xlu0 %2206
        %2208 = vrot.lane.b32.xlu0 %v863, 48
        %v2209 = vpop.permute.xlu0 %2208
        %v2242 = vmul.f32 %v674, %v2147
        %v2243 = vmul.f32 %v677, %v2149
        %v2244 = vmul.f32 %v682, %v2151
        %v2245 = vmul.f32 %v685, %v2153
        %v2246 = vmul.f32 %v690, %v2155
        %v2247 = vmul.f32 %v693, %v2157
        %v2248 = vmul.f32 %v698, %v2159
        %v2249 = vmul.f32 %v701, %v2161
        %v2250 = vmul.f32 %v706, %v2163
        %v2251 = vmul.f32 %v709, %v2165
        %v2252 = vmul.f32 %v714, %v2167
        %v2253 = vmul.f32 %v717, %v2169
        %v2254 = vmul.f32 %v722, %v2171
        %v2255 = vmul.f32 %v725, %v2173
        %v2256 = vmul.f32 %v730, %v2175
        %v2257 = vmul.f32 %v733, %v2177
        %v2258 = vmul.f32 %v738, %v2179
        %v2259 = vmul.f32 %v741, %v2181
        %v2260 = vmul.f32 %v746, %v2183
        %v2261 = vmul.f32 %v749, %v2185
        %v2262 = vmul.f32 %v754, %v2187
        %v2263 = vmul.f32 %v757, %v2189
        %v2264 = vmul.f32 %v762, %v2191
        %v2265 = vmul.f32 %v765, %v2193
        %v2266 = vmul.f32 %v770, %v2195
        %v2267 = vmul.f32 %v773, %v2197
        %v2268 = vmul.f32 %v778, %v2199
        %v2269 = vmul.f32 %v781, %v2201
        %v2270 = vmul.f32 %v786, %v2203
        %v2271 = vmul.f32 %v789, %v2205
        %v2272 = vmul.f32 %v794, %v2207
        %v2273 = vmul.f32 %v797, %v2209
        %2306 = vrot.lane.b32.xlu0 %v2242, 112
        %v2307 = vpop.permute.xlu0 %2306
        %2308 = vrot.lane.b32.xlu0 %v2243, 112
        %v2309 = vpop.permute.xlu0 %2308
        %2310 = vrot.lane.b32.xlu0 %v2244, 112
        %v2311 = vpop.permute.xlu0 %2310
        %2312 = vrot.lane.b32.xlu0 %v2245, 112
        %v2313 = vpop.permute.xlu0 %2312
        %2314 = vrot.lane.b32.xlu0 %v2246, 112
        %v2315 = vpop.permute.xlu0 %2314
        %2316 = vrot.lane.b32.xlu0 %v2247, 112
        %v2317 = vpop.permute.xlu0 %2316
        %2318 = vrot.lane.b32.xlu0 %v2248, 112
        %v2319 = vpop.permute.xlu0 %2318
        %2320 = vrot.lane.b32.xlu0 %v2249, 112
        %v2321 = vpop.permute.xlu0 %2320
        %2322 = vrot.lane.b32.xlu0 %v2250, 112
        %v2323 = vpop.permute.xlu0 %2322
        %2324 = vrot.lane.b32.xlu0 %v2251, 112
        %v2325 = vpop.permute.xlu0 %2324
        %2326 = vrot.lane.b32.xlu0 %v2252, 112
        %v2327 = vpop.permute.xlu0 %2326
        %2328 = vrot.lane.b32.xlu0 %v2253, 112
        %v2329 = vpop.permute.xlu0 %2328
        %2330 = vrot.lane.b32.xlu0 %v2254, 112
        %v2331 = vpop.permute.xlu0 %2330
        %2332 = vrot.lane.b32.xlu0 %v2255, 112
        %v2333 = vpop.permute.xlu0 %2332
        %2334 = vrot.lane.b32.xlu0 %v2256, 112
        %v2335 = vpop.permute.xlu0 %2334
        %2336 = vrot.lane.b32.xlu0 %v2257, 112
        %v2337 = vpop.permute.xlu0 %2336
        %2338 = vrot.lane.b32.xlu0 %v2258, 112
        %v2339 = vpop.permute.xlu0 %2338
        %2340 = vrot.lane.b32.xlu0 %v2259, 112
        %v2341 = vpop.permute.xlu0 %2340
        %2342 = vrot.lane.b32.xlu0 %v2260, 112
        %v2343 = vpop.permute.xlu0 %2342
        %2344 = vrot.lane.b32.xlu0 %v2261, 112
        %v2345 = vpop.permute.xlu0 %2344
        %2346 = vrot.lane.b32.xlu0 %v2262, 112
        %v2347 = vpop.permute.xlu0 %2346
        %2348 = vrot.lane.b32.xlu0 %v2263, 112
        %v2349 = vpop.permute.xlu0 %2348
        %2350 = vrot.lane.b32.xlu0 %v2264, 112
        %v2351 = vpop.permute.xlu0 %2350
        %2352 = vrot.lane.b32.xlu0 %v2265, 112
        %v2353 = vpop.permute.xlu0 %2352
        %2354 = vrot.lane.b32.xlu0 %v2266, 112
        %v2355 = vpop.permute.xlu0 %2354
        %2356 = vrot.lane.b32.xlu0 %v2267, 112
        %v2357 = vpop.permute.xlu0 %2356
        %2358 = vrot.lane.b32.xlu0 %v2268, 112
        %v2359 = vpop.permute.xlu0 %2358
        %2360 = vrot.lane.b32.xlu0 %v2269, 112
        %v2361 = vpop.permute.xlu0 %2360
        %2362 = vrot.lane.b32.xlu0 %v2270, 112
        %v2363 = vpop.permute.xlu0 %2362
        %2364 = vrot.lane.b32.xlu0 %v2271, 112
        %v2365 = vpop.permute.xlu0 %2364
        %2366 = vrot.lane.b32.xlu0 %v2272, 112
        %v2367 = vpop.permute.xlu0 %2366
        %2368 = vrot.lane.b32.xlu0 %v2273, 112
        %v2369 = vpop.permute.xlu0 %2368
        %v2402 = vsub.f32 %v2114, %v2307
        %v2403 = vsub.f32 %v2115, %v2309
        %v2404 = vsub.f32 %v2116, %v2311
        %v2405 = vsub.f32 %v2117, %v2313
        %v2406 = vsub.f32 %v2118, %v2315
        %v2407 = vsub.f32 %v2119, %v2317
        %v2408 = vsub.f32 %v2120, %v2319
        %v2409 = vsub.f32 %v2121, %v2321
        %v2410 = vsub.f32 %v2122, %v2323
        %v2411 = vsub.f32 %v2123, %v2325
        %v2412 = vsub.f32 %v2124, %v2327
        %v2413 = vsub.f32 %v2125, %v2329
        %v2414 = vsub.f32 %v2126, %v2331
        %v2415 = vsub.f32 %v2127, %v2333
        %v2416 = vsub.f32 %v2128, %v2335
        %v2417 = vsub.f32 %v2129, %v2337
        %v2418 = vsub.f32 %v2130, %v2339
        %v2419 = vsub.f32 %v2131, %v2341
        %v2420 = vsub.f32 %v2132, %v2343
        %v2421 = vsub.f32 %v2133, %v2345
        %v2422 = vsub.f32 %v2134, %v2347
        %v2423 = vsub.f32 %v2135, %v2349
        %v2424 = vsub.f32 %v2136, %v2351
        %v2425 = vsub.f32 %v2137, %v2353
        %v2426 = vsub.f32 %v2138, %v2355
        %v2427 = vsub.f32 %v2139, %v2357
        %v2428 = vsub.f32 %v2140, %v2359
        %v2429 = vsub.f32 %v2141, %v2361
        %v2430 = vsub.f32 %v2142, %v2363
        %v2431 = vsub.f32 %v2143, %v2365
        %v2432 = vsub.f32 %v2144, %v2367
        %v2433 = vsub.f32 %v2145, %v2369
        %v2434 = vpack.c.bf16 %v2403, %v2402
        %v2435 = vpack.c.bf16 %v2405, %v2404
        %v2436 = vpack.c.bf16 %v2407, %v2406
        %v2437 = vpack.c.bf16 %v2409, %v2408
        %v2438 = vpack.c.bf16 %v2411, %v2410
        %v2439 = vpack.c.bf16 %v2413, %v2412
        %v2440 = vpack.c.bf16 %v2415, %v2414
        %v2441 = vpack.c.bf16 %v2417, %v2416
        %v2442 = vpack.c.bf16 %v2419, %v2418
        %v2443 = vpack.c.bf16 %v2421, %v2420
        %v2444 = vpack.c.bf16 %v2423, %v2422
        %v2445 = vpack.c.bf16 %v2425, %v2424
        %v2446 = vpack.c.bf16 %v2427, %v2426
        %v2447 = vpack.c.bf16 %v2429, %v2428
        %v2448 = vpack.c.bf16 %v2431, %v2430
        %v2449 = vpack.c.bf16 %v2433, %v2432
        %v2466 = vunpack.c.l.b16 %v2434
        %v2467 = vunpack.c.h.b16 %v2434
        %v2468 = vunpack.c.l.b16 %v2435
        %v2469 = vunpack.c.h.b16 %v2435
        %v2470 = vunpack.c.l.b16 %v2436
        %v2471 = vunpack.c.h.b16 %v2436
        %v2472 = vunpack.c.l.b16 %v2437
        %v2473 = vunpack.c.h.b16 %v2437
        %v2474 = vunpack.c.l.b16 %v2438
        %v2475 = vunpack.c.h.b16 %v2438
        %v2476 = vunpack.c.l.b16 %v2439
        %v2477 = vunpack.c.h.b16 %v2439
        %v2478 = vunpack.c.l.b16 %v2440
        %v2479 = vunpack.c.h.b16 %v2440
        %v2480 = vunpack.c.l.b16 %v2441
        %v2481 = vunpack.c.h.b16 %v2441
        %v2482 = vunpack.c.l.b16 %v2442
        %v2483 = vunpack.c.h.b16 %v2442
        %v2484 = vunpack.c.l.b16 %v2443
        %v2485 = vunpack.c.h.b16 %v2443
        %v2486 = vunpack.c.l.b16 %v2444
        %v2487 = vunpack.c.h.b16 %v2444
        %v2488 = vunpack.c.l.b16 %v2445
        %v2489 = vunpack.c.h.b16 %v2445
        %v2490 = vunpack.c.l.b16 %v2446
        %v2491 = vunpack.c.h.b16 %v2446
        %v2492 = vunpack.c.l.b16 %v2447
        %v2493 = vunpack.c.h.b16 %v2447
        %v2494 = vunpack.c.l.b16 %v2448
        %v2495 = vunpack.c.h.b16 %v2448
        %v2496 = vunpack.c.l.b16 %v2449
        %v2497 = vunpack.c.h.b16 %v2449
        %v2498 = vpack.c.b16 %v2466, %v2466
        %v2499 = vpack.c.b16 %v2467, %v2467
        %v2500 = vpack.c.b16 %v2468, %v2468
        %v2501 = vpack.c.b16 %v2469, %v2469
        %v2502 = vpack.c.b16 %v2470, %v2470
        %v2503 = vpack.c.b16 %v2471, %v2471
        %v2504 = vpack.c.b16 %v2472, %v2472
        %v2505 = vpack.c.b16 %v2473, %v2473
        %v2506 = vpack.c.b16 %v2474, %v2474
        %v2507 = vpack.c.b16 %v2475, %v2475
        %v2508 = vpack.c.b16 %v2476, %v2476
        %v2509 = vpack.c.b16 %v2477, %v2477
        %v2510 = vpack.c.b16 %v2478, %v2478
        %v2511 = vpack.c.b16 %v2479, %v2479
        %v2512 = vpack.c.b16 %v2480, %v2480
        %v2513 = vpack.c.b16 %v2481, %v2481
        %v2514 = vpack.c.b16 %v2482, %v2482
        %v2515 = vpack.c.b16 %v2483, %v2483
        %v2516 = vpack.c.b16 %v2484, %v2484
        %v2517 = vpack.c.b16 %v2485, %v2485
        %v2518 = vpack.c.b16 %v2486, %v2486
        %v2519 = vpack.c.b16 %v2487, %v2487
        %v2520 = vpack.c.b16 %v2488, %v2488
        %v2521 = vpack.c.b16 %v2489, %v2489
        %v2522 = vpack.c.b16 %v2490, %v2490
        %v2523 = vpack.c.b16 %v2491, %v2491
        %v2524 = vpack.c.b16 %v2492, %v2492
        %v2525 = vpack.c.b16 %v2493, %v2493
        %v2526 = vpack.c.b16 %v2494, %v2494
        %v2527 = vpack.c.b16 %v2495, %v2495
        %v2528 = vpack.c.b16 %v2496, %v2496
        %v2529 = vpack.c.b16 %v2497, %v2497
        %2530 = vrot.lane.b32.xlu0 %v2498, 96
        %v2531 = vpop.permute.xlu0 %2530
        %2532 = vrot.lane.b32.xlu0 %v2499, 96
        %v2533 = vpop.permute.xlu0 %2532
        %2534 = vrot.lane.b32.xlu0 %v2500, 96
        %v2535 = vpop.permute.xlu0 %2534
        %2536 = vrot.lane.b32.xlu0 %v2501, 96
        %v2537 = vpop.permute.xlu0 %2536
        %2538 = vrot.lane.b32.xlu0 %v2502, 96
        %v2539 = vpop.permute.xlu0 %2538
        %2540 = vrot.lane.b32.xlu0 %v2503, 96
        %v2541 = vpop.permute.xlu0 %2540
        %2542 = vrot.lane.b32.xlu0 %v2504, 96
        %v2543 = vpop.permute.xlu0 %2542
        %2544 = vrot.lane.b32.xlu0 %v2505, 96
        %v2545 = vpop.permute.xlu0 %2544
        %2546 = vrot.lane.b32.xlu0 %v2506, 96
        %v2547 = vpop.permute.xlu0 %2546
        %2548 = vrot.lane.b32.xlu0 %v2507, 96
        %v2549 = vpop.permute.xlu0 %2548
        %2550 = vrot.lane.b32.xlu0 %v2508, 96
        %v2551 = vpop.permute.xlu0 %2550
        %2552 = vrot.lane.b32.xlu0 %v2509, 96
        %v2553 = vpop.permute.xlu0 %2552
        %2554 = vrot.lane.b32.xlu0 %v2510, 96
        %v2555 = vpop.permute.xlu0 %2554
        %2556 = vrot.lane.b32.xlu0 %v2511, 96
        %v2557 = vpop.permute.xlu0 %2556
        %2558 = vrot.lane.b32.xlu0 %v2512, 96
        %v2559 = vpop.permute.xlu0 %2558
        %2560 = vrot.lane.b32.xlu0 %v2513, 96
        %v2561 = vpop.permute.xlu0 %2560
        %2562 = vrot.lane.b32.xlu0 %v2514, 96
        %v2563 = vpop.permute.xlu0 %2562
        %2564 = vrot.lane.b32.xlu0 %v2515, 96
        %v2565 = vpop.permute.xlu0 %2564
        %2566 = vrot.lane.b32.xlu0 %v2516, 96
        %v2567 = vpop.permute.xlu0 %2566
        %2568 = vrot.lane.b32.xlu0 %v2517, 96
        %v2569 = vpop.permute.xlu0 %2568
        %2570 = vrot.lane.b32.xlu0 %v2518, 96
        %v2571 = vpop.permute.xlu0 %2570
        %2572 = vrot.lane.b32.xlu0 %v2519, 96
        %v2573 = vpop.permute.xlu0 %2572
        %2574 = vrot.lane.b32.xlu0 %v2520, 96
        %v2575 = vpop.permute.xlu0 %2574
        %2576 = vrot.lane.b32.xlu0 %v2521, 96
        %v2577 = vpop.permute.xlu0 %2576
        %2578 = vrot.lane.b32.xlu0 %v2522, 96
        %v2579 = vpop.permute.xlu0 %2578
        %2580 = vrot.lane.b32.xlu0 %v2523, 96
        %v2581 = vpop.permute.xlu0 %2580
        %2582 = vrot.lane.b32.xlu0 %v2524, 96
        %v2583 = vpop.permute.xlu0 %2582
        %2584 = vrot.lane.b32.xlu0 %v2525, 96
        %v2585 = vpop.permute.xlu0 %2584
        %2586 = vrot.lane.b32.xlu0 %v2526, 96
        %v2587 = vpop.permute.xlu0 %2586
        %2588 = vrot.lane.b32.xlu0 %v2527, 96
        %v2589 = vpop.permute.xlu0 %2588
        %2590 = vrot.lane.b32.xlu0 %v2528, 96
        %v2591 = vpop.permute.xlu0 %2590
        %2592 = vrot.lane.b32.xlu0 %v2529, 96
        %v2593 = vpop.permute.xlu0 %2592
        %2626 = vst.msk [vmem:[%s432] sm:$0xf] %vm1376, %v2531
        %2627 = vst.msk [vmem:[%s432 + $0x4] sm:$0xf] %vm1376, %v2533
        %2628 = vst.msk [vmem:[%s432 + $0x8] sm:$0xf] %vm1376, %v2535
        %2629 = vst.msk [vmem:[%s432 + $0xc] sm:$0xf] %vm1376, %v2537
        %2630 = vst.msk [vmem:[%s432 + $0x10] sm:$0xf] %vm1376, %v2539
        %2631 = vst.msk [vmem:[%s432 + $0x14] sm:$0xf] %vm1376, %v2541
        %2632 = vst.msk [vmem:[%s432 + $0x18] sm:$0xf] %vm1376, %v2543
        %2633 = vst.msk [vmem:[%s432 + $0x1c] sm:$0xf] %vm1376, %v2545
        %2634 = vst.msk [vmem:[%s432 + $0x20] sm:$0xf] %vm1376, %v2547
        %2635 = vst.msk [vmem:[%s432 + $0x24] sm:$0xf] %vm1376, %v2549
        %2636 = vst.msk [vmem:[%s432 + $0x28] sm:$0xf] %vm1376, %v2551
        %2637 = vst.msk [vmem:[%s432 + $0x2c] sm:$0xf] %vm1376, %v2553
        %2638 = vst.msk [vmem:[%s432 + $0x30] sm:$0xf] %vm1376, %v2555
        %2639 = vst.msk [vmem:[%s432 + $0x34] sm:$0xf] %vm1376, %v2557
        %2640 = vst.msk [vmem:[%s432 + $0x38] sm:$0xf] %vm1376, %v2559
        %2641 = vst.msk [vmem:[%s432 + $0x3c] sm:$0xf] %vm1376, %v2561
        %2642 = vst.msk [vmem:[%s432 + $0x40] sm:$0xf] %vm1376, %v2563
        %2643 = vst.msk [vmem:[%s432 + $0x44] sm:$0xf] %vm1376, %v2565
        %2644 = vst.msk [vmem:[%s432 + $0x48] sm:$0xf] %vm1376, %v2567
        %2645 = vst.msk [vmem:[%s432 + $0x4c] sm:$0xf] %vm1376, %v2569
        %2646 = vst.msk [vmem:[%s432 + $0x50] sm:$0xf] %vm1376, %v2571
        %2647 = vst.msk [vmem:[%s432 + $0x54] sm:$0xf] %vm1376, %v2573
        %2648 = vst.msk [vmem:[%s432 + $0x58] sm:$0xf] %vm1376, %v2575
        %2649 = vst.msk [vmem:[%s432 + $0x5c] sm:$0xf] %vm1376, %v2577
        %2650 = vst.msk [vmem:[%s432 + $0x60] sm:$0xf] %vm1376, %v2579
        %2651 = vst.msk [vmem:[%s432 + $0x64] sm:$0xf] %vm1376, %v2581
        %2652 = vst.msk [vmem:[%s432 + $0x68] sm:$0xf] %vm1376, %v2583
        %2653 = vst.msk [vmem:[%s432 + $0x6c] sm:$0xf] %vm1376, %v2585
        %2654 = vst.msk [vmem:[%s432 + $0x70] sm:$0xf] %vm1376, %v2587
        %2655 = vst.msk [vmem:[%s432 + $0x74] sm:$0xf] %vm1376, %v2589
        %2656 = vst.msk [vmem:[%s432 + $0x78] sm:$0xf] %vm1376, %v2591
        %2657 = vst.msk [vmem:[%s432 + $0x7c] sm:$0xf] %vm1376, %v2593
        %2658 = vrot.lane.b32.xlu0 %v832, 32
        %v2659 = vpop.permute.xlu0 %2658
        %2660 = vrot.lane.b32.xlu0 %v833, 32
        %v2661 = vpop.permute.xlu0 %2660
        %2662 = vrot.lane.b32.xlu0 %v834, 32
        %v2663 = vpop.permute.xlu0 %2662
        %2664 = vrot.lane.b32.xlu0 %v835, 32
        %v2665 = vpop.permute.xlu0 %2664
        %2666 = vrot.lane.b32.xlu0 %v836, 32
        %v2667 = vpop.permute.xlu0 %2666
        %2668 = vrot.lane.b32.xlu0 %v837, 32
        %v2669 = vpop.permute.xlu0 %2668
        %2670 = vrot.lane.b32.xlu0 %v838, 32
        %v2671 = vpop.permute.xlu0 %2670
        %2672 = vrot.lane.b32.xlu0 %v839, 32
        %v2673 = vpop.permute.xlu0 %2672
        %2674 = vrot.lane.b32.xlu0 %v840, 32
        %v2675 = vpop.permute.xlu0 %2674
        %2676 = vrot.lane.b32.xlu0 %v841, 32
        %v2677 = vpop.permute.xlu0 %2676
        %2678 = vrot.lane.b32.xlu0 %v842, 32
        %v2679 = vpop.permute.xlu0 %2678
        %2680 = vrot.lane.b32.xlu0 %v843, 32
        %v2681 = vpop.permute.xlu0 %2680
        %2682 = vrot.lane.b32.xlu0 %v844, 32
        %v2683 = vpop.permute.xlu0 %2682
        %2684 = vrot.lane.b32.xlu0 %v845, 32
        %v2685 = vpop.permute.xlu0 %2684
        %2686 = vrot.lane.b32.xlu0 %v846, 32
        %v2687 = vpop.permute.xlu0 %2686
        %2688 = vrot.lane.b32.xlu0 %v847, 32
        %v2689 = vpop.permute.xlu0 %2688
        %2690 = vrot.lane.b32.xlu0 %v848, 32
        %v2691 = vpop.permute.xlu0 %2690
        %2692 = vrot.lane.b32.xlu0 %v849, 32
        %v2693 = vpop.permute.xlu0 %2692
        %2694 = vrot.lane.b32.xlu0 %v850, 32
        %v2695 = vpop.permute.xlu0 %2694
        %2696 = vrot.lane.b32.xlu0 %v851, 32
        %v2697 = vpop.permute.xlu0 %2696
        %2698 = vrot.lane.b32.xlu0 %v852, 32
        %v2699 = vpop.permute.xlu0 %2698
        %2700 = vrot.lane.b32.xlu0 %v853, 32
        %v2701 = vpop.permute.xlu0 %2700
        %2702 = vrot.lane.b32.xlu0 %v854, 32
        %v2703 = vpop.permute.xlu0 %2702
        %2704 = vrot.lane.b32.xlu0 %v855, 32
        %v2705 = vpop.permute.xlu0 %2704
        %2706 = vrot.lane.b32.xlu0 %v856, 32
        %v2707 = vpop.permute.xlu0 %2706
        %2708 = vrot.lane.b32.xlu0 %v857, 32
        %v2709 = vpop.permute.xlu0 %2708
        %2710 = vrot.lane.b32.xlu0 %v858, 32
        %v2711 = vpop.permute.xlu0 %2710
        %2712 = vrot.lane.b32.xlu0 %v859, 32
        %v2713 = vpop.permute.xlu0 %2712
        %2714 = vrot.lane.b32.xlu0 %v860, 32
        %v2715 = vpop.permute.xlu0 %2714
        %2716 = vrot.lane.b32.xlu0 %v861, 32
        %v2717 = vpop.permute.xlu0 %2716
        %2718 = vrot.lane.b32.xlu0 %v862, 32
        %v2719 = vpop.permute.xlu0 %2718
        %2720 = vrot.lane.b32.xlu0 %v863, 32
        %v2721 = vpop.permute.xlu0 %2720
        %v2754 = vmul.f32 %v674, %v2659
        %v2755 = vmul.f32 %v677, %v2661
        %v2756 = vmul.f32 %v682, %v2663
        %v2757 = vmul.f32 %v685, %v2665
        %v2758 = vmul.f32 %v690, %v2667
        %v2759 = vmul.f32 %v693, %v2669
        %v2760 = vmul.f32 %v698, %v2671
        %v2761 = vmul.f32 %v701, %v2673
        %v2762 = vmul.f32 %v706, %v2675
        %v2763 = vmul.f32 %v709, %v2677
        %v2764 = vmul.f32 %v714, %v2679
        %v2765 = vmul.f32 %v717, %v2681
        %v2766 = vmul.f32 %v722, %v2683
        %v2767 = vmul.f32 %v725, %v2685
        %v2768 = vmul.f32 %v730, %v2687
        %v2769 = vmul.f32 %v733, %v2689
        %v2770 = vmul.f32 %v738, %v2691
        %v2771 = vmul.f32 %v741, %v2693
        %v2772 = vmul.f32 %v746, %v2695
        %v2773 = vmul.f32 %v749, %v2697
        %v2774 = vmul.f32 %v754, %v2699
        %v2775 = vmul.f32 %v757, %v2701
        %v2776 = vmul.f32 %v762, %v2703
        %v2777 = vmul.f32 %v765, %v2705
        %v2778 = vmul.f32 %v770, %v2707
        %v2779 = vmul.f32 %v773, %v2709
        %v2780 = vmul.f32 %v778, %v2711
        %v2781 = vmul.f32 %v781, %v2713
        %v2782 = vmul.f32 %v786, %v2715
        %v2783 = vmul.f32 %v789, %v2717
        %v2784 = vmul.f32 %v794, %v2719
        %v2785 = vmul.f32 %v797, %v2721
        %2786 = vrot.lane.b32.xlu0 %v800, 48
        %v2787 = vpop.permute.xlu0 %2786
        %2788 = vrot.lane.b32.xlu0 %v801, 48
        %v2789 = vpop.permute.xlu0 %2788
        %2790 = vrot.lane.b32.xlu0 %v802, 48
        %v2791 = vpop.permute.xlu0 %2790
        %2792 = vrot.lane.b32.xlu0 %v803, 48
        %v2793 = vpop.permute.xlu0 %2792
        %2794 = vrot.lane.b32.xlu0 %v804, 48
        %v2795 = vpop.permute.xlu0 %2794
        %2796 = vrot.lane.b32.xlu0 %v805, 48
        %v2797 = vpop.permute.xlu0 %2796
        %2798 = vrot.lane.b32.xlu0 %v806, 48
        %v2799 = vpop.permute.xlu0 %2798
        %2800 = vrot.lane.b32.xlu0 %v807, 48
        %v2801 = vpop.permute.xlu0 %2800
        %2802 = vrot.lane.b32.xlu0 %v808, 48
        %v2803 = vpop.permute.xlu0 %2802
        %2804 = vrot.lane.b32.xlu0 %v809, 48
        %v2805 = vpop.permute.xlu0 %2804
        %2806 = vrot.lane.b32.xlu0 %v810, 48
        %v2807 = vpop.permute.xlu0 %2806
        %2808 = vrot.lane.b32.xlu0 %v811, 48
        %v2809 = vpop.permute.xlu0 %2808
        %2810 = vrot.lane.b32.xlu0 %v812, 48
        %v2811 = vpop.permute.xlu0 %2810
        %2812 = vrot.lane.b32.xlu0 %v813, 48
        %v2813 = vpop.permute.xlu0 %2812
        %2814 = vrot.lane.b32.xlu0 %v814, 48
        %v2815 = vpop.permute.xlu0 %2814
        %2816 = vrot.lane.b32.xlu0 %v815, 48
        %v2817 = vpop.permute.xlu0 %2816
        %2818 = vrot.lane.b32.xlu0 %v816, 48
        %v2819 = vpop.permute.xlu0 %2818
        %2820 = vrot.lane.b32.xlu0 %v817, 48
        %v2821 = vpop.permute.xlu0 %2820
        %2822 = vrot.lane.b32.xlu0 %v818, 48
        %v2823 = vpop.permute.xlu0 %2822
        %2824 = vrot.lane.b32.xlu0 %v819, 48
        %v2825 = vpop.permute.xlu0 %2824
        %2826 = vrot.lane.b32.xlu0 %v820, 48
        %v2827 = vpop.permute.xlu0 %2826
        %2828 = vrot.lane.b32.xlu0 %v821, 48
        %v2829 = vpop.permute.xlu0 %2828
        %2830 = vrot.lane.b32.xlu0 %v822, 48
        %v2831 = vpop.permute.xlu0 %2830
        %2832 = vrot.lane.b32.xlu0 %v823, 48
        %v2833 = vpop.permute.xlu0 %2832
        %2834 = vrot.lane.b32.xlu0 %v824, 48
        %v2835 = vpop.permute.xlu0 %2834
        %2836 = vrot.lane.b32.xlu0 %v825, 48
        %v2837 = vpop.permute.xlu0 %2836
        %2838 = vrot.lane.b32.xlu0 %v826, 48
        %v2839 = vpop.permute.xlu0 %2838
        %2840 = vrot.lane.b32.xlu0 %v827, 48
        %v2841 = vpop.permute.xlu0 %2840
        %2842 = vrot.lane.b32.xlu0 %v828, 48
        %v2843 = vpop.permute.xlu0 %2842
        %2844 = vrot.lane.b32.xlu0 %v829, 48
        %v2845 = vpop.permute.xlu0 %2844
        %2846 = vrot.lane.b32.xlu0 %v830, 48
        %v2847 = vpop.permute.xlu0 %2846
        %2848 = vrot.lane.b32.xlu0 %v831, 48
        %v2849 = vpop.permute.xlu0 %2848
        %v2882 = vmul.f32 %v674, %v2787
        %v2883 = vmul.f32 %v677, %v2789
        %v2884 = vmul.f32 %v682, %v2791
        %v2885 = vmul.f32 %v685, %v2793
        %v2886 = vmul.f32 %v690, %v2795
        %v2887 = vmul.f32 %v693, %v2797
        %v2888 = vmul.f32 %v698, %v2799
        %v2889 = vmul.f32 %v701, %v2801
        %v2890 = vmul.f32 %v706, %v2803
        %v2891 = vmul.f32 %v709, %v2805
        %v2892 = vmul.f32 %v714, %v2807
        %v2893 = vmul.f32 %v717, %v2809
        %v2894 = vmul.f32 %v722, %v2811
        %v2895 = vmul.f32 %v725, %v2813
        %v2896 = vmul.f32 %v730, %v2815
        %v2897 = vmul.f32 %v733, %v2817
        %v2898 = vmul.f32 %v738, %v2819
        %v2899 = vmul.f32 %v741, %v2821
        %v2900 = vmul.f32 %v746, %v2823
        %v2901 = vmul.f32 %v749, %v2825
        %v2902 = vmul.f32 %v754, %v2827
        %v2903 = vmul.f32 %v757, %v2829
        %v2904 = vmul.f32 %v762, %v2831
        %v2905 = vmul.f32 %v765, %v2833
        %v2906 = vmul.f32 %v770, %v2835
        %v2907 = vmul.f32 %v773, %v2837
        %v2908 = vmul.f32 %v778, %v2839
        %v2909 = vmul.f32 %v781, %v2841
        %v2910 = vmul.f32 %v786, %v2843
        %v2911 = vmul.f32 %v789, %v2845
        %v2912 = vmul.f32 %v794, %v2847
        %v2913 = vmul.f32 %v797, %v2849
        %2946 = vrot.lane.b32.xlu0 %v2882, 112
        %v2947 = vpop.permute.xlu0 %2946
        %2948 = vrot.lane.b32.xlu0 %v2883, 112
        %v2949 = vpop.permute.xlu0 %2948
        %2950 = vrot.lane.b32.xlu0 %v2884, 112
        %v2951 = vpop.permute.xlu0 %2950
        %2952 = vrot.lane.b32.xlu0 %v2885, 112
        %v2953 = vpop.permute.xlu0 %2952
        %2954 = vrot.lane.b32.xlu0 %v2886, 112
        %v2955 = vpop.permute.xlu0 %2954
        %2956 = vrot.lane.b32.xlu0 %v2887, 112
        %v2957 = vpop.permute.xlu0 %2956
        %2958 = vrot.lane.b32.xlu0 %v2888, 112
        %v2959 = vpop.permute.xlu0 %2958
        %2960 = vrot.lane.b32.xlu0 %v2889, 112
        %v2961 = vpop.permute.xlu0 %2960
        %2962 = vrot.lane.b32.xlu0 %v2890, 112
        %v2963 = vpop.permute.xlu0 %2962
        %2964 = vrot.lane.b32.xlu0 %v2891, 112
        %v2965 = vpop.permute.xlu0 %2964
        %2966 = vrot.lane.b32.xlu0 %v2892, 112
        %v2967 = vpop.permute.xlu0 %2966
        %2968 = vrot.lane.b32.xlu0 %v2893, 112
        %v2969 = vpop.permute.xlu0 %2968
        %2970 = vrot.lane.b32.xlu0 %v2894, 112
        %v2971 = vpop.permute.xlu0 %2970
        %2972 = vrot.lane.b32.xlu0 %v2895, 112
        %v2973 = vpop.permute.xlu0 %2972
        %2974 = vrot.lane.b32.xlu0 %v2896, 112
        %v2975 = vpop.permute.xlu0 %2974
        %2976 = vrot.lane.b32.xlu0 %v2897, 112
        %v2977 = vpop.permute.xlu0 %2976
        %2978 = vrot.lane.b32.xlu0 %v2898, 112
        %v2979 = vpop.permute.xlu0 %2978
        %2980 = vrot.lane.b32.xlu0 %v2899, 112
        %v2981 = vpop.permute.xlu0 %2980
        %2982 = vrot.lane.b32.xlu0 %v2900, 112
        %v2983 = vpop.permute.xlu0 %2982
        %2984 = vrot.lane.b32.xlu0 %v2901, 112
        %v2985 = vpop.permute.xlu0 %2984
        %2986 = vrot.lane.b32.xlu0 %v2902, 112
        %v2987 = vpop.permute.xlu0 %2986
        %2988 = vrot.lane.b32.xlu0 %v2903, 112
        %v2989 = vpop.permute.xlu0 %2988
        %2990 = vrot.lane.b32.xlu0 %v2904, 112
        %v2991 = vpop.permute.xlu0 %2990
        %2992 = vrot.lane.b32.xlu0 %v2905, 112
        %v2993 = vpop.permute.xlu0 %2992
        %2994 = vrot.lane.b32.xlu0 %v2906, 112
        %v2995 = vpop.permute.xlu0 %2994
        %2996 = vrot.lane.b32.xlu0 %v2907, 112
        %v2997 = vpop.permute.xlu0 %2996
        %2998 = vrot.lane.b32.xlu0 %v2908, 112
        %v2999 = vpop.permute.xlu0 %2998
        %3000 = vrot.lane.b32.xlu0 %v2909, 112
        %v3001 = vpop.permute.xlu0 %3000
        %3002 = vrot.lane.b32.xlu0 %v2910, 112
        %v3003 = vpop.permute.xlu0 %3002
        %3004 = vrot.lane.b32.xlu0 %v2911, 112
        %v3005 = vpop.permute.xlu0 %3004
        %3006 = vrot.lane.b32.xlu0 %v2912, 112
        %v3007 = vpop.permute.xlu0 %3006
        %3008 = vrot.lane.b32.xlu0 %v2913, 112
        %v3009 = vpop.permute.xlu0 %3008
        %v3042 = vadd.f32 %v2754, %v2947
        %v3043 = vadd.f32 %v2755, %v2949
        %v3044 = vadd.f32 %v2756, %v2951
        %v3045 = vadd.f32 %v2757, %v2953
        %v3046 = vadd.f32 %v2758, %v2955
        %v3047 = vadd.f32 %v2759, %v2957
        %v3048 = vadd.f32 %v2760, %v2959
        %v3049 = vadd.f32 %v2761, %v2961
        %v3050 = vadd.f32 %v2762, %v2963
        %v3051 = vadd.f32 %v2763, %v2965
        %v3052 = vadd.f32 %v2764, %v2967
        %v3053 = vadd.f32 %v2765, %v2969
        %v3054 = vadd.f32 %v2766, %v2971
        %v3055 = vadd.f32 %v2767, %v2973
        %v3056 = vadd.f32 %v2768, %v2975
        %v3057 = vadd.f32 %v2769, %v2977
        %v3058 = vadd.f32 %v2770, %v2979
        %v3059 = vadd.f32 %v2771, %v2981
        %v3060 = vadd.f32 %v2772, %v2983
        %v3061 = vadd.f32 %v2773, %v2985
        %v3062 = vadd.f32 %v2774, %v2987
        %v3063 = vadd.f32 %v2775, %v2989
        %v3064 = vadd.f32 %v2776, %v2991
        %v3065 = vadd.f32 %v2777, %v2993
        %v3066 = vadd.f32 %v2778, %v2995
        %v3067 = vadd.f32 %v2779, %v2997
        %v3068 = vadd.f32 %v2780, %v2999
        %v3069 = vadd.f32 %v2781, %v3001
        %v3070 = vadd.f32 %v2782, %v3003
        %v3071 = vadd.f32 %v2783, %v3005
        %v3072 = vadd.f32 %v2784, %v3007
        %v3073 = vadd.f32 %v2785, %v3009
        %v3074 = vpack.c.bf16 %v3043, %v3042
        %v3075 = vpack.c.bf16 %v3045, %v3044
        %v3076 = vpack.c.bf16 %v3047, %v3046
        %v3077 = vpack.c.bf16 %v3049, %v3048
        %v3078 = vpack.c.bf16 %v3051, %v3050
        %v3079 = vpack.c.bf16 %v3053, %v3052
        %v3080 = vpack.c.bf16 %v3055, %v3054
        %v3081 = vpack.c.bf16 %v3057, %v3056
        %v3082 = vpack.c.bf16 %v3059, %v3058
        %v3083 = vpack.c.bf16 %v3061, %v3060
        %v3084 = vpack.c.bf16 %v3063, %v3062
        %v3085 = vpack.c.bf16 %v3065, %v3064
        %v3086 = vpack.c.bf16 %v3067, %v3066
        %v3087 = vpack.c.bf16 %v3069, %v3068
        %v3088 = vpack.c.bf16 %v3071, %v3070
        %v3089 = vpack.c.bf16 %v3073, %v3072
        %v3106 = vunpack.c.l.b16 %v3074
        %v3107 = vunpack.c.h.b16 %v3074
        %v3108 = vunpack.c.l.b16 %v3075
        %v3109 = vunpack.c.h.b16 %v3075
        %v3110 = vunpack.c.l.b16 %v3076
        %v3111 = vunpack.c.h.b16 %v3076
        %v3112 = vunpack.c.l.b16 %v3077
        %v3113 = vunpack.c.h.b16 %v3077
        %v3114 = vunpack.c.l.b16 %v3078
        %v3115 = vunpack.c.h.b16 %v3078
        %v3116 = vunpack.c.l.b16 %v3079
        %v3117 = vunpack.c.h.b16 %v3079
        %v3118 = vunpack.c.l.b16 %v3080
        %v3119 = vunpack.c.h.b16 %v3080
        %v3120 = vunpack.c.l.b16 %v3081
        %v3121 = vunpack.c.h.b16 %v3081
        %v3122 = vunpack.c.l.b16 %v3082
        %v3123 = vunpack.c.h.b16 %v3082
        %v3124 = vunpack.c.l.b16 %v3083
        %v3125 = vunpack.c.h.b16 %v3083
        %v3126 = vunpack.c.l.b16 %v3084
        %v3127 = vunpack.c.h.b16 %v3084
        %v3128 = vunpack.c.l.b16 %v3085
        %v3129 = vunpack.c.h.b16 %v3085
        %v3130 = vunpack.c.l.b16 %v3086
        %v3131 = vunpack.c.h.b16 %v3086
        %v3132 = vunpack.c.l.b16 %v3087
        %v3133 = vunpack.c.h.b16 %v3087
        %v3134 = vunpack.c.l.b16 %v3088
        %v3135 = vunpack.c.h.b16 %v3088
        %v3136 = vunpack.c.l.b16 %v3089
        %v3137 = vunpack.c.h.b16 %v3089
        %v3138 = vpack.c.b16 %v3106, %v3106
        %v3139 = vpack.c.b16 %v3107, %v3107
        %v3140 = vpack.c.b16 %v3108, %v3108
        %v3141 = vpack.c.b16 %v3109, %v3109
        %v3142 = vpack.c.b16 %v3110, %v3110
        %v3143 = vpack.c.b16 %v3111, %v3111
        %v3144 = vpack.c.b16 %v3112, %v3112
        %v3145 = vpack.c.b16 %v3113, %v3113
        %v3146 = vpack.c.b16 %v3114, %v3114
        %v3147 = vpack.c.b16 %v3115, %v3115
        %v3148 = vpack.c.b16 %v3116, %v3116
        %v3149 = vpack.c.b16 %v3117, %v3117
        %v3150 = vpack.c.b16 %v3118, %v3118
        %v3151 = vpack.c.b16 %v3119, %v3119
        %v3152 = vpack.c.b16 %v3120, %v3120
        %v3153 = vpack.c.b16 %v3121, %v3121
        %v3154 = vpack.c.b16 %v3122, %v3122
        %v3155 = vpack.c.b16 %v3123, %v3123
        %v3156 = vpack.c.b16 %v3124, %v3124
        %v3157 = vpack.c.b16 %v3125, %v3125
        %v3158 = vpack.c.b16 %v3126, %v3126
        %v3159 = vpack.c.b16 %v3127, %v3127
        %v3160 = vpack.c.b16 %v3128, %v3128
        %v3161 = vpack.c.b16 %v3129, %v3129
        %v3162 = vpack.c.b16 %v3130, %v3130
        %v3163 = vpack.c.b16 %v3131, %v3131
        %v3164 = vpack.c.b16 %v3132, %v3132
        %v3165 = vpack.c.b16 %v3133, %v3133
        %v3166 = vpack.c.b16 %v3134, %v3134
        %v3167 = vpack.c.b16 %v3135, %v3135
        %v3168 = vpack.c.b16 %v3136, %v3136
        %v3169 = vpack.c.b16 %v3137, %v3137
        %3170 = vrot.lane.b32.xlu0 %v3138, 112
        %v3171 = vpop.permute.xlu0 %3170
        %3172 = vrot.lane.b32.xlu0 %v3139, 112
        %v3173 = vpop.permute.xlu0 %3172
        %3174 = vrot.lane.b32.xlu0 %v3140, 112
        %v3175 = vpop.permute.xlu0 %3174
        %3176 = vrot.lane.b32.xlu0 %v3141, 112
        %v3177 = vpop.permute.xlu0 %3176
        %3178 = vrot.lane.b32.xlu0 %v3142, 112
        %v3179 = vpop.permute.xlu0 %3178
        %3180 = vrot.lane.b32.xlu0 %v3143, 112
        %v3181 = vpop.permute.xlu0 %3180
        %3182 = vrot.lane.b32.xlu0 %v3144, 112
        %v3183 = vpop.permute.xlu0 %3182
        %3184 = vrot.lane.b32.xlu0 %v3145, 112
        %v3185 = vpop.permute.xlu0 %3184
        %3186 = vrot.lane.b32.xlu0 %v3146, 112
        %v3187 = vpop.permute.xlu0 %3186
        %3188 = vrot.lane.b32.xlu0 %v3147, 112
        %v3189 = vpop.permute.xlu0 %3188
        %3190 = vrot.lane.b32.xlu0 %v3148, 112
        %v3191 = vpop.permute.xlu0 %3190
        %3192 = vrot.lane.b32.xlu0 %v3149, 112
        %v3193 = vpop.permute.xlu0 %3192
        %3194 = vrot.lane.b32.xlu0 %v3150, 112
        %v3195 = vpop.permute.xlu0 %3194
        %3196 = vrot.lane.b32.xlu0 %v3151, 112
        %v3197 = vpop.permute.xlu0 %3196
        %3198 = vrot.lane.b32.xlu0 %v3152, 112
        %v3199 = vpop.permute.xlu0 %3198
        %3200 = vrot.lane.b32.xlu0 %v3153, 112
        %v3201 = vpop.permute.xlu0 %3200
        %3202 = vrot.lane.b32.xlu0 %v3154, 112
        %v3203 = vpop.permute.xlu0 %3202
        %3204 = vrot.lane.b32.xlu0 %v3155, 112
        %v3205 = vpop.permute.xlu0 %3204
        %3206 = vrot.lane.b32.xlu0 %v3156, 112
        %v3207 = vpop.permute.xlu0 %3206
        %3208 = vrot.lane.b32.xlu0 %v3157, 112
        %v3209 = vpop.permute.xlu0 %3208
        %3210 = vrot.lane.b32.xlu0 %v3158, 112
        %v3211 = vpop.permute.xlu0 %3210
        %3212 = vrot.lane.b32.xlu0 %v3159, 112
        %v3213 = vpop.permute.xlu0 %3212
        %3214 = vrot.lane.b32.xlu0 %v3160, 112
        %v3215 = vpop.permute.xlu0 %3214
        %3216 = vrot.lane.b32.xlu0 %v3161, 112
        %v3217 = vpop.permute.xlu0 %3216
        %3218 = vrot.lane.b32.xlu0 %v3162, 112
        %v3219 = vpop.permute.xlu0 %3218
        %3220 = vrot.lane.b32.xlu0 %v3163, 112
        %v3221 = vpop.permute.xlu0 %3220
        %3222 = vrot.lane.b32.xlu0 %v3164, 112
        %v3223 = vpop.permute.xlu0 %3222
        %3224 = vrot.lane.b32.xlu0 %v3165, 112
        %v3225 = vpop.permute.xlu0 %3224
        %3226 = vrot.lane.b32.xlu0 %v3166, 112
        %v3227 = vpop.permute.xlu0 %3226
        %3228 = vrot.lane.b32.xlu0 %v3167, 112
        %v3229 = vpop.permute.xlu0 %3228
        %3230 = vrot.lane.b32.xlu0 %v3168, 112
        %v3231 = vpop.permute.xlu0 %3230
        %3232 = vrot.lane.b32.xlu0 %v3169, 112
        %v3233 = vpop.permute.xlu0 %3232
        %3266 = vst.msk [vmem:[%s432] sm:$0xf] %vm1985, %v3171
        %3267 = vst.msk [vmem:[%s432 + $0x4] sm:$0xf] %vm1985, %v3173
        %3268 = vst.msk [vmem:[%s432 + $0x8] sm:$0xf] %vm1985, %v3175
        %3269 = vst.msk [vmem:[%s432 + $0xc] sm:$0xf] %vm1985, %v3177
        %3270 = vst.msk [vmem:[%s432 + $0x10] sm:$0xf] %vm1985, %v3179
        %3271 = vst.msk [vmem:[%s432 + $0x14] sm:$0xf] %vm1985, %v3181
        %3272 = vst.msk [vmem:[%s432 + $0x18] sm:$0xf] %vm1985, %v3183
        %3273 = vst.msk [vmem:[%s432 + $0x1c] sm:$0xf] %vm1985, %v3185
        %3274 = vst.msk [vmem:[%s432 + $0x20] sm:$0xf] %vm1985, %v3187
        %3275 = vst.msk [vmem:[%s432 + $0x24] sm:$0xf] %vm1985, %v3189
        %3276 = vst.msk [vmem:[%s432 + $0x28] sm:$0xf] %vm1985, %v3191
        %3277 = vst.msk [vmem:[%s432 + $0x2c] sm:$0xf] %vm1985, %v3193
        %3278 = vst.msk [vmem:[%s432 + $0x30] sm:$0xf] %vm1985, %v3195
        %3279 = vst.msk [vmem:[%s432 + $0x34] sm:$0xf] %vm1985, %v3197
        %3280 = vst.msk [vmem:[%s432 + $0x38] sm:$0xf] %vm1985, %v3199
        %3281 = vst.msk [vmem:[%s432 + $0x3c] sm:$0xf] %vm1985, %v3201
        %3282 = vst.msk [vmem:[%s432 + $0x40] sm:$0xf] %vm1985, %v3203
        %3283 = vst.msk [vmem:[%s432 + $0x44] sm:$0xf] %vm1985, %v3205
        %3284 = vst.msk [vmem:[%s432 + $0x48] sm:$0xf] %vm1985, %v3207
        %3285 = vst.msk [vmem:[%s432 + $0x4c] sm:$0xf] %vm1985, %v3209
        %3286 = vst.msk [vmem:[%s432 + $0x50] sm:$0xf] %vm1985, %v3211
        %3287 = vst.msk [vmem:[%s432 + $0x54] sm:$0xf] %vm1985, %v3213
        %3288 = vst.msk [vmem:[%s432 + $0x58] sm:$0xf] %vm1985, %v3215
        %3289 = vst.msk [vmem:[%s432 + $0x5c] sm:$0xf] %vm1985, %v3217
        %3290 = vst.msk [vmem:[%s432 + $0x60] sm:$0xf] %vm1985, %v3219
        %3291 = vst.msk [vmem:[%s432 + $0x64] sm:$0xf] %vm1985, %v3221
        %3292 = vst.msk [vmem:[%s432 + $0x68] sm:$0xf] %vm1985, %v3223
        %3293 = vst.msk [vmem:[%s432 + $0x6c] sm:$0xf] %vm1985, %v3225
        %3294 = vst.msk [vmem:[%s432 + $0x70] sm:$0xf] %vm1985, %v3227
        %3295 = vst.msk [vmem:[%s432 + $0x74] sm:$0xf] %vm1985, %v3229
        %3296 = vst.msk [vmem:[%s432 + $0x78] sm:$0xf] %vm1985, %v3231
        %3297 = vst.msk [vmem:[%s432 + $0x7c] sm:$0xf] %vm1985, %v3233
        %v3298 = vpack.c.bf16 %v677, %v674
        %v3299 = vpack.c.bf16 %v685, %v682
        %v3300 = vpack.c.bf16 %v693, %v690
        %v3301 = vpack.c.bf16 %v701, %v698
        %v3302 = vpack.c.bf16 %v709, %v706
        %v3303 = vpack.c.bf16 %v717, %v714
        %v3304 = vpack.c.bf16 %v725, %v722
        %v3305 = vpack.c.bf16 %v733, %v730
        %v3306 = vpack.c.bf16 %v741, %v738
        %v3307 = vpack.c.bf16 %v749, %v746
        %v3308 = vpack.c.bf16 %v757, %v754
        %v3309 = vpack.c.bf16 %v765, %v762
        %v3310 = vpack.c.bf16 %v773, %v770
        %v3311 = vpack.c.bf16 %v781, %v778
        %v3312 = vpack.c.bf16 %v789, %v786
        %v3313 = vpack.c.bf16 %v797, %v794
        %v3330 = vunpack.c.l.b16 %v3298
        %v3331 = vunpack.c.h.b16 %v3298
        %v3332 = vunpack.c.l.b16 %v3299
        %v3333 = vunpack.c.h.b16 %v3299
        %v3334 = vunpack.c.l.b16 %v3300
        %v3335 = vunpack.c.h.b16 %v3300
        %v3336 = vunpack.c.l.b16 %v3301
        %v3337 = vunpack.c.h.b16 %v3301
        %v3338 = vunpack.c.l.b16 %v3302
        %v3339 = vunpack.c.h.b16 %v3302
        %v3340 = vunpack.c.l.b16 %v3303
        %v3341 = vunpack.c.h.b16 %v3303
        %v3342 = vunpack.c.l.b16 %v3304
        %v3343 = vunpack.c.h.b16 %v3304
        %v3344 = vunpack.c.l.b16 %v3305
        %v3345 = vunpack.c.h.b16 %v3305
        %v3346 = vunpack.c.l.b16 %v3306
        %v3347 = vunpack.c.h.b16 %v3306
        %v3348 = vunpack.c.l.b16 %v3307
        %v3349 = vunpack.c.h.b16 %v3307
        %v3350 = vunpack.c.l.b16 %v3308
        %v3351 = vunpack.c.h.b16 %v3308
        %v3352 = vunpack.c.l.b16 %v3309
        %v3353 = vunpack.c.h.b16 %v3309
        %v3354 = vunpack.c.l.b16 %v3310
        %v3355 = vunpack.c.h.b16 %v3310
        %v3356 = vunpack.c.l.b16 %v3311
        %v3357 = vunpack.c.h.b16 %v3311
        %v3358 = vunpack.c.l.b16 %v3312
        %v3359 = vunpack.c.h.b16 %v3312
        %v3360 = vunpack.c.l.b16 %v3313
        %v3361 = vunpack.c.h.b16 %v3313
        %v3362 = vpack.c.b16 %v3330, %v3330
        %v3363 = vpack.c.b16 %v3331, %v3331
        %v3364 = vpack.c.b16 %v3332, %v3332
        %v3365 = vpack.c.b16 %v3333, %v3333
        %v3366 = vpack.c.b16 %v3334, %v3334
        %v3367 = vpack.c.b16 %v3335, %v3335
        %v3368 = vpack.c.b16 %v3336, %v3336
        %v3369 = vpack.c.b16 %v3337, %v3337
        %v3370 = vpack.c.b16 %v3338, %v3338
        %v3371 = vpack.c.b16 %v3339, %v3339
        %v3372 = vpack.c.b16 %v3340, %v3340
        %v3373 = vpack.c.b16 %v3341, %v3341
        %v3374 = vpack.c.b16 %v3342, %v3342
        %v3375 = vpack.c.b16 %v3343, %v3343
        %v3376 = vpack.c.b16 %v3344, %v3344
        %v3377 = vpack.c.b16 %v3345, %v3345
        %v3378 = vpack.c.b16 %v3346, %v3346
        %v3379 = vpack.c.b16 %v3347, %v3347
        %v3380 = vpack.c.b16 %v3348, %v3348
        %v3381 = vpack.c.b16 %v3349, %v3349
        %v3382 = vpack.c.b16 %v3350, %v3350
        %v3383 = vpack.c.b16 %v3351, %v3351
        %v3384 = vpack.c.b16 %v3352, %v3352
        %v3385 = vpack.c.b16 %v3353, %v3353
        %v3386 = vpack.c.b16 %v3354, %v3354
        %v3387 = vpack.c.b16 %v3355, %v3355
        %v3388 = vpack.c.b16 %v3356, %v3356
        %v3389 = vpack.c.b16 %v3357, %v3357
        %v3390 = vpack.c.b16 %v3358, %v3358
        %v3391 = vpack.c.b16 %v3359, %v3359
        %v3392 = vpack.c.b16 %v3360, %v3360
        %v3393 = vpack.c.b16 %v3361, %v3361
        %3394 = vrot.lane.b32.xlu0 %v3362, 64
        %v3395 = vpop.permute.xlu0 %3394
        %3396 = vrot.lane.b32.xlu0 %v3363, 64
        %v3397 = vpop.permute.xlu0 %3396
        %3398 = vrot.lane.b32.xlu0 %v3364, 64
        %v3399 = vpop.permute.xlu0 %3398
        %3400 = vrot.lane.b32.xlu0 %v3365, 64
        %v3401 = vpop.permute.xlu0 %3400
        %3402 = vrot.lane.b32.xlu0 %v3366, 64
        %v3403 = vpop.permute.xlu0 %3402
        %3404 = vrot.lane.b32.xlu0 %v3367, 64
        %v3405 = vpop.permute.xlu0 %3404
        %3406 = vrot.lane.b32.xlu0 %v3368, 64
        %v3407 = vpop.permute.xlu0 %3406
        %3408 = vrot.lane.b32.xlu0 %v3369, 64
        %v3409 = vpop.permute.xlu0 %3408
        %3410 = vrot.lane.b32.xlu0 %v3370, 64
        %v3411 = vpop.permute.xlu0 %3410
        %3412 = vrot.lane.b32.xlu0 %v3371, 64
        %v3413 = vpop.permute.xlu0 %3412
        %3414 = vrot.lane.b32.xlu0 %v3372, 64
        %v3415 = vpop.permute.xlu0 %3414
        %3416 = vrot.lane.b32.xlu0 %v3373, 64
        %v3417 = vpop.permute.xlu0 %3416
        %3418 = vrot.lane.b32.xlu0 %v3374, 64
        %v3419 = vpop.permute.xlu0 %3418
        %3420 = vrot.lane.b32.xlu0 %v3375, 64
        %v3421 = vpop.permute.xlu0 %3420
        %3422 = vrot.lane.b32.xlu0 %v3376, 64
        %v3423 = vpop.permute.xlu0 %3422
        %3424 = vrot.lane.b32.xlu0 %v3377, 64
        %v3425 = vpop.permute.xlu0 %3424
        %3426 = vrot.lane.b32.xlu0 %v3378, 64
        %v3427 = vpop.permute.xlu0 %3426
        %3428 = vrot.lane.b32.xlu0 %v3379, 64
        %v3429 = vpop.permute.xlu0 %3428
        %3430 = vrot.lane.b32.xlu0 %v3380, 64
        %v3431 = vpop.permute.xlu0 %3430
        %3432 = vrot.lane.b32.xlu0 %v3381, 64
        %v3433 = vpop.permute.xlu0 %3432
        %3434 = vrot.lane.b32.xlu0 %v3382, 64
        %v3435 = vpop.permute.xlu0 %3434
        %3436 = vrot.lane.b32.xlu0 %v3383, 64
        %v3437 = vpop.permute.xlu0 %3436
        %3438 = vrot.lane.b32.xlu0 %v3384, 64
        %v3439 = vpop.permute.xlu0 %3438
        %3440 = vrot.lane.b32.xlu0 %v3385, 64
        %v3441 = vpop.permute.xlu0 %3440
        %3442 = vrot.lane.b32.xlu0 %v3386, 64
        %v3443 = vpop.permute.xlu0 %3442
        %3444 = vrot.lane.b32.xlu0 %v3387, 64
        %v3445 = vpop.permute.xlu0 %3444
        %3446 = vrot.lane.b32.xlu0 %v3388, 64
        %v3447 = vpop.permute.xlu0 %3446
        %3448 = vrot.lane.b32.xlu0 %v3389, 64
        %v3449 = vpop.permute.xlu0 %3448
        %3450 = vrot.lane.b32.xlu0 %v3390, 64
        %v3451 = vpop.permute.xlu0 %3450
        %3452 = vrot.lane.b32.xlu0 %v3391, 64
        %v3453 = vpop.permute.xlu0 %3452
        %3454 = vrot.lane.b32.xlu0 %v3392, 64
        %v3455 = vpop.permute.xlu0 %3454
        %3456 = vrot.lane.b32.xlu0 %v3393, 64
        %v3457 = vpop.permute.xlu0 %3456
        %vm3490 = vcmask 257024
        %3491 = vst.msk [vmem:[%s439] sm:$0xf] %vm3490, %v3395
        %3492 = vst.msk [vmem:[%s439 + $0x4] sm:$0xf] %vm3490, %v3397
        %3493 = vst.msk [vmem:[%s439 + $0x8] sm:$0xf] %vm3490, %v3399
        %3494 = vst.msk [vmem:[%s439 + $0xc] sm:$0xf] %vm3490, %v3401
        %3495 = vst.msk [vmem:[%s439 + $0x10] sm:$0xf] %vm3490, %v3403
        %3496 = vst.msk [vmem:[%s439 + $0x14] sm:$0xf] %vm3490, %v3405
        %3497 = vst.msk [vmem:[%s439 + $0x18] sm:$0xf] %vm3490, %v3407
        %3498 = vst.msk [vmem:[%s439 + $0x1c] sm:$0xf] %vm3490, %v3409
        %3499 = vst.msk [vmem:[%s439 + $0x20] sm:$0xf] %vm3490, %v3411
        %3500 = vst.msk [vmem:[%s439 + $0x24] sm:$0xf] %vm3490, %v3413
        %3501 = vst.msk [vmem:[%s439 + $0x28] sm:$0xf] %vm3490, %v3415
        %3502 = vst.msk [vmem:[%s439 + $0x2c] sm:$0xf] %vm3490, %v3417
        %3503 = vst.msk [vmem:[%s439 + $0x30] sm:$0xf] %vm3490, %v3419
        %3504 = vst.msk [vmem:[%s439 + $0x34] sm:$0xf] %vm3490, %v3421
        %3505 = vst.msk [vmem:[%s439 + $0x38] sm:$0xf] %vm3490, %v3423
        %3506 = vst.msk [vmem:[%s439 + $0x3c] sm:$0xf] %vm3490, %v3425
        %3507 = vst.msk [vmem:[%s439 + $0x40] sm:$0xf] %vm3490, %v3427
        %3508 = vst.msk [vmem:[%s439 + $0x44] sm:$0xf] %vm3490, %v3429
        %3509 = vst.msk [vmem:[%s439 + $0x48] sm:$0xf] %vm3490, %v3431
        %3510 = vst.msk [vmem:[%s439 + $0x4c] sm:$0xf] %vm3490, %v3433
        %3511 = vst.msk [vmem:[%s439 + $0x50] sm:$0xf] %vm3490, %v3435
        %3512 = vst.msk [vmem:[%s439 + $0x54] sm:$0xf] %vm3490, %v3437
        %3513 = vst.msk [vmem:[%s439 + $0x58] sm:$0xf] %vm3490, %v3439
        %3514 = vst.msk [vmem:[%s439 + $0x5c] sm:$0xf] %vm3490, %v3441
        %3515 = vst.msk [vmem:[%s439 + $0x60] sm:$0xf] %vm3490, %v3443
        %3516 = vst.msk [vmem:[%s439 + $0x64] sm:$0xf] %vm3490, %v3445
        %3517 = vst.msk [vmem:[%s439 + $0x68] sm:$0xf] %vm3490, %v3447
        %3518 = vst.msk [vmem:[%s439 + $0x6c] sm:$0xf] %vm3490, %v3449
        %3519 = vst.msk [vmem:[%s439 + $0x70] sm:$0xf] %vm3490, %v3451
        %3520 = vst.msk [vmem:[%s439 + $0x74] sm:$0xf] %vm3490, %v3453
        %3521 = vst.msk [vmem:[%s439 + $0x78] sm:$0xf] %vm3490, %v3455
        %3522 = vst.msk [vmem:[%s439 + $0x7c] sm:$0xf] %vm3490, %v3457
        %s3523 = sand.u32 %s170, 1
        %s3524 = scalar_lea.sflag [#allocation4], %s3523
        %s3525 = sand.u32 %s170, 1
        %s3526 = smul.addr %s3525, 128
        %s3527 = scalar_lea.vmem [#allocation10], %s3526
        %s3528 = sand.u32 %s33, 1
        %s3529 = scalar_lea.sflag [#allocation12], %s3528
        %s3530 = sand.u32 %s200, 1
        %s3531 = smul.addr %s3530, 128
        %s3532 = scalar_lea.vmem [#allocation11], %s3531
        %s3533 = sand.u32 %s33, 1
        %s3534 = scalar_lea.sflag [#allocation12], %s3533
        %s3535 = sand.u32 %s230, 1
        %s3536 = smul.addr %s3535, 128
        %s3537 = scalar_lea.vmem [#allocation13], %s3536
        // Predicated region
        $region53: #{tpu_custom_call.1} parent=35 // pred_check
          %p3538 = pneg %p180
        $region54: #{tpu_custom_call.1} parent=35 // pred_check_branch
          %3540 = sbr.rel (%p3538) target = $region56
        $region55: #{tpu_custom_call.1} parent=35 // pred_region
          %s3541 = smul.u32 32, %s39
          %s3543 = ssub.s32 2048, 2048
          %3544 = vsyncadd %s3524, %s3543
          %s3545 = smul.addr %s40, 64
          %s3546 = sadd.s32 %s3541, %s3545
          %s3547 = smul.addr %s38, 256
          %s3548 = sadd.s32 %s3546, %s3547
          %s3549 = smul.addr %s3548, 64
          %s3550 = scalar_lea.hbm %s4, %s3549
          %s3551 = sshll.u32 %s3527, 4
          %s3552 = int_to_ptr.vmem [resolvable:$true] %s3551
          %3557 = dma.vmem_to_hbm [thread:$0]  %s3552, 2048, %s3550, %s3524, 64, 64, 4
        $region56: #{tpu_custom_call.1} parent=35 // pred_fallthru
          _
        // Predicated region
        $region57: #{tpu_custom_call.1} parent=35 // pred_check
          %p3558 = pneg %p210
        $region58: #{tpu_custom_call.1} parent=35 // pred_check_branch
          %3560 = sbr.rel (%p3558) target = $region60
        $region59: #{tpu_custom_call.1} parent=35 // pred_region
          %s3561 = smul.u32 32, %s39
          %s3563 = ssub.s32 2048, 2048
          %3564 = vsyncadd %s3529, %s3563
          %s3565 = smul.addr %s40, 64
          %s3566 = sadd.s32 %s3561, %s3565
          %s3567 = smul.addr %s38, 256
          %s3568 = sadd.s32 %s3566, %s3567
          %s3569 = smul.addr %s3568, 64
          %s3570 = scalar_lea.hbm %s5, %s3569
          %s3571 = sshll.u32 %s3532, 4
          %s3572 = int_to_ptr.vmem [resolvable:$true] %s3571
          %3577 = dma.vmem_to_hbm [thread:$0]  %s3572, 2048, %s3570, %s3529, 64, 64, 4
        $region60: #{tpu_custom_call.1} parent=35 // pred_fallthru
          _
        // Predicated region
        $region61: #{tpu_custom_call.1} parent=35 // pred_check
          %p3578 = pneg %p240
        $region62: #{tpu_custom_call.1} parent=35 // pred_check_branch
          %3580 = sbr.rel (%p3578) target = $region64
        $region63: #{tpu_custom_call.1} parent=35 // pred_region
          %s3581 = smul.u32 32, %s39
          %s3583 = ssub.s32 2048, 2048
          %3584 = vsyncadd %s3534, %s3583
          %s3585 = smul.addr %s40, 64
          %s3586 = sadd.s32 %s3581, %s3585
          %s3587 = smul.addr %s38, 256
          %s3588 = sadd.s32 %s3586, %s3587
          %s3589 = smul.addr %s3588, 64
          %s3590 = scalar_lea.hbm %s6, %s3589
          %s3591 = sshll.u32 %s3537, 4
          %s3592 = int_to_ptr.vmem [resolvable:$true] %s3591
          %3597 = dma.vmem_to_hbm [thread:$0]  %s3592, 2048, %s3590, %s3534, 64, 64, 4
        $region64: #{tpu_custom_call.1} parent=35 // pred_fallthru
          _
      $region36: #{tpu_custom_call.1} parent=5 // pred_fallthru
        _
      %p3598 = scmp.le.s32.totalorder 2, %s28
      // Predicated region
      $region65: #{tpu_custom_call.1} parent=5 // pred_check
        %p3599 = pneg %p3598
      $region66: #{tpu_custom_call.1} parent=5 // pred_check_branch
        %3601 = sbr.rel (%p3599) target = $region68
      $region67: #{tpu_custom_call.1} parent=5 // pred_region
        %s3602 = ssub.s32 %s28, 2
        // Predicated region
        $region69: #{tpu_custom_call.1} parent=67 // pred_check
          %p3603 = pneg %p186
        $region70: #{tpu_custom_call.1} parent=67 // pred_check_branch
          %3605 = sbr.rel (%p3603) target = $region72
        $region71: #{tpu_custom_call.1} parent=67 // pred_region
          %s3606 = sand.u32 %s171, 1
          %s3607 = scalar_lea.sflag [#allocation4], %s3606
          %s3608 = sand.u32 %s171, 1
          %s3609 = smul.addr %s3608, 128
          %s3610 = scalar_lea.vmem [#allocation10], %s3609
          %3611 = dma.done %s3607, 2048
        $region72: #{tpu_custom_call.1} parent=67 // pred_fallthru
          _
        // Predicated region
        $region73: #{tpu_custom_call.1} parent=67 // pred_check
          %p3612 = pneg %p216
        $region74: #{tpu_custom_call.1} parent=67 // pred_check_branch
          %3614 = sbr.rel (%p3612) target = $region76
        $region75: #{tpu_custom_call.1} parent=67 // pred_region
          %s3615 = sand.u32 %s34, 1
          %s3616 = scalar_lea.sflag [#allocation12], %s3615
          %s3617 = sand.u32 %s201, 1
          %s3618 = smul.addr %s3617, 128
          %s3619 = scalar_lea.vmem [#allocation11], %s3618
          %3620 = dma.done %s3616, 2048
        $region76: #{tpu_custom_call.1} parent=67 // pred_fallthru
          _
        // Predicated region
        $region77: #{tpu_custom_call.1} parent=67 // pred_check
          %p3621 = pneg %p246
        $region78: #{tpu_custom_call.1} parent=67 // pred_check_branch
          %3623 = sbr.rel (%p3621) target = $region80
        $region79: #{tpu_custom_call.1} parent=67 // pred_region
          %s3624 = sand.u32 %s34, 1
          %s3625 = scalar_lea.sflag [#allocation12], %s3624
          %s3626 = sand.u32 %s231, 1
          %s3627 = smul.addr %s3626, 128
          %s3628 = scalar_lea.vmem [#allocation13], %s3627
          %3629 = dma.done %s3625, 2048
        $region80: #{tpu_custom_call.1} parent=67 // pred_fallthru
          _
      $region68: #{tpu_custom_call.1} parent=5 // pred_fallthru
        _
    $region6: #{tpu_custom_call.1} parent=1 // loop_footer
      %s32 = sadd.s32 1, %s28
    $region7: #{tpu_custom_call.1} parent=1 // loop_footer_branch
      %27 = sbr.rel target = $region3
    $region8: #{tpu_custom_call.1} parent=1 // loop_exit
      _
    %3630 = vsyncpa [#allocation3], 1
    %s3631 = scalar_lea.sflag [#allocation3], 1
    %3632 = vsyncpa %s3631, 1
    %3633 = vsyncpa [#allocation6], 1
    %s3634 = scalar_lea.sflag [#allocation6], 1
    %3635 = vsyncpa %s3634, 1
    %3636 = vsyncpa [#allocation9], 1
    %s3637 = scalar_lea.sflag [#allocation9], 1
    %3638 = vsyncpa %s3637, 1
    %3639 = vsyncpa [#allocation4], 1
    %s3640 = scalar_lea.sflag [#allocation4], 1
    %3641 = vsyncpa %s3640, 1
    %3642 = vsyncpa [#allocation12], 1
    %s3643 = scalar_lea.sflag [#allocation12], 1
    %3644 = vsyncpa %s3643, 1

</llo_original>
